<compile_context>
chip_gen: v7x
topology: tpu7x:2x2x1
jax: 0.10.0
libtpu: 0.0.40
codegen_flags: <defaults>
</compile_context>

<pallas_src>
import functools

import jax
import jax.numpy as jnp
from jax.experimental import pallas as pl
from jax.experimental.pallas import tpu as pltpu

NEG_SLOPE = 0.01  # F.leaky_relu default
LANE = 128


def _round_up(n, m):
    return ((n + m - 1) // m) * m


def _lrelu(x):
    # one vmul + one vmax instead of cmp + select + mul
    return jnp.maximum(x, NEG_SLOPE * x)


def qnetwork_kernel(x_ref, w1_ref, b1_ref, w2x_ref, w2a_ref, b2_ref,
                    w3_ref, b3_ref, w4_ref, b4_ref, out_ref,
                    *, state_size, action_size):
    S, A = state_size, action_size
    x = x_ref[...]                                    # (S+A, TM) f32, batch on lanes

    # ---- linear1 + leaky_relu : (256,S)bf16 @ (S,TM)bf16 -> f32 acc ----
    # TODO(synk): linear1 could be kept fully f32 (K=S is tiny) if tighter
    # numerics are ever needed for TD targets.
    s_bf = x[:S, :].astype(jnp.bfloat16)
    z1 = jnp.dot(w1_ref[...], s_bf,
                 preferred_element_type=jnp.float32) + b1_ref[...]
    h1 = _lrelu(z1)                                   # (256, TM) f32

    # ---- linear2 on cat(h1, action) + leaky_relu ----
    # cat(h1, a) @ W2^T == W2x @ h1  +  W2a @ a.
    # The W2x part (K=256) goes to the MXU; the K=A part is A rank-1 FMAs on
    # the VPU (outer products), so it never costs an MXU tile pass.  The
    # action path stays in f32.
    z2 = jnp.dot(w2x_ref[...], h1.astype(jnp.bfloat16),
                 preferred_element_type=jnp.float32)
    w2a = w2a_ref[...]                                # (256, A) f32
    for k in range(A):                                # A is tiny & static -> unrolled
        z2 = z2 + w2a[:, k:k + 1] * x[S + k:S + k + 1, :]
    h2 = _lrelu(z2 + b2_ref[...])                     # (256, TM) f32

    # ---- linear3 + leaky_relu : (128,256)bf16 @ (256,TM)bf16 -> f32 acc ----
    z3 = jnp.dot(w3_ref[...], h2.astype(jnp.bfloat16),
                 preferred_element_type=jnp.float32) + b3_ref[...]
    h3 = _lrelu(z3)                                   # (128, TM) f32

    # ---- linear4 (out_features=1): VPU multiply + sublane reduce ----
    # Output row is lane-dense (1, TM): full-width vst, contiguous output DMA.
    out_ref[...] = jnp.sum(h3 * w4_ref[...], axis=0, keepdims=True) + b4_ref[...]


def qnetwork_forward(state, action, kparams, *, tile_m=1024):
    """Batched critic forward. state: (B,S) f32, action: (B,A) f32 -> (B,1) f32.

    `kparams` must come from prepare_params() (weights pre-cast/packed once,
    NOT per call).
    """
    B, S = state.shape
    A = action.shape[1]
    H1 = kparams["w1"].shape[0]          # 256
    H2 = kparams["w2x"].shape[0]         # 256
    H3 = kparams["w3"].shape[0]          # 128

    # --- batch tile selection ---------------------------------------------
    # Big tiles (default 1024 rows) amortize the ~0.35us per-grid-step
    # overhead; TM must be a multiple of 128 because the batch is the lane
    # axis of every block.  Cap TM so there are >=2 tiles whenever the batch
    # spans more than one lane tile, so the "parallel" grid axis can be
    # sharded across both v7x TensorCores (no-op on 1-TC v5e/v6e).
    tile_m = max(LANE, (int(tile_m) // LANE) * LANE)
    min_b = _round_up(B, LANE)
    if min_b >= 2 * LANE:
        TM = min(tile_m, _round_up(pl.cdiv(B, 2), LANE))
    else:
        TM = min(tile_m, min_b)
    pad_B = _round_up(B, TM)
    num_tiles = pad_B // TM

    # --- pack the inputs: one lane-major (features x batch) f32 slab -------
    # (single per-step input DMA; transpose/concat here is layout plumbing)
    x = jnp.concatenate([state.T, action.T], axis=0).astype(jnp.float32)
    if pad_B != B:
        x = jnp.pad(x, ((0, 0), (0, pad_B - B)))      # (S+A, pad_B)

    def resident(shape):
        # constant index_map -> stays VMEM-resident across all grid steps
        return pl.BlockSpec(shape, lambda i: (0, 0))

    in_specs = [
        pl.BlockSpec((S + A, TM), lambda i: (0, i)),   # packed input tile
        resident((H1, S)),  resident((H1, 1)),         # w1 (bf16), b1
        resident((H2, H1)), resident((H2, A)),         # w2x (bf16), w2a (f32)
        resident((H2, 1)),                             # b2
        resident((H3, H2)), resident((H3, 1)),         # w3 (bf16), b3
        resident((H3, 1)),  resident((1, 1)),          # w4 column (f32), b4
    ]
    out_specs = pl.BlockSpec((1, TM), lambda i: (0, i))   # lane-dense output row

    flops = 2 * pad_B * (S * H1 + H1 * H2 + A * H2 + H2 * H3 + H3)
    bytes_accessed = (pad_B * (S + A) * 4 + pad_B * 4
                      + (H1 * S + H1 * H2 + H2 * H3) * 2
                      + (H2 * A + H1 + H2 + H3 + H3 + 1) * 4)

    kernel = functools.partial(qnetwork_kernel, state_size=S, action_size=A)

    out = pl.pallas_call(
        kernel,
        out_shape=jax.ShapeDtypeStruct((1, pad_B), jnp.float32),
        grid_spec=pltpu.PrefetchScalarGridSpec(
            num_scalar_prefetch=0,
            grid=(num_tiles,),
            in_specs=in_specs,
            out_specs=out_specs,
        ),
        compiler_params=pltpu.CompilerParams(
            dimension_semantics=("parallel",),
            # explicit scoped-VMEM budget so TM sweeps up to ~2048 don't hit
            # the v5e 16 MiB default; safely <= physical on v5e/v6e/v7x.
            vmem_limit_bytes=64 * 1024 * 1024,
        ),
        cost_estimate=pl.CostEstimate(
            flops=int(flops), transcendentals=0,
            bytes_accessed=int(bytes_accessed)),
    )(x, kparams["w1"], kparams["b1"],
      kparams["w2x"], kparams["w2a"], kparams["b2"],
      kparams["w3"], kparams["b3"], kparams["w4"], kparams["b4"])

    return out[0, :B].reshape(B, 1)


def prepare_params(params):
    """One-time cast/pack of weights for the kernel.

    Call once (outside the per-step path): bf16 copies for the MXU operands,
    f32 for everything on the VPU path.  Weights stay in the PyTorch (out,in)
    orientation because the kernel runs the network lane-major (batch on the
    lane axis).
    """
    H1 = params["w1"].shape[0]
    return {
        "w1":  params["w1"].astype(jnp.bfloat16),                    # (256, S)
        "b1":  params["b1"].reshape(-1, 1).astype(jnp.float32),      # (256, 1)
        "w2x": params["w2"][:, :H1].astype(jnp.bfloat16),            # (256, 256)
        "w2a": params["w2"][:, H1:].astype(jnp.float32),             # (256, A) VPU path
        "b2":  params["b2"].reshape(-1, 1).astype(jnp.float32),      # (256, 1)
        "w3":  params["w3"].astype(jnp.bfloat16),                    # (128, 256)
        "b3":  params["b3"].reshape(-1, 1).astype(jnp.float32),      # (128, 1)
        "w4":  params["w4"].reshape(-1, 1).astype(jnp.float32),      # (128, 1), from shape
        "b4":  params["b4"].reshape(1, 1).astype(jnp.float32),       # (1, 1)
    }


def init_params(key, state_size, action_size):
    """Deterministic init mirroring QNetwork.reset_parameters shapes/ranges.

    Weights stored PyTorch-style as (out_features, in_features).  hidden_init
    uses weight.size()[0] (= out_features) as 'fan_in', so the limits are
    1/sqrt(out_features), reproducing the original module's (quirky) behavior.
    Biases keep PyTorch's default uniform(-1/sqrt(in), 1/sqrt(in)).
    """
    k = jax.random.split(key, 8)
    lim1 = 1.0 / jnp.sqrt(256.0)
    lim2 = 1.0 / jnp.sqrt(256.0)
    lim3 = 1.0 / jnp.sqrt(128.0)
    lim4 = 0.003

    w1 = jax.random.uniform(k[0], (256, state_size), jnp.float32, -lim1, lim1)
    w2 = jax.random.uniform(k[1], (256, 256 + action_size), jnp.float32, -lim2, lim2)
    w3 = jax.random.uniform(k[2], (128, 256), jnp.float32, -lim3, lim3)
    w4 = jax.random.uniform(k[3], (1, 128), jnp.float32, -lim4, lim4)

    b1 = jax.random.uniform(k[4], (256,), jnp.float32,
                            -1.0 / jnp.sqrt(float(state_size)),
                            1.0 / jnp.sqrt(float(state_size)))
    b2 = jax.random.uniform(k[5], (256,), jnp.float32,
                            -1.0 / jnp.sqrt(256.0 + action_size),
                            1.0 / jnp.sqrt(256.0 + action_size))
    b3 = jax.random.uniform(k[6], (128,), jnp.float32,
                            -1.0 / jnp.sqrt(256.0), 1.0 / jnp.sqrt(256.0))
    b4 = jax.random.uniform(k[7], (1,), jnp.float32,
                            -1.0 / jnp.sqrt(128.0), 1.0 / jnp.sqrt(128.0))

    return {"w1": w1, "b1": b1, "w2": w2, "b2": b2,
            "w3": w3, "b3": b3, "w4": w4, "b4": b4}


def reference_forward(state, action, p):
    """Pure-JAX f32 reference matching the PyTorch module exactly."""
    def lrelu(v):
        return jnp.where(v > 0, v, NEG_SLOPE * v)
    h1 = lrelu(state @ p["w1"].T + p["b1"])
    inp = jnp.concatenate([h1, action], axis=1)
    h2 = lrelu(inp @ p["w2"].T + p["b2"])
    h3 = lrelu(h2 @ p["w3"].T + p["b3"])
    return h3 @ p["w4"].T + p["b4"]


if __name__ == "__main__":
    key = jax.random.PRNGKey(0)
    k_s, k_a, k_p = jax.random.split(key, 3)

    # B=300 exercises the >=2-tile path (TM=256 -> pad to 512, 2 tiles) and
    # the ragged-batch padding/slicing, while staying small.
    B, STATE_SIZE, ACTION_SIZE = 300, 16, 4
    state = jax.random.normal(k_s, (B, STATE_SIZE), jnp.float32)
    action = jax.random.normal(k_a, (B, ACTION_SIZE), jnp.float32)

    params = init_params(k_p, STATE_SIZE, ACTION_SIZE)
    kparams = prepare_params(params)          # cast/pack weights ONCE, off the hot path

    out = qnetwork_forward(state, action, kparams)
    out = jax.block_until_ready(out)

    ref = reference_forward(state, action, params)
    assert out.shape == (B, 1), out.shape
    # matmul operands are bf16 (f32 accumulation), so allow bf16-level tolerance
    assert jnp.allclose(out, ref, atol=5e-3, rtol=5e-2), (
        "mismatch vs reference: max abs diff = "
        f"{float(jnp.max(jnp.abs(out - ref)))}")

    print("KERNEL_OK")
</pallas_src>

<mosaic_0001>
module attributes {stable_mosaic.version = 11 : i64} {
  func.func @qnetwork_kernel(%arg0: i32, %arg1: memref<20x256xf32, #tpu.memory_space<vmem>>, %arg2: memref<256x16xbf16, #tpu.memory_space<vmem>>, %arg3: memref<256x1xf32, #tpu.memory_space<vmem>>, %arg4: memref<256x256xbf16, #tpu.memory_space<vmem>>, %arg5: memref<256x4xf32, #tpu.memory_space<vmem>>, %arg6: memref<256x1xf32, #tpu.memory_space<vmem>>, %arg7: memref<128x256xbf16, #tpu.memory_space<vmem>>, %arg8: memref<128x1xf32, #tpu.memory_space<vmem>>, %arg9: memref<128x1xf32, #tpu.memory_space<vmem>>, %arg10: memref<1x1xf32, #tpu.memory_space<vmem>>, %arg11: memref<1x256xf32, #tpu.memory_space<vmem>>) attributes {dimension_semantics = [#tpu.dimension_semantics<parallel>], iteration_bounds = array<i64: 2>, scalar_prefetch = 0 : i64, scratch_operands = 0 : i64, tpu.core_type = #tpu.core_type<tc>, window_params = [{transform_indices = @transform_0, window_bounds = array<i64: 20, 256>}, {pipeline_mode = #tpu.pipeline_mode<synchronous>, transform_indices = @transform_1, window_bounds = array<i64: 256, 16>}, {pipeline_mode = #tpu.pipeline_mode<synchronous>, transform_indices = @transform_2, window_bounds = array<i64: 256, 1>}, {pipeline_mode = #tpu.pipeline_mode<synchronous>, transform_indices = @transform_3, window_bounds = array<i64: 256, 256>}, {pipeline_mode = #tpu.pipeline_mode<synchronous>, transform_indices = @transform_4, window_bounds = array<i64: 256, 4>}, {pipeline_mode = #tpu.pipeline_mode<synchronous>, transform_indices = @transform_5, window_bounds = array<i64: 256, 1>}, {pipeline_mode = #tpu.pipeline_mode<synchronous>, transform_indices = @transform_6, window_bounds = array<i64: 128, 256>}, {pipeline_mode = #tpu.pipeline_mode<synchronous>, transform_indices = @transform_7, window_bounds = array<i64: 128, 1>}, {pipeline_mode = #tpu.pipeline_mode<synchronous>, transform_indices = @transform_8, window_bounds = array<i64: 128, 1>}, {pipeline_mode = #tpu.pipeline_mode<synchronous>, transform_indices = @transform_9, window_bounds = array<i64: 1, 1>}, {transform_indices = @transform_10, window_bounds = array<i64: 1, 256>}]} {
    %c0 = arith.constant 0 : index
    %c0_0 = arith.constant 0 : index
    %0 = vector.load %arg1[%c0, %c0_0] : memref<20x256xf32, #tpu.memory_space<vmem>>, vector<20x256xf32>
    %1 = vector.extract_strided_slice %0 {offsets = [0, 0], sizes = [16, 256], strides = [1, 1]} : vector<20x256xf32> to vector<16x256xf32>
    %2 = arith.truncf %1 : vector<16x256xf32> to vector<16x256xbf16>
    %c0_1 = arith.constant 0 : index
    %c0_2 = arith.constant 0 : index
    %3 = vector.load %arg2[%c0_1, %c0_2] : memref<256x16xbf16, #tpu.memory_space<vmem>>, vector<256x16xbf16>
    %cst = arith.constant dense<0.000000e+00> : vector<256x256xf32>
    %4 = tpu.matmul %3, %2, %cst {dimension_numbers = #tpu.dot_dimension_numbers<[1], [0], [0], [1], [0, 0, 1, 1], [], []>} : vector<256x16xbf16>, vector<16x256xbf16>, vector<256x256xf32> -> vector<256x256xf32>
    %c0_3 = arith.constant 0 : index
    %c0_4 = arith.constant 0 : index
    %5 = vector.load %arg3[%c0_3, %c0_4] : memref<256x1xf32, #tpu.memory_space<vmem>>, vector<256x1xf32>
    %6 = vector.broadcast %5 : vector<256x1xf32> to vector<256x256xf32>
    %7 = arith.addf %4, %6 : vector<256x256xf32>
    %cst_5 = arith.constant 0.00999999977 : f32
    %8 = vector.broadcast %cst_5 : f32 to vector<256x256xf32>
    %9 = arith.mulf %8, %7 : vector<256x256xf32>
    %10 = arith.maximumf %7, %9 : vector<256x256xf32>
    %c0_6 = arith.constant 0 : index
    %c0_7 = arith.constant 0 : index
    %11 = vector.load %arg4[%c0_6, %c0_7] : memref<256x256xbf16, #tpu.memory_space<vmem>>, vector<256x256xbf16>
    %12 = arith.truncf %10 : vector<256x256xf32> to vector<256x256xbf16>
    %cst_8 = arith.constant dense<0.000000e+00> : vector<256x256xf32>
    %13 = tpu.matmul %11, %12, %cst_8 {dimension_numbers = #tpu.dot_dimension_numbers<[1], [0], [0], [1], [0, 0, 1, 1], [], []>} : vector<256x256xbf16>, vector<256x256xbf16>, vector<256x256xf32> -> vector<256x256xf32>
    %c0_9 = arith.constant 0 : index
    %c0_10 = arith.constant 0 : index
    %14 = vector.load %arg5[%c0_9, %c0_10] : memref<256x4xf32, #tpu.memory_space<vmem>>, vector<256x4xf32>
    %15 = vector.extract_strided_slice %14 {offsets = [0, 0], sizes = [256, 1], strides = [1, 1]} : vector<256x4xf32> to vector<256x1xf32>
    %16 = vector.extract_strided_slice %0 {offsets = [16, 0], sizes = [1, 256], strides = [1, 1]} : vector<20x256xf32> to vector<1x256xf32>
    %17 = vector.broadcast %15 : vector<256x1xf32> to vector<256x256xf32>
    %18 = vector.broadcast %16 : vector<1x256xf32> to vector<256x256xf32>
    %19 = arith.mulf %17, %18 : vector<256x256xf32>
    %20 = arith.addf %13, %19 : vector<256x256xf32>
    %21 = vector.extract_strided_slice %14 {offsets = [0, 1], sizes = [256, 1], strides = [1, 1]} : vector<256x4xf32> to vector<256x1xf32>
    %22 = vector.extract_strided_slice %0 {offsets = [17, 0], sizes = [1, 256], strides = [1, 1]} : vector<20x256xf32> to vector<1x256xf32>
    %23 = vector.broadcast %21 : vector<256x1xf32> to vector<256x256xf32>
    %24 = vector.broadcast %22 : vector<1x256xf32> to vector<256x256xf32>
    %25 = arith.mulf %23, %24 : vector<256x256xf32>
    %26 = arith.addf %20, %25 : vector<256x256xf32>
    %27 = vector.extract_strided_slice %14 {offsets = [0, 2], sizes = [256, 1], strides = [1, 1]} : vector<256x4xf32> to vector<256x1xf32>
    %28 = vector.extract_strided_slice %0 {offsets = [18, 0], sizes = [1, 256], strides = [1, 1]} : vector<20x256xf32> to vector<1x256xf32>
    %29 = vector.broadcast %27 : vector<256x1xf32> to vector<256x256xf32>
    %30 = vector.broadcast %28 : vector<1x256xf32> to vector<256x256xf32>
    %31 = arith.mulf %29, %30 : vector<256x256xf32>
    %32 = arith.addf %26, %31 : vector<256x256xf32>
    %33 = vector.extract_strided_slice %14 {offsets = [0, 3], sizes = [256, 1], strides = [1, 1]} : vector<256x4xf32> to vector<256x1xf32>
    %34 = vector.extract_strided_slice %0 {offsets = [19, 0], sizes = [1, 256], strides = [1, 1]} : vector<20x256xf32> to vector<1x256xf32>
    %35 = vector.broadcast %33 : vector<256x1xf32> to vector<256x256xf32>
    %36 = vector.broadcast %34 : vector<1x256xf32> to vector<256x256xf32>
    %37 = arith.mulf %35, %36 : vector<256x256xf32>
    %38 = arith.addf %32, %37 : vector<256x256xf32>
    %c0_11 = arith.constant 0 : index
    %c0_12 = arith.constant 0 : index
    %39 = vector.load %arg6[%c0_11, %c0_12] : memref<256x1xf32, #tpu.memory_space<vmem>>, vector<256x1xf32>
    %40 = vector.broadcast %39 : vector<256x1xf32> to vector<256x256xf32>
    %41 = arith.addf %38, %40 : vector<256x256xf32>
    %cst_13 = arith.constant 0.00999999977 : f32
    %42 = vector.broadcast %cst_13 : f32 to vector<256x256xf32>
    %43 = arith.mulf %42, %41 : vector<256x256xf32>
    %44 = arith.maximumf %41, %43 : vector<256x256xf32>
    %c0_14 = arith.constant 0 : index
    %c0_15 = arith.constant 0 : index
    %45 = vector.load %arg7[%c0_14, %c0_15] : memref<128x256xbf16, #tpu.memory_space<vmem>>, vector<128x256xbf16>
    %46 = arith.truncf %44 : vector<256x256xf32> to vector<256x256xbf16>
    %cst_16 = arith.constant dense<0.000000e+00> : vector<128x256xf32>
    %47 = tpu.matmul %45, %46, %cst_16 {dimension_numbers = #tpu.dot_dimension_numbers<[1], [0], [0], [1], [0, 0, 1, 1], [], []>} : vector<128x256xbf16>, vector<256x256xbf16>, vector<128x256xf32> -> vector<128x256xf32>
    %c0_17 = arith.constant 0 : index
    %c0_18 = arith.constant 0 : index
    %48 = vector.load %arg8[%c0_17, %c0_18] : memref<128x1xf32, #tpu.memory_space<vmem>>, vector<128x1xf32>
    %49 = vector.broadcast %48 : vector<128x1xf32> to vector<128x256xf32>
    %50 = arith.addf %47, %49 : vector<128x256xf32>
    %cst_19 = arith.constant 0.00999999977 : f32
    %51 = vector.broadcast %cst_19 : f32 to vector<128x256xf32>
    %52 = arith.mulf %51, %50 : vector<128x256xf32>
    %53 = arith.maximumf %50, %52 : vector<128x256xf32>
    %c0_20 = arith.constant 0 : index
    %c0_21 = arith.constant 0 : index
    %54 = vector.load %arg9[%c0_20, %c0_21] : memref<128x1xf32, #tpu.memory_space<vmem>>, vector<128x1xf32>
    %55 = vector.broadcast %54 : vector<128x1xf32> to vector<128x256xf32>
    %56 = arith.mulf %53, %55 : vector<128x256xf32>
    %cst_22 = arith.constant dense<0.000000e+00> : vector<256xf32>
    %57 = vector.multi_reduction <add>, %56, %cst_22 [0] : vector<128x256xf32> to vector<256xf32>
    %58 = vector.shape_cast %57 : vector<256xf32> to vector<1x256xf32>
    %c0_23 = arith.constant 0 : index
    %c0_24 = arith.constant 0 : index
    %59 = vector.load %arg10[%c0_23, %c0_24] : memref<1x1xf32, #tpu.memory_space<vmem>>, vector<1x1xf32>
    %60 = vector.broadcast %59 : vector<1x1xf32> to vector<1x256xf32>
    %61 = arith.addf %58, %60 : vector<1x256xf32>
    %c0_25 = arith.constant 0 : index
    %c0_26 = arith.constant 0 : index
    %62 = vector.load %arg11[%c0_25, %c0_26] : memref<1x256xf32, #tpu.memory_space<vmem>>, vector<1x256xf32>
    tpu.vector_store %arg11[%c0_25, %c0_26], %61 {strides = array<i32>} : memref<1x256xf32, #tpu.memory_space<vmem>>, vector<1x256xf32>,
    return
  }
  func.func @transform_0(%arg0: i32) -> (i32, i32) {
    %c0_i32 = arith.constant 0 : i32
    %c0_i32_0 = arith.constant 0 : i32
    return %c0_i32, %arg0 : i32, i32
  }
  func.func @transform_1(%arg0: i32) -> (i32, i32) {
    %c0_i32 = arith.constant 0 : i32
    %c0_i32_0 = arith.constant 0 : i32
    %c0_i32_1 = arith.constant 0 : i32
    return %c0_i32, %c0_i32_0 : i32, i32
  }
  func.func @transform_2(%arg0: i32) -> (i32, i32) {
    %c0_i32 = arith.constant 0 : i32
    %c0_i32_0 = arith.constant 0 : i32
    %c0_i32_1 = arith.constant 0 : i32
    return %c0_i32, %c0_i32_0 : i32, i32
  }
  func.func @transform_3(%arg0: i32) -> (i32, i32) {
    %c0_i32 = arith.constant 0 : i32
    %c0_i32_0 = arith.constant 0 : i32
    %c0_i32_1 = arith.constant 0 : i32
    return %c0_i32, %c0_i32_0 : i32, i32
  }
  func.func @transform_4(%arg0: i32) -> (i32, i32) {
    %c0_i32 = arith.constant 0 : i32
    %c0_i32_0 = arith.constant 0 : i32
    %c0_i32_1 = arith.constant 0 : i32
    return %c0_i32, %c0_i32_0 : i32, i32
  }
  func.func @transform_5(%arg0: i32) -> (i32, i32) {
    %c0_i32 = arith.constant 0 : i32
    %c0_i32_0 = arith.constant 0 : i32
    %c0_i32_1 = arith.constant 0 : i32
    return %c0_i32, %c0_i32_0 : i32, i32
  }
  func.func @transform_6(%arg0: i32) -> (i32, i32) {
    %c0_i32 = arith.constant 0 : i32
    %c0_i32_0 = arith.constant 0 : i32
    %c0_i32_1 = arith.constant 0 : i32
    return %c0_i32, %c0_i32_0 : i32, i32
  }
  func.func @transform_7(%arg0: i32) -> (i32, i32) {
    %c0_i32 = arith.constant 0 : i32
    %c0_i32_0 = arith.constant 0 : i32
    %c0_i32_1 = arith.constant 0 : i32
    return %c0_i32, %c0_i32_0 : i32, i32
  }
  func.func @transform_8(%arg0: i32) -> (i32, i32) {
    %c0_i32 = arith.constant 0 : i32
    %c0_i32_0 = arith.constant 0 : i32
    %c0_i32_1 = arith.constant 0 : i32
    return %c0_i32, %c0_i32_0 : i32, i32
  }
  func.func @transform_9(%arg0: i32) -> (i32, i32) {
    %c0_i32 = arith.constant 0 : i32
    %c0_i32_0 = arith.constant 0 : i32
    %c0_i32_1 = arith.constant 0 : i32
    return %c0_i32, %c0_i32_0 : i32, i32
  }
  func.func @transform_10(%arg0: i32) -> (i32, i32) {
    %c0_i32 = arith.constant 0 : i32
    %c0_i32_0 = arith.constant 0 : i32
    return %c0_i32, %arg0 : i32, i32
  }
}

</mosaic_0001>

<llo_original>
// kernel: tpu_custom_call.1
$region0: #{tpu_custom_call.1}
  #allocation0 [shape = 'u32[]', space=smem, size = 0x4, offset = 0x4, fixed_abs, tag = 'smem constant byte address 0x4 - core index']
  #allocation1 [shape = 'u32[144,128]{1,0:T(1,128)}', space=vmem, size = 0x12000, scoped, tag = 'internal scratch']
  #allocation2 [shape = 'f32[1,1]{1,0:T(1,128)S(1)}', space=vmem, size = 0x200, scoped, tag = 'scoped memory for tpu_custom_call.1']
  %s0 = inlined_call_operand.hbm [shape: f32[20,512], index: 0, kind: input, shape index: {}]
  %s1 = inlined_call_operand.hbm [shape: bf16[256,16], index: 1, kind: input, shape index: {}]
  %s2 = inlined_call_operand.hbm [shape: f32[256,1], index: 2, kind: input, shape index: {}]
  %s3 = inlined_call_operand.hbm [shape: bf16[256,256], index: 3, kind: input, shape index: {}]
  %s4 = inlined_call_operand.hbm [shape: f32[256,4], index: 4, kind: input, shape index: {}]
  %s5 = inlined_call_operand.hbm [shape: f32[256,1], index: 5, kind: input, shape index: {}]
  %s6 = inlined_call_operand.hbm [shape: bf16[128,256], index: 6, kind: input, shape index: {}]
  %s7 = inlined_call_operand.hbm [shape: f32[128,1], index: 7, kind: input, shape index: {}]
  %s8 = inlined_call_operand.hbm [shape: f32[128,1], index: 8, kind: input, shape index: {}]
  %s9 = inlined_call_operand.<no memory space> [shape: f32[1,1], index: 9, kind: input, shape index: {}]
  %s10 = inlined_call_operand.hbm [shape: f32[1,512], index: 10, kind: output, shape index: {}]
  %s11 = sld [smem:[#allocation0]]
  $region109: #{tpu_custom_call.1} parent=0
    _
  %s13 = ssub.s32 1, %s11
  %s14 = scalar_select 0, %s13, %s11
  %v15 = vstv %s9
  %16 = vst [vmem:[#allocation2] sm:$0x1] %v15
  $region1: #{tpu_custom_call.1} parent=0
    #allocation3 [shape = 'u8[49152]{0}', space=vmem, size = 0xc000, scoped, tag = 'input window, operand 0']
    #allocation4 [shape = 's32[2]{0}', space=sflag, size = 0x8, scoped, tag = 'scoped memory for tpu_custom_call.1']
    #allocation5 [shape = 's32[2]{0}', space=sflag, size = 0x8, scoped, tag = 'scoped memory for tpu_custom_call.1']
    #allocation6 [shape = 'u8[65536]{0}', space=vmem, size = 0x10000, scoped, tag = 'input window, operand 1, single buffered']
    #allocation7 [shape = 's32[1]{0}', space=sflag, size = 0x4, scoped, tag = 'scoped memory for tpu_custom_call.1']
    #allocation8 [shape = 'u8[131072]{0}', space=vmem, size = 0x20000, scoped, tag = 'input window, operand 2, single buffered']
    #allocation9 [shape = 'u8[131072]{0}', space=vmem, size = 0x20000, scoped, tag = 'input window, operand 3, single buffered']
    #allocation10 [shape = 's32[1]{0}', space=sflag, size = 0x4, scoped, tag = 'scoped memory for tpu_custom_call.1']
    #allocation11 [shape = 'u8[131072]{0}', space=vmem, size = 0x20000, scoped, tag = 'input window, operand 4, single buffered']
    #allocation12 [shape = 'u8[131072]{0}', space=vmem, size = 0x20000, scoped, tag = 'input window, operand 5, single buffered']
    #allocation13 [shape = 's32[1]{0}', space=sflag, size = 0x4, scoped, tag = 'scoped memory for tpu_custom_call.1']
    #allocation14 [shape = 'u8[65536]{0}', space=vmem, size = 0x10000, scoped, tag = 'input window, operand 6, single buffered']
    #allocation15 [shape = 'u8[65536]{0}', space=vmem, size = 0x10000, scoped, tag = 'input window, operand 7, single buffered']
    #allocation16 [shape = 's32[1]{0}', space=sflag, size = 0x4, scoped, tag = 'scoped memory for tpu_custom_call.1']
    #allocation17 [shape = 'u8[65536]{0}', space=vmem, size = 0x10000, scoped, tag = 'input window, operand 8, single buffered']
    #allocation18 [shape = 'u8[2048]{0}', space=vmem, size = 0x800, scoped, tag = 'output window, operand 0']
    %17 = vsyncpa [#allocation4], 0
    %s18 = scalar_lea.sflag [#allocation4], 1
    %19 = vsyncpa %s18, 0
    %20 = vsyncpa [#allocation7], 0
    %21 = vsyncpa [#allocation10], 0
    %22 = vsyncpa [#allocation13], 0
    %23 = vsyncpa [#allocation16], 0
    %24 = vsyncpa [#allocation5], 0
    %s25 = scalar_lea.sflag [#allocation5], 1
    %26 = vsyncpa %s25, 0
    loop: start=0, step=1, limit=4
    $region2: #{tpu_custom_call.1} parent=1 // loop_pre_header
      _
    $region3: #{tpu_custom_call.1} parent=1 // loop_header
      %s28 = sphi 0, %s32
      %p29 = scmp.ge.s32.totalorder %s28, 4
      %s38 = sphi 0, %s40
      %s41 = sphi 0, %s38
      %s42 = sphi 0, %s41
      %s58 = sphi 0, %s42
      %s62 = sphi 0, %s62
      %s64 = sphi 0, %s62
      %s65 = sphi 0, %s64
      %s79 = sphi 0, %s65
      %s83 = sphi 0, %s83
      %s85 = sphi 0, %s83
      %s86 = sphi 0, %s85
      %s100 = sphi 0, %s86
      %s104 = sphi 0, %s104
      %s106 = sphi 0, %s104
      %s107 = sphi 0, %s106
      %s121 = sphi 0, %s107
      %s125 = sphi 0, %s125
      %s127 = sphi 0, %s125
      %s128 = sphi 0, %s127
      %s142 = sphi 0, %s128
      %s146 = sphi 0, %s146
      %s148 = sphi 0, %s146
      %s149 = sphi 0, %s148
      %s163 = sphi 0, %s149
      %s167 = sphi 0, %s167
      %s169 = sphi 0, %s167
      %s170 = sphi 0, %s169
      %s184 = sphi 0, %s170
      %s188 = sphi 0, %s188
      %s190 = sphi 0, %s188
      %s191 = sphi 0, %s190
      %s205 = sphi 0, %s191
      %s209 = sphi 0, %s209
      %s211 = sphi 0, %s209
      %s212 = sphi 0, %s211
      %s226 = sphi 0, %s212
      %s230 = sphi 0, %s230
      %s232 = sphi 0, %s230
      %s233 = sphi 0, %s232
      %s247 = sphi 0, %s233
      %s253 = sphi 0, %s255
      %s256 = sphi 0, %s253
      %s257 = sphi 0, %s256
      %s273 = sphi 0, %s257
    $region4: #{tpu_custom_call.1} parent=1 // loop_header_branch
      %31 = sbr.rel (%p29) target = $region8
    $region5: #{tpu_custom_call.1} parent=1 // loop_body
      %s33 = ssub.s32 %s28, 1
      %s34 = ssub.s32 %s28, 2
      %s35 = sadd.s32 %s28, 1
      %s36 = ssub.s32 %s28, %s35
      %p37 = scmp.eq.s32.totalorder %s36, 0
      %s39 = sadd.s32 %s38, 1
      %s40 = scalar_select %p37, %s38, %s39
      %p43 = pneg %p37
      %p44 = scmp.eq.s32.totalorder %s28, 1
      %p45 = por %p43, %p44
      %p46 = scmp.ne.s32.totalorder %s38, %s41
      %p47 = scmp.eq.s32.totalorder %s28, 0
      %p48 = por %p46, %p47
      %p49 = scmp.ne.s32.totalorder %s38, %s41
      %p50 = scmp.eq.s32.totalorder %s33, 1
      %p51 = por %p49, %p50
      %p52 = scmp.ne.s32.totalorder %s41, %s42
      %p53 = scmp.eq.s32.totalorder %s33, 0
      %p54 = por %p52, %p53
      %p55 = scmp.ne.s32.totalorder %s41, %s42
      %p56 = scmp.eq.s32.totalorder %s34, 1
      %p57 = por %p55, %p56
      %p59 = scmp.ne.s32.totalorder %s42, %s58
      %p60 = scmp.eq.s32.totalorder %s34, 0
      %p61 = por %p59, %p60
      %s63 = sadd.s32 %s62, 1
      %p66 = scmp.eq.s32.totalorder %s28, 1
      %p67 = scmp.ne.s32.totalorder %s62, %s64
      %p68 = scmp.eq.s32.totalorder %s28, 0
      %p69 = por %p67, %p68
      %p70 = scmp.ne.s32.totalorder %s62, %s64
      %p71 = scmp.eq.s32.totalorder %s33, 1
      %p72 = por %p70, %p71
      %p73 = scmp.ne.s32.totalorder %s64, %s65
      %p74 = scmp.eq.s32.totalorder %s33, 0
      %p75 = por %p73, %p74
      %p76 = scmp.ne.s32.totalorder %s64, %s65
      %p77 = scmp.eq.s32.totalorder %s34, 1
      %p78 = por %p76, %p77
      %p80 = scmp.ne.s32.totalorder %s65, %s79
      %p81 = scmp.eq.s32.totalorder %s34, 0
      %p82 = por %p80, %p81
      %s84 = sadd.s32 %s83, 1
      %p87 = scmp.eq.s32.totalorder %s28, 1
      %p88 = scmp.ne.s32.totalorder %s83, %s85
      %p89 = scmp.eq.s32.totalorder %s28, 0
      %p90 = por %p88, %p89
      %p91 = scmp.ne.s32.totalorder %s83, %s85
      %p92 = scmp.eq.s32.totalorder %s33, 1
      %p93 = por %p91, %p92
      %p94 = scmp.ne.s32.totalorder %s85, %s86
      %p95 = scmp.eq.s32.totalorder %s33, 0
      %p96 = por %p94, %p95
      %p97 = scmp.ne.s32.totalorder %s85, %s86
      %p98 = scmp.eq.s32.totalorder %s34, 1
      %p99 = por %p97, %p98
      %p101 = scmp.ne.s32.totalorder %s86, %s100
      %p102 = scmp.eq.s32.totalorder %s34, 0
      %p103 = por %p101, %p102
      %s105 = sadd.s32 %s104, 1
      %p108 = scmp.eq.s32.totalorder %s28, 1
      %p109 = scmp.ne.s32.totalorder %s104, %s106
      %p110 = scmp.eq.s32.totalorder %s28, 0
      %p111 = por %p109, %p110
      %p112 = scmp.ne.s32.totalorder %s104, %s106
      %p113 = scmp.eq.s32.totalorder %s33, 1
      %p114 = por %p112, %p113
      %p115 = scmp.ne.s32.totalorder %s106, %s107
      %p116 = scmp.eq.s32.totalorder %s33, 0
      %p117 = por %p115, %p116
      %p118 = scmp.ne.s32.totalorder %s106, %s107
      %p119 = scmp.eq.s32.totalorder %s34, 1
      %p120 = por %p118, %p119
      %p122 = scmp.ne.s32.totalorder %s107, %s121
      %p123 = scmp.eq.s32.totalorder %s34, 0
      %p124 = por %p122, %p123
      %s126 = sadd.s32 %s125, 1
      %p129 = scmp.eq.s32.totalorder %s28, 1
      %p130 = scmp.ne.s32.totalorder %s125, %s127
      %p131 = scmp.eq.s32.totalorder %s28, 0
      %p132 = por %p130, %p131
      %p133 = scmp.ne.s32.totalorder %s125, %s127
      %p134 = scmp.eq.s32.totalorder %s33, 1
      %p135 = por %p133, %p134
      %p136 = scmp.ne.s32.totalorder %s127, %s128
      %p137 = scmp.eq.s32.totalorder %s33, 0
      %p138 = por %p136, %p137
      %p139 = scmp.ne.s32.totalorder %s127, %s128
      %p140 = scmp.eq.s32.totalorder %s34, 1
      %p141 = por %p139, %p140
      %p143 = scmp.ne.s32.totalorder %s128, %s142
      %p144 = scmp.eq.s32.totalorder %s34, 0
      %p145 = por %p143, %p144
      %s147 = sadd.s32 %s146, 1
      %p150 = scmp.eq.s32.totalorder %s28, 1
      %p151 = scmp.ne.s32.totalorder %s146, %s148
      %p152 = scmp.eq.s32.totalorder %s28, 0
      %p153 = por %p151, %p152
      %p154 = scmp.ne.s32.totalorder %s146, %s148
      %p155 = scmp.eq.s32.totalorder %s33, 1
      %p156 = por %p154, %p155
      %p157 = scmp.ne.s32.totalorder %s148, %s149
      %p158 = scmp.eq.s32.totalorder %s33, 0
      %p159 = por %p157, %p158
      %p160 = scmp.ne.s32.totalorder %s148, %s149
      %p161 = scmp.eq.s32.totalorder %s34, 1
      %p162 = por %p160, %p161
      %p164 = scmp.ne.s32.totalorder %s149, %s163
      %p165 = scmp.eq.s32.totalorder %s34, 0
      %p166 = por %p164, %p165
      %s168 = sadd.s32 %s167, 1
      %p171 = scmp.eq.s32.totalorder %s28, 1
      %p172 = scmp.ne.s32.totalorder %s167, %s169
      %p173 = scmp.eq.s32.totalorder %s28, 0
      %p174 = por %p172, %p173
      %p175 = scmp.ne.s32.totalorder %s167, %s169
      %p176 = scmp.eq.s32.totalorder %s33, 1
      %p177 = por %p175, %p176
      %p178 = scmp.ne.s32.totalorder %s169, %s170
      %p179 = scmp.eq.s32.totalorder %s33, 0
      %p180 = por %p178, %p179
      %p181 = scmp.ne.s32.totalorder %s169, %s170
      %p182 = scmp.eq.s32.totalorder %s34, 1
      %p183 = por %p181, %p182
      %p185 = scmp.ne.s32.totalorder %s170, %s184
      %p186 = scmp.eq.s32.totalorder %s34, 0
      %p187 = por %p185, %p186
      %s189 = sadd.s32 %s188, 1
      %p192 = scmp.eq.s32.totalorder %s28, 1
      %p193 = scmp.ne.s32.totalorder %s188, %s190
      %p194 = scmp.eq.s32.totalorder %s28, 0
      %p195 = por %p193, %p194
      %p196 = scmp.ne.s32.totalorder %s188, %s190
      %p197 = scmp.eq.s32.totalorder %s33, 1
      %p198 = por %p196, %p197
      %p199 = scmp.ne.s32.totalorder %s190, %s191
      %p200 = scmp.eq.s32.totalorder %s33, 0
      %p201 = por %p199, %p200
      %p202 = scmp.ne.s32.totalorder %s190, %s191
      %p203 = scmp.eq.s32.totalorder %s34, 1
      %p204 = por %p202, %p203
      %p206 = scmp.ne.s32.totalorder %s191, %s205
      %p207 = scmp.eq.s32.totalorder %s34, 0
      %p208 = por %p206, %p207
      %s210 = sadd.s32 %s209, 1
      %p213 = scmp.eq.s32.totalorder %s28, 1
      %p214 = scmp.ne.s32.totalorder %s209, %s211
      %p215 = scmp.eq.s32.totalorder %s28, 0
      %p216 = por %p214, %p215
      %p217 = scmp.ne.s32.totalorder %s209, %s211
      %p218 = scmp.eq.s32.totalorder %s33, 1
      %p219 = por %p217, %p218
      %p220 = scmp.ne.s32.totalorder %s211, %s212
      %p221 = scmp.eq.s32.totalorder %s33, 0
      %p222 = por %p220, %p221
      %p223 = scmp.ne.s32.totalorder %s211, %s212
      %p224 = scmp.eq.s32.totalorder %s34, 1
      %p225 = por %p223, %p224
      %p227 = scmp.ne.s32.totalorder %s212, %s226
      %p228 = scmp.eq.s32.totalorder %s34, 0
      %p229 = por %p227, %p228
      %s231 = sadd.s32 %s230, 1
      %p234 = scmp.eq.s32.totalorder %s28, 1
      %p235 = scmp.ne.s32.totalorder %s230, %s232
      %p236 = scmp.eq.s32.totalorder %s28, 0
      %p237 = por %p235, %p236
      %p238 = scmp.ne.s32.totalorder %s230, %s232
      %p239 = scmp.eq.s32.totalorder %s33, 1
      %p240 = por %p238, %p239
      %p241 = scmp.ne.s32.totalorder %s232, %s233
      %p242 = scmp.eq.s32.totalorder %s33, 0
      %p243 = por %p241, %p242
      %p244 = scmp.ne.s32.totalorder %s232, %s233
      %p245 = scmp.eq.s32.totalorder %s34, 1
      %p246 = por %p244, %p245
      %p248 = scmp.ne.s32.totalorder %s233, %s247
      %p249 = scmp.eq.s32.totalorder %s34, 0
      %p250 = por %p248, %p249
      %s251 = ssub.s32 %s28, %s35
      %p252 = scmp.eq.s32.totalorder %s251, 0
      %s254 = sadd.s32 %s253, 1
      %s255 = scalar_select %p252, %s253, %s254
      %p258 = pneg %p252
      %p259 = scmp.eq.s32.totalorder %s28, 1
      %p260 = por %p258, %p259
      %p261 = scmp.ne.s32.totalorder %s253, %s256
      %p262 = scmp.eq.s32.totalorder %s28, 0
      %p263 = por %p261, %p262
      %p264 = scmp.ne.s32.totalorder %s253, %s256
      %p265 = scmp.eq.s32.totalorder %s33, 1
      %p266 = por %p264, %p265
      %p267 = scmp.ne.s32.totalorder %s256, %s257
      %p268 = scmp.eq.s32.totalorder %s33, 0
      %p269 = por %p267, %p268
      %p270 = scmp.ne.s32.totalorder %s256, %s257
      %p271 = scmp.eq.s32.totalorder %s34, 1
      %p272 = por %p270, %p271
      %p274 = scmp.ne.s32.totalorder %s257, %s273
      %p275 = scmp.eq.s32.totalorder %s34, 0
      %p276 = por %p274, %p275
      %p277 = scmp.le.s32.totalorder 1, %s28
      %p278 = scmp.lt.s32.totalorder %s28, 3
      %p279 = pnand %p277, %p278
      %p280 = pneg %p279
      // Predicated region
      $region9: #{tpu_custom_call.1} parent=5 // pred_check
        _
      $region10: #{tpu_custom_call.1} parent=5 // pred_check_branch
        %282 = sbr.rel (%p279) target = $region12
      $region11: #{tpu_custom_call.1} parent=5 // pred_region
        %s283 = ssub.s32 %s28, 1
        // Predicated region
        $region13: #{tpu_custom_call.1} parent=11 // pred_check
          %p284 = pneg %p75
        $region14: #{tpu_custom_call.1} parent=11 // pred_check_branch
          %286 = sbr.rel (%p284) target = $region16
        $region15: #{tpu_custom_call.1} parent=11 // pred_region
          %s288 = ssub.s32 2048, 2048
          %289 = vsyncadd [#allocation7], %s288
          %s290 = sshll.u32 [#allocation6], 4
          %s291 = int_to_ptr.vmem [resolvable:$true] %s290
          %296 = dma.hbm_to_vmem [thread:$0]  %s1, 2048, %s291, [#allocation7], 64, 64, 4
        $region16: #{tpu_custom_call.1} parent=11 // pred_fallthru
          _
        // Predicated region
        $region17: #{tpu_custom_call.1} parent=11 // pred_check
          %p297 = pneg %p96
        $region18: #{tpu_custom_call.1} parent=11 // pred_check_branch
          %299 = sbr.rel (%p297) target = $region20
        $region19: #{tpu_custom_call.1} parent=11 // pred_region
          %s301 = ssub.s32 4096, 4096
          %302 = vsyncadd [#allocation7], %s301
          %s303 = sshll.u32 [#allocation8], 4
          %s304 = int_to_ptr.vmem [resolvable:$true] %s303
          %309 = dma.hbm_to_vmem [thread:$0]  %s2, 4096, %s304, [#allocation7], 128, 128, 8
        $region20: #{tpu_custom_call.1} parent=11 // pred_fallthru
          _
        // Predicated region
        $region21: #{tpu_custom_call.1} parent=11 // pred_check
          %p310 = pneg %p117
        $region22: #{tpu_custom_call.1} parent=11 // pred_check_branch
          %312 = sbr.rel (%p310) target = $region24
        $region23: #{tpu_custom_call.1} parent=11 // pred_region
          %s314 = ssub.s32 4096, 4096
          %315 = vsyncadd [#allocation10], %s314
          %s316 = sshll.u32 [#allocation9], 4
          %s317 = int_to_ptr.vmem [resolvable:$true] %s316
          %322 = dma.hbm_to_vmem [thread:$0]  %s3, 4096, %s317, [#allocation10], 128, 128, 8
        $region24: #{tpu_custom_call.1} parent=11 // pred_fallthru
          _
        // Predicated region
        $region25: #{tpu_custom_call.1} parent=11 // pred_check
          %p323 = pneg %p138
        $region26: #{tpu_custom_call.1} parent=11 // pred_check_branch
          %325 = sbr.rel (%p323) target = $region28
        $region27: #{tpu_custom_call.1} parent=11 // pred_region
          %s327 = ssub.s32 4096, 4096
          %328 = vsyncadd [#allocation10], %s327
          %s329 = sshll.u32 [#allocation11], 4
          %s330 = int_to_ptr.vmem [resolvable:$true] %s329
          %335 = dma.hbm_to_vmem [thread:$0]  %s4, 4096, %s330, [#allocation10], 128, 128, 8
        $region28: #{tpu_custom_call.1} parent=11 // pred_fallthru
          _
        // Predicated region
        $region29: #{tpu_custom_call.1} parent=11 // pred_check
          %p336 = pneg %p159
        $region30: #{tpu_custom_call.1} parent=11 // pred_check_branch
          %338 = sbr.rel (%p336) target = $region32
        $region31: #{tpu_custom_call.1} parent=11 // pred_region
          %s340 = ssub.s32 4096, 4096
          %341 = vsyncadd [#allocation13], %s340
          %s342 = sshll.u32 [#allocation12], 4
          %s343 = int_to_ptr.vmem [resolvable:$true] %s342
          %348 = dma.hbm_to_vmem [thread:$0]  %s5, 4096, %s343, [#allocation13], 128, 128, 8
        $region32: #{tpu_custom_call.1} parent=11 // pred_fallthru
          _
        // Predicated region
        $region33: #{tpu_custom_call.1} parent=11 // pred_check
          %p349 = pneg %p180
        $region34: #{tpu_custom_call.1} parent=11 // pred_check_branch
          %351 = sbr.rel (%p349) target = $region36
        $region35: #{tpu_custom_call.1} parent=11 // pred_region
          %s353 = ssub.s32 2048, 2048
          %354 = vsyncadd [#allocation13], %s353
          %s355 = sshll.u32 [#allocation14], 4
          %s356 = int_to_ptr.vmem [resolvable:$true] %s355
          %361 = dma.hbm_to_vmem [thread:$0]  %s6, 2048, %s356, [#allocation13], 128, 128, 8
        $region36: #{tpu_custom_call.1} parent=11 // pred_fallthru
          _
        // Predicated region
        $region37: #{tpu_custom_call.1} parent=11 // pred_check
          %p362 = pneg %p201
        $region38: #{tpu_custom_call.1} parent=11 // pred_check_branch
          %364 = sbr.rel (%p362) target = $region40
        $region39: #{tpu_custom_call.1} parent=11 // pred_region
          %s366 = ssub.s32 2048, 2048
          %367 = vsyncadd [#allocation16], %s366
          %s368 = sshll.u32 [#allocation15], 4
          %s369 = int_to_ptr.vmem [resolvable:$true] %s368
          %374 = dma.hbm_to_vmem [thread:$0]  %s7, 2048, %s369, [#allocation16], 128, 128, 8
        $region40: #{tpu_custom_call.1} parent=11 // pred_fallthru
          _
        // Predicated region
        $region41: #{tpu_custom_call.1} parent=11 // pred_check
          %p375 = pneg %p222
        $region42: #{tpu_custom_call.1} parent=11 // pred_check_branch
          %377 = sbr.rel (%p375) target = $region44
        $region43: #{tpu_custom_call.1} parent=11 // pred_region
          %s379 = ssub.s32 2048, 2048
          %380 = vsyncadd [#allocation16], %s379
          %s381 = sshll.u32 [#allocation17], 4
          %s382 = int_to_ptr.vmem [resolvable:$true] %s381
          %387 = dma.hbm_to_vmem [thread:$0]  %s8, 2048, %s382, [#allocation16], 128, 128, 8
        $region44: #{tpu_custom_call.1} parent=11 // pred_fallthru
          _
        // Predicated region
        $region45: #{tpu_custom_call.1} parent=11 // pred_check
          %p388 = pneg %p243
        $region46: #{tpu_custom_call.1} parent=11 // pred_check_branch
          %390 = sbr.rel (%p388) target = $region48
        $region47: #{tpu_custom_call.1} parent=11 // pred_region
          _
        $region48: #{tpu_custom_call.1} parent=11 // pred_fallthru
          _
      $region12: #{tpu_custom_call.1} parent=5 // pred_fallthru
        _
      %p391 = scmp.lt.s32.totalorder %s28, 2
      // Predicated region
      $region49: #{tpu_custom_call.1} parent=5 // pred_check
        %p392 = pneg %p391
      $region50: #{tpu_custom_call.1} parent=5 // pred_check_branch
        %394 = sbr.rel (%p392) target = $region52
      $region51: #{tpu_custom_call.1} parent=5 // pred_region
        // Predicated region
        $region53: #{tpu_custom_call.1} parent=51 // pred_check
          %p395 = pneg %p48
        $region54: #{tpu_custom_call.1} parent=51 // pred_check_branch
          %397 = sbr.rel (%p395) target = $region56
        $region55: #{tpu_custom_call.1} parent=51 // pred_region
          %s398 = sand.u32 %s38, 1
          %s399 = scalar_lea.sflag [#allocation4], %s398
          %s400 = sand.u32 %s38, 1
          %s401 = smul.addr %s400, 48
          %s402 = scalar_lea.vmem [#allocation3], %s401
          %s403 = smul.u32 2, %s28
          %s405 = ssub.s32 768, 768
          %406 = vsyncadd %s399, %s405
          %s407 = smul.addr %s403, 128
          %s408 = scalar_lea.hbm %s0, %s407
          %s409 = sshll.u32 %s402, 4
          %s410 = int_to_ptr.vmem [resolvable:$true] %s409
          %415 = dma.hbm_to_vmem [thread:$0]  %s408, 768, %s410, %s399, 512, 256, 16
        $region56: #{tpu_custom_call.1} parent=51 // pred_fallthru
          _
      $region52: #{tpu_custom_call.1} parent=5 // pred_fallthru
        _
      %p416 = scmp.le.s32.totalorder 1, %s28
      %p417 = scmp.lt.s32.totalorder %s28, 3
      %p418 = pnand %p416, %p417
      %p419 = pneg %p418
      // Predicated region
      $region57: #{tpu_custom_call.1} parent=5 // pred_check
        _
      $region58: #{tpu_custom_call.1} parent=5 // pred_check_branch
        %421 = sbr.rel (%p418) target = $region60
      $region59: #{tpu_custom_call.1} parent=5 // pred_region
        %s422 = ssub.s32 %s28, 1
        %s423 = sand.u32 %s41, 1
        %s424 = scalar_lea.sflag [#allocation4], %s423
        %s425 = sand.u32 %s41, 1
        %s426 = smul.addr %s425, 48
        %s427 = scalar_lea.vmem [#allocation3], %s426
        // Predicated region
        $region61: #{tpu_custom_call.1} parent=59 // pred_check
          %p428 = pneg %p54
        $region62: #{tpu_custom_call.1} parent=59 // pred_check_branch
          %430 = sbr.rel (%p428) target = $region64
        $region63: #{tpu_custom_call.1} parent=59 // pred_region
          %431 = dma.done %s424, 768
        $region64: #{tpu_custom_call.1} parent=59 // pred_fallthru
          _
        // Predicated region
        $region65: #{tpu_custom_call.1} parent=59 // pred_check
          %p432 = pneg %p75
        $region66: #{tpu_custom_call.1} parent=59 // pred_check_branch
          %434 = sbr.rel (%p432) target = $region68
        $region67: #{tpu_custom_call.1} parent=59 // pred_region
          %435 = dma.done [#allocation7], 2048
        $region68: #{tpu_custom_call.1} parent=59 // pred_fallthru
          _
        // Predicated region
        $region69: #{tpu_custom_call.1} parent=59 // pred_check
          %p436 = pneg %p96
        $region70: #{tpu_custom_call.1} parent=59 // pred_check_branch
          %438 = sbr.rel (%p436) target = $region72
        $region71: #{tpu_custom_call.1} parent=59 // pred_region
          %439 = dma.done [#allocation7], 4096
        $region72: #{tpu_custom_call.1} parent=59 // pred_fallthru
          _
        // Predicated region
        $region73: #{tpu_custom_call.1} parent=59 // pred_check
          %p440 = pneg %p117
        $region74: #{tpu_custom_call.1} parent=59 // pred_check_branch
          %442 = sbr.rel (%p440) target = $region76
        $region75: #{tpu_custom_call.1} parent=59 // pred_region
          %443 = dma.done [#allocation10], 4096
        $region76: #{tpu_custom_call.1} parent=59 // pred_fallthru
          _
        // Predicated region
        $region77: #{tpu_custom_call.1} parent=59 // pred_check
          %p444 = pneg %p138
        $region78: #{tpu_custom_call.1} parent=59 // pred_check_branch
          %446 = sbr.rel (%p444) target = $region80
        $region79: #{tpu_custom_call.1} parent=59 // pred_region
          %447 = dma.done [#allocation10], 4096
        $region80: #{tpu_custom_call.1} parent=59 // pred_fallthru
          _
        // Predicated region
        $region81: #{tpu_custom_call.1} parent=59 // pred_check
          %p448 = pneg %p159
        $region82: #{tpu_custom_call.1} parent=59 // pred_check_branch
          %450 = sbr.rel (%p448) target = $region84
        $region83: #{tpu_custom_call.1} parent=59 // pred_region
          %451 = dma.done [#allocation13], 4096
        $region84: #{tpu_custom_call.1} parent=59 // pred_fallthru
          _
        // Predicated region
        $region85: #{tpu_custom_call.1} parent=59 // pred_check
          %p452 = pneg %p180
        $region86: #{tpu_custom_call.1} parent=59 // pred_check_branch
          %454 = sbr.rel (%p452) target = $region88
        $region87: #{tpu_custom_call.1} parent=59 // pred_region
          %455 = dma.done [#allocation13], 2048
        $region88: #{tpu_custom_call.1} parent=59 // pred_fallthru
          _
        // Predicated region
        $region89: #{tpu_custom_call.1} parent=59 // pred_check
          %p456 = pneg %p201
        $region90: #{tpu_custom_call.1} parent=59 // pred_check_branch
          %458 = sbr.rel (%p456) target = $region92
        $region91: #{tpu_custom_call.1} parent=59 // pred_region
          %459 = dma.done [#allocation16], 2048
        $region92: #{tpu_custom_call.1} parent=59 // pred_fallthru
          _
        // Predicated region
        $region93: #{tpu_custom_call.1} parent=59 // pred_check
          %p460 = pneg %p222
        $region94: #{tpu_custom_call.1} parent=59 // pred_check_branch
          %462 = sbr.rel (%p460) target = $region96
        $region95: #{tpu_custom_call.1} parent=59 // pred_region
          %463 = dma.done [#allocation16], 2048
        $region96: #{tpu_custom_call.1} parent=59 // pred_fallthru
          _
        %s464 = sand.u32 %s41, 1
        %s465 = scalar_lea.sflag [#allocation4], %s464
        %s466 = sand.u32 %s41, 1
        %s467 = smul.addr %s466, 48
        %s468 = scalar_lea.vmem [#allocation3], %s467
        %p469 = pneg %p54
        %p470 = pneg %p51
        %p471 = pneg %p75
        %p472 = pneg %p72
        %p473 = pneg %p96
        %p474 = pneg %p93
        %p475 = pneg %p117
        %p476 = pneg %p114
        %p477 = pneg %p138
        %p478 = pneg %p135
        %p479 = pneg %p159
        %p480 = pneg %p156
        %p481 = pneg %p180
        %p482 = pneg %p177
        %p483 = pneg %p201
        %p484 = pneg %p198
        %p485 = pneg %p222
        %p486 = pneg %p219
        %p487 = pneg %p243
        %p488 = pneg %p240
        %p489 = pneg %p269
        %p490 = pneg %p266
        %s491 = sand.u32 %s256, 1
        %s492 = scalar_lea.sflag [#allocation5], %s491
        %s493 = sand.u32 %s256, 1
        %s494 = smul.addr %s493, 2
        %s495 = scalar_lea.vmem [#allocation18], %s494
        %s496 = smul.u32 2, %s33
        %s497 = smul.u32 2, %s33
        %v499 = vld [vmem:[%s427] sm:$0xff]
        %v500 = vld [vmem:[%s427 + $0x8] sm:$0xff]
        %v501 = vld [vmem:[%s427 + $0x10] sm:$0xff]
        %v502 = vld [vmem:[%s427 + $0x18] sm:$0xff]
        %v503 = vld [vmem:[%s427 + $0x20] sm:$0xf]
        %v504 = vld [vmem:[%s427 + $0x28] sm:$0xf]
        %v505 = vpack.c.bf16 %v501, %v499
        %v506 = vpack.c.bf16 %v502, %v500
        %v507 = vld [vmem:[#allocation6] sm:$0xf]
        %v508 = vld [vmem:[#allocation6 + $0x4] sm:$0xf]
        %v509 = vld [vmem:[#allocation6 + $0x8] sm:$0xf]
        %v510 = vld [vmem:[#allocation6 + $0xc] sm:$0xf]
        %v511 = vld [vmem:[#allocation6 + $0x10] sm:$0xf]
        %v512 = vld [vmem:[#allocation6 + $0x14] sm:$0xf]
        %v513 = vld [vmem:[#allocation6 + $0x18] sm:$0xf]
        %v514 = vld [vmem:[#allocation6 + $0x1c] sm:$0xf]
        %v515 = vld [vmem:[#allocation6 + $0x20] sm:$0xf]
        %v516 = vld [vmem:[#allocation6 + $0x24] sm:$0xf]
        %v517 = vld [vmem:[#allocation6 + $0x28] sm:$0xf]
        %v518 = vld [vmem:[#allocation6 + $0x2c] sm:$0xf]
        %v519 = vld [vmem:[#allocation6 + $0x30] sm:$0xf]
        %v520 = vld [vmem:[#allocation6 + $0x34] sm:$0xf]
        %v521 = vld [vmem:[#allocation6 + $0x38] sm:$0xf]
        %v522 = vld [vmem:[#allocation6 + $0x3c] sm:$0xf]
        %v523 = vld [vmem:[#allocation6 + $0x40] sm:$0xf]
        %v524 = vld [vmem:[#allocation6 + $0x44] sm:$0xf]
        %v525 = vld [vmem:[#allocation6 + $0x48] sm:$0xf]
        %v526 = vld [vmem:[#allocation6 + $0x4c] sm:$0xf]
        %v527 = vld [vmem:[#allocation6 + $0x50] sm:$0xf]
        %v528 = vld [vmem:[#allocation6 + $0x54] sm:$0xf]
        %v529 = vld [vmem:[#allocation6 + $0x58] sm:$0xf]
        %v530 = vld [vmem:[#allocation6 + $0x5c] sm:$0xf]
        %v531 = vld [vmem:[#allocation6 + $0x60] sm:$0xf]
        %v532 = vld [vmem:[#allocation6 + $0x64] sm:$0xf]
        %v533 = vld [vmem:[#allocation6 + $0x68] sm:$0xf]
        %v534 = vld [vmem:[#allocation6 + $0x6c] sm:$0xf]
        %v535 = vld [vmem:[#allocation6 + $0x70] sm:$0xf]
        %v536 = vld [vmem:[#allocation6 + $0x74] sm:$0xf]
        %v537 = vld [vmem:[#allocation6 + $0x78] sm:$0xf]
        %v538 = vld [vmem:[#allocation6 + $0x7c] sm:$0xf]
        %v539 = vld [vmem:[#allocation8] sm:$0xff]
        %v540 = vld [vmem:[#allocation8 + $0x8] sm:$0xff]
        %v541 = vld [vmem:[#allocation8 + $0x10] sm:$0xff]
        %v542 = vld [vmem:[#allocation8 + $0x18] sm:$0xff]
        %v543 = vld [vmem:[#allocation8 + $0x20] sm:$0xff]
        %v544 = vld [vmem:[#allocation8 + $0x28] sm:$0xff]
        %v545 = vld [vmem:[#allocation8 + $0x30] sm:$0xff]
        %v546 = vld [vmem:[#allocation8 + $0x38] sm:$0xff]
        %v547 = vld [vmem:[#allocation8 + $0x40] sm:$0xff]
        %v548 = vld [vmem:[#allocation8 + $0x48] sm:$0xff]
        %v549 = vld [vmem:[#allocation8 + $0x50] sm:$0xff]
        %v550 = vld [vmem:[#allocation8 + $0x58] sm:$0xff]
        %v551 = vld [vmem:[#allocation8 + $0x60] sm:$0xff]
        %v552 = vld [vmem:[#allocation8 + $0x68] sm:$0xff]
        %v553 = vld [vmem:[#allocation8 + $0x70] sm:$0xff]
        %v554 = vld [vmem:[#allocation8 + $0x78] sm:$0xff]
        %v555 = vld [vmem:[#allocation8 + $0x80] sm:$0xff]
        %v556 = vld [vmem:[#allocation8 + $0x88] sm:$0xff]
        %v557 = vld [vmem:[#allocation8 + $0x90] sm:$0xff]
        %v558 = vld [vmem:[#allocation8 + $0x98] sm:$0xff]
        %v559 = vld [vmem:[#allocation8 + $0xa0] sm:$0xff]
        %v560 = vld [vmem:[#allocation8 + $0xa8] sm:$0xff]
        %v561 = vld [vmem:[#allocation8 + $0xb0] sm:$0xff]
        %v562 = vld [vmem:[#allocation8 + $0xb8] sm:$0xff]
        %v563 = vld [vmem:[#allocation8 + $0xc0] sm:$0xff]
        %v564 = vld [vmem:[#allocation8 + $0xc8] sm:$0xff]
        %v565 = vld [vmem:[#allocation8 + $0xd0] sm:$0xff]
        %v566 = vld [vmem:[#allocation8 + $0xd8] sm:$0xff]
        %v567 = vld [vmem:[#allocation8 + $0xe0] sm:$0xff]
        %v568 = vld [vmem:[#allocation8 + $0xe8] sm:$0xff]
        %v569 = vld [vmem:[#allocation8 + $0xf0] sm:$0xff]
        %v570 = vld [vmem:[#allocation8 + $0xf8] sm:$0xff]
        %572 = vset.pattern.permute.xlu0 0
        %573 = vperm.xlu0 %572, %v539
        %v574 = vpop.permute.xlu0 %573
        %577 = vset.pattern.permute.xlu0 0
        %578 = vperm.xlu0 %577, %v540
        %v579 = vpop.permute.xlu0 %578
        %582 = vset.pattern.permute.xlu0 0
        %583 = vperm.xlu0 %582, %v541
        %v584 = vpop.permute.xlu0 %583
        %587 = vset.pattern.permute.xlu0 0
        %588 = vperm.xlu0 %587, %v542
        %v589 = vpop.permute.xlu0 %588
        %592 = vset.pattern.permute.xlu0 0
        %593 = vperm.xlu0 %592, %v543
        %v594 = vpop.permute.xlu0 %593
        %597 = vset.pattern.permute.xlu0 0
        %598 = vperm.xlu0 %597, %v544
        %v599 = vpop.permute.xlu0 %598
        %602 = vset.pattern.permute.xlu0 0
        %603 = vperm.xlu0 %602, %v545
        %v604 = vpop.permute.xlu0 %603
        %607 = vset.pattern.permute.xlu0 0
        %608 = vperm.xlu0 %607, %v546
        %v609 = vpop.permute.xlu0 %608
        %612 = vset.pattern.permute.xlu0 0
        %613 = vperm.xlu0 %612, %v547
        %v614 = vpop.permute.xlu0 %613
        %617 = vset.pattern.permute.xlu0 0
        %618 = vperm.xlu0 %617, %v548
        %v619 = vpop.permute.xlu0 %618
        %622 = vset.pattern.permute.xlu0 0
        %623 = vperm.xlu0 %622, %v549
        %v624 = vpop.permute.xlu0 %623
        %627 = vset.pattern.permute.xlu0 0
        %628 = vperm.xlu0 %627, %v550
        %v629 = vpop.permute.xlu0 %628
        %632 = vset.pattern.permute.xlu0 0
        %633 = vperm.xlu0 %632, %v551
        %v634 = vpop.permute.xlu0 %633
        %637 = vset.pattern.permute.xlu0 0
        %638 = vperm.xlu0 %637, %v552
        %v639 = vpop.permute.xlu0 %638
        %642 = vset.pattern.permute.xlu0 0
        %643 = vperm.xlu0 %642, %v553
        %v644 = vpop.permute.xlu0 %643
        %647 = vset.pattern.permute.xlu0 0
        %648 = vperm.xlu0 %647, %v554
        %v649 = vpop.permute.xlu0 %648
        %652 = vset.pattern.permute.xlu0 0
        %653 = vperm.xlu0 %652, %v555
        %v654 = vpop.permute.xlu0 %653
        %657 = vset.pattern.permute.xlu0 0
        %658 = vperm.xlu0 %657, %v556
        %v659 = vpop.permute.xlu0 %658
        %662 = vset.pattern.permute.xlu0 0
        %663 = vperm.xlu0 %662, %v557
        %v664 = vpop.permute.xlu0 %663
        %667 = vset.pattern.permute.xlu0 0
        %668 = vperm.xlu0 %667, %v558
        %v669 = vpop.permute.xlu0 %668
        %672 = vset.pattern.permute.xlu0 0
        %673 = vperm.xlu0 %672, %v559
        %v674 = vpop.permute.xlu0 %673
        %677 = vset.pattern.permute.xlu0 0
        %678 = vperm.xlu0 %677, %v560
        %v679 = vpop.permute.xlu0 %678
        %682 = vset.pattern.permute.xlu0 0
        %683 = vperm.xlu0 %682, %v561
        %v684 = vpop.permute.xlu0 %683
        %687 = vset.pattern.permute.xlu0 0
        %688 = vperm.xlu0 %687, %v562
        %v689 = vpop.permute.xlu0 %688
        %692 = vset.pattern.permute.xlu0 0
        %693 = vperm.xlu0 %692, %v563
        %v694 = vpop.permute.xlu0 %693
        %697 = vset.pattern.permute.xlu0 0
        %698 = vperm.xlu0 %697, %v564
        %v699 = vpop.permute.xlu0 %698
        %702 = vset.pattern.permute.xlu0 0
        %703 = vperm.xlu0 %702, %v565
        %v704 = vpop.permute.xlu0 %703
        %707 = vset.pattern.permute.xlu0 0
        %708 = vperm.xlu0 %707, %v566
        %v709 = vpop.permute.xlu0 %708
        %712 = vset.pattern.permute.xlu0 0
        %713 = vperm.xlu0 %712, %v567
        %v714 = vpop.permute.xlu0 %713
        %717 = vset.pattern.permute.xlu0 0
        %718 = vperm.xlu0 %717, %v568
        %v719 = vpop.permute.xlu0 %718
        %722 = vset.pattern.permute.xlu0 0
        %723 = vperm.xlu0 %722, %v569
        %v724 = vpop.permute.xlu0 %723
        %727 = vset.pattern.permute.xlu0 0
        %728 = vperm.xlu0 %727, %v570
        %v729 = vpop.permute.xlu0 %728
        %v763 = vunpack.c.l.b16 %v507
        %v764 = vunpack.c.l.b16 %v508
        %v765 = vunpack.c.l.b16 %v509
        %v766 = vunpack.c.l.b16 %v510
        %v767 = vunpack.c.l.b16 %v511
        %v768 = vunpack.c.l.b16 %v512
        %v769 = vunpack.c.l.b16 %v513
        %v770 = vunpack.c.l.b16 %v514
        %v771 = vunpack.c.l.b16 %v515
        %v772 = vunpack.c.l.b16 %v516
        %v773 = vunpack.c.l.b16 %v517
        %v774 = vunpack.c.l.b16 %v518
        %v775 = vunpack.c.l.b16 %v519
        %v776 = vunpack.c.l.b16 %v520
        %v777 = vunpack.c.l.b16 %v521
        %v778 = vunpack.c.l.b16 %v522
        %v779 = vunpack.c.l.b16 %v523
        %v780 = vunpack.c.l.b16 %v524
        %v781 = vunpack.c.l.b16 %v525
        %v782 = vunpack.c.l.b16 %v526
        %v783 = vunpack.c.l.b16 %v527
        %v784 = vunpack.c.l.b16 %v528
        %v785 = vunpack.c.l.b16 %v529
        %v786 = vunpack.c.l.b16 %v530
        %v787 = vunpack.c.l.b16 %v531
        %v788 = vunpack.c.l.b16 %v532
        %v789 = vunpack.c.l.b16 %v533
        %v790 = vunpack.c.l.b16 %v534
        %v791 = vunpack.c.l.b16 %v535
        %v792 = vunpack.c.l.b16 %v536
        %v793 = vunpack.c.l.b16 %v537
        %v794 = vunpack.c.l.b16 %v538
        %v795 = vpack.c.b16 %v764, %v763
        %v796 = vpack.c.b16 %v766, %v765
        %v797 = vpack.c.b16 %v768, %v767
        %v798 = vpack.c.b16 %v770, %v769
        %v799 = vpack.c.b16 %v772, %v771
        %v800 = vpack.c.b16 %v774, %v773
        %v801 = vpack.c.b16 %v776, %v775
        %v802 = vpack.c.b16 %v778, %v777
        %v803 = vpack.c.b16 %v780, %v779
        %v804 = vpack.c.b16 %v782, %v781
        %v805 = vpack.c.b16 %v784, %v783
        %v806 = vpack.c.b16 %v786, %v785
        %v807 = vpack.c.b16 %v788, %v787
        %v808 = vpack.c.b16 %v790, %v789
        %v809 = vpack.c.b16 %v792, %v791
        %v810 = vpack.c.b16 %v794, %v793
        %vm811 = vcmask 130048
        %v813 = vsel %vm811, %v795, 0
        %v816 = vsel %vm811, %v796, 0
        %v819 = vsel %vm811, %v797, 0
        %v822 = vsel %vm811, %v798, 0
        %v825 = vsel %vm811, %v799, 0
        %v828 = vsel %vm811, %v800, 0
        %v831 = vsel %vm811, %v801, 0
        %v834 = vsel %vm811, %v802, 0
        %v837 = vsel %vm811, %v803, 0
        %v840 = vsel %vm811, %v804, 0
        %v843 = vsel %vm811, %v805, 0
        %v846 = vsel %vm811, %v806, 0
        %v849 = vsel %vm811, %v807, 0
        %v852 = vsel %vm811, %v808, 0
        %v855 = vsel %vm811, %v809, 0
        %v858 = vsel %vm811, %v810, 0
        %860 = vmatprep.subr.bf16.mxu0 %v506
        %861 = vmatpush1.bf16.msra.mxu0 %v505
        %862 = vmatprep.subr.bf16.mxu0 0
        %863 = vmatpush1.bf16.msra.mxu0 0
        %864 = vmatprep.subr.bf16.mxu0 0
        %865 = vmatpush1.bf16.msra.mxu0 0
        %866 = vmatprep.subr.bf16.mxu0 0
        %867 = vmatpush1.bf16.msra.mxu0 0
        %868 = vmatprep.subr.bf16.mxu0 0
        %869 = vmatpush1.bf16.msra.mxu0 0
        %870 = vmatprep.subr.bf16.mxu0 0
        %871 = vmatpush1.bf16.msra.mxu0 0
        %872 = vmatprep.subr.bf16.mxu0 0
        %873 = vmatpush1.bf16.msra.mxu0 0
        %874 = vmatprep.subr.bf16.mxu0 0
        %875 = vmatpush1.bf16.msra.mxu0 0
        %876 = vmatprep.subr.bf16.mxu0 0
        %877 = vmatpush1.bf16.msra.mxu0 0
        %878 = vmatprep.subr.bf16.mxu0 0
        %879 = vmatpush1.bf16.msra.mxu0 0
        %880 = vmatprep.subr.bf16.mxu0 0
        %881 = vmatpush1.bf16.msra.mxu0 0
        %882 = vmatprep.subr.bf16.mxu0 0
        %883 = vmatpush1.bf16.msra.mxu0 0
        %884 = vmatprep.subr.bf16.mxu0 0
        %885 = vmatpush1.bf16.msra.mxu0 0
        %886 = vmatprep.subr.bf16.mxu0 0
        %887 = vmatpush1.bf16.msra.mxu0 0
        %888 = vmatprep.subr.bf16.mxu0 0
        %889 = vmatpush1.bf16.msra.mxu0 0
        %890 = vmatprep.subr.bf16.mxu0 0
        %891 = vmatpush1.bf16.msra.mxu0 0
        %892 = vmatprep.mubr.bf16.mxu0 0
        %893 = vmatmul.mubr.bf16.gmra.mrb[0].mxu0 %v813
        %v894 = vpop.f32.mrb[0].mxu0
        %v895 = vadd.f32 %v574, %v894
        %v896 = vpop.f32.mrb[0].mxu0
        %v897 = vadd.f32 %v574, %v896
        %v898 = vpop.f32.mrb[0].mxu0
        %v899 = vadd.f32 %v579, %v898
        %v900 = vpop.f32.mrb[0].mxu0
        %v901 = vadd.f32 %v579, %v900
        %902 = vmatprep.mubr.bf16.mxu0 0
        %903 = vmatmul.mubr.bf16.gmra.mrb[0].mxu0 %v816
        %v904 = vpop.f32.mrb[0].mxu0
        %v905 = vadd.f32 %v584, %v904
        %v906 = vpop.f32.mrb[0].mxu0
        %v907 = vadd.f32 %v584, %v906
        %v908 = vpop.f32.mrb[0].mxu0
        %v909 = vadd.f32 %v589, %v908
        %v910 = vpop.f32.mrb[0].mxu0
        %v911 = vadd.f32 %v589, %v910
        %912 = vmatprep.mubr.bf16.mxu0 0
        %913 = vmatmul.mubr.bf16.gmra.mrb[0].mxu0 %v819
        %v914 = vpop.f32.mrb[0].mxu0
        %v915 = vadd.f32 %v594, %v914
        %v916 = vpop.f32.mrb[0].mxu0
        %v917 = vadd.f32 %v594, %v916
        %v918 = vpop.f32.mrb[0].mxu0
        %v919 = vadd.f32 %v599, %v918
        %v920 = vpop.f32.mrb[0].mxu0
        %v921 = vadd.f32 %v599, %v920
        %922 = vmatprep.mubr.bf16.mxu0 0
        %923 = vmatmul.mubr.bf16.gmra.mrb[0].mxu0 %v822
        %v924 = vpop.f32.mrb[0].mxu0
        %v925 = vadd.f32 %v604, %v924
        %v926 = vpop.f32.mrb[0].mxu0
        %v927 = vadd.f32 %v604, %v926
        %v928 = vpop.f32.mrb[0].mxu0
        %v929 = vadd.f32 %v609, %v928
        %v930 = vpop.f32.mrb[0].mxu0
        %v931 = vadd.f32 %v609, %v930
        %932 = vmatprep.mubr.bf16.mxu0 0
        %933 = vmatmul.mubr.bf16.gmra.mrb[0].mxu0 %v825
        %v934 = vpop.f32.mrb[0].mxu0
        %v935 = vadd.f32 %v614, %v934
        %v936 = vpop.f32.mrb[0].mxu0
        %v937 = vadd.f32 %v614, %v936
        %v938 = vpop.f32.mrb[0].mxu0
        %v939 = vadd.f32 %v619, %v938
        %v940 = vpop.f32.mrb[0].mxu0
        %v941 = vadd.f32 %v619, %v940
        %942 = vmatprep.mubr.bf16.mxu0 0
        %943 = vmatmul.mubr.bf16.gmra.mrb[0].mxu0 %v828
        %v944 = vpop.f32.mrb[0].mxu0
        %v945 = vadd.f32 %v624, %v944
        %v946 = vpop.f32.mrb[0].mxu0
        %v947 = vadd.f32 %v624, %v946
        %v948 = vpop.f32.mrb[0].mxu0
        %v949 = vadd.f32 %v629, %v948
        %v950 = vpop.f32.mrb[0].mxu0
        %v951 = vadd.f32 %v629, %v950
        %952 = vmatprep.mubr.bf16.mxu0 0
        %953 = vmatmul.mubr.bf16.gmra.mrb[0].mxu0 %v831
        %v954 = vpop.f32.mrb[0].mxu0
        %v955 = vadd.f32 %v634, %v954
        %v956 = vpop.f32.mrb[0].mxu0
        %v957 = vadd.f32 %v634, %v956
        %v958 = vpop.f32.mrb[0].mxu0
        %v959 = vadd.f32 %v639, %v958
        %v960 = vpop.f32.mrb[0].mxu0
        %v961 = vadd.f32 %v639, %v960
        %962 = vmatprep.mubr.bf16.mxu0 0
        %963 = vmatmul.mubr.bf16.gmra.mrb[0].mxu0 %v834
        %v964 = vpop.f32.mrb[0].mxu0
        %v965 = vadd.f32 %v644, %v964
        %v966 = vpop.f32.mrb[0].mxu0
        %v967 = vadd.f32 %v644, %v966
        %v968 = vpop.f32.mrb[0].mxu0
        %v969 = vadd.f32 %v649, %v968
        %v970 = vpop.f32.mrb[0].mxu0
        %v971 = vadd.f32 %v649, %v970
        %972 = vmatprep.mubr.bf16.mxu0 0
        %973 = vmatmul.mubr.bf16.gmra.mrb[0].mxu0 %v837
        %v974 = vpop.f32.mrb[0].mxu0
        %v975 = vadd.f32 %v654, %v974
        %v976 = vpop.f32.mrb[0].mxu0
        %v977 = vadd.f32 %v654, %v976
        %v978 = vpop.f32.mrb[0].mxu0
        %v979 = vadd.f32 %v659, %v978
        %v980 = vpop.f32.mrb[0].mxu0
        %v981 = vadd.f32 %v659, %v980
        %982 = vmatprep.mubr.bf16.mxu0 0
        %983 = vmatmul.mubr.bf16.gmra.mrb[0].mxu0 %v840
        %v984 = vpop.f32.mrb[0].mxu0
        %v985 = vadd.f32 %v664, %v984
        %v986 = vpop.f32.mrb[0].mxu0
        %v987 = vadd.f32 %v664, %v986
        %v988 = vpop.f32.mrb[0].mxu0
        %v989 = vadd.f32 %v669, %v988
        %v990 = vpop.f32.mrb[0].mxu0
        %v991 = vadd.f32 %v669, %v990
        %992 = vmatprep.mubr.bf16.mxu0 0
        %993 = vmatmul.mubr.bf16.gmra.mrb[0].mxu0 %v843
        %v994 = vpop.f32.mrb[0].mxu0
        %v995 = vadd.f32 %v674, %v994
        %v996 = vpop.f32.mrb[0].mxu0
        %v997 = vadd.f32 %v674, %v996
        %v998 = vpop.f32.mrb[0].mxu0
        %v999 = vadd.f32 %v679, %v998
        %v1000 = vpop.f32.mrb[0].mxu0
        %v1001 = vadd.f32 %v679, %v1000
        %1002 = vmatprep.mubr.bf16.mxu0 0
        %1003 = vmatmul.mubr.bf16.gmra.mrb[0].mxu0 %v846
        %v1004 = vpop.f32.mrb[0].mxu0
        %v1005 = vadd.f32 %v684, %v1004
        %v1006 = vpop.f32.mrb[0].mxu0
        %v1007 = vadd.f32 %v684, %v1006
        %v1008 = vpop.f32.mrb[0].mxu0
        %v1009 = vadd.f32 %v689, %v1008
        %v1010 = vpop.f32.mrb[0].mxu0
        %v1011 = vadd.f32 %v689, %v1010
        %1012 = vmatprep.mubr.bf16.mxu0 0
        %1013 = vmatmul.mubr.bf16.gmra.mrb[0].mxu0 %v849
        %v1014 = vpop.f32.mrb[0].mxu0
        %v1015 = vadd.f32 %v694, %v1014
        %v1016 = vpop.f32.mrb[0].mxu0
        %v1017 = vadd.f32 %v694, %v1016
        %v1018 = vpop.f32.mrb[0].mxu0
        %v1019 = vadd.f32 %v699, %v1018
        %v1020 = vpop.f32.mrb[0].mxu0
        %v1021 = vadd.f32 %v699, %v1020
        %1022 = vmatprep.mubr.bf16.mxu0 0
        %1023 = vmatmul.mubr.bf16.gmra.mrb[0].mxu0 %v852
        %v1024 = vpop.f32.mrb[0].mxu0
        %v1025 = vadd.f32 %v704, %v1024
        %v1026 = vpop.f32.mrb[0].mxu0
        %v1027 = vadd.f32 %v704, %v1026
        %v1028 = vpop.f32.mrb[0].mxu0
        %v1029 = vadd.f32 %v709, %v1028
        %v1030 = vpop.f32.mrb[0].mxu0
        %v1031 = vadd.f32 %v709, %v1030
        %1032 = vmatprep.mubr.bf16.mxu0 0
        %1033 = vmatmul.mubr.bf16.gmra.mrb[0].mxu0 %v855
        %v1034 = vpop.f32.mrb[0].mxu0
        %v1035 = vadd.f32 %v714, %v1034
        %v1036 = vpop.f32.mrb[0].mxu0
        %v1037 = vadd.f32 %v714, %v1036
        %v1038 = vpop.f32.mrb[0].mxu0
        %v1039 = vadd.f32 %v719, %v1038
        %v1040 = vpop.f32.mrb[0].mxu0
        %v1041 = vadd.f32 %v719, %v1040
        %1042 = vmatprep.mubr.bf16.mxu0 0
        %1043 = vmatmul.mubr.bf16.gmra.mrb[0].mxu0 %v858
        %v1044 = vpop.f32.mrb[0].mxu0
        %v1045 = vadd.f32 %v724, %v1044
        %v1046 = vpop.f32.mrb[0].mxu0
        %v1047 = vadd.f32 %v724, %v1046
        %v1048 = vpop.f32.mrb[0].mxu0
        %v1049 = vadd.f32 %v729, %v1048
        %v1050 = vpop.f32.mrb[0].mxu0
        %v1051 = vadd.f32 %v729, %v1050
        %1052 = vdwg.mxu0
        %v1053 = vmul.f32 %v895, 0.01
        %v1054 = vmul.f32 %v897, 0.01
        %v1055 = vmul.f32 %v899, 0.01
        %v1056 = vmul.f32 %v901, 0.01
        %v1057 = vmul.f32 %v905, 0.01
        %v1058 = vmul.f32 %v907, 0.01
        %v1059 = vmul.f32 %v909, 0.01
        %v1060 = vmul.f32 %v911, 0.01
        %v1061 = vmul.f32 %v915, 0.01
        %v1062 = vmul.f32 %v917, 0.01
        %v1063 = vmul.f32 %v919, 0.01
        %v1064 = vmul.f32 %v921, 0.01
        %v1065 = vmul.f32 %v925, 0.01
        %v1066 = vmul.f32 %v927, 0.01
        %v1067 = vmul.f32 %v929, 0.01
        %v1068 = vmul.f32 %v931, 0.01
        %v1069 = vmul.f32 %v935, 0.01
        %v1070 = vmul.f32 %v937, 0.01
        %v1071 = vmul.f32 %v939, 0.01
        %v1072 = vmul.f32 %v941, 0.01
        %v1073 = vmul.f32 %v945, 0.01
        %v1074 = vmul.f32 %v947, 0.01
        %v1075 = vmul.f32 %v949, 0.01
        %v1076 = vmul.f32 %v951, 0.01
        %v1077 = vmul.f32 %v955, 0.01
        %v1078 = vmul.f32 %v957, 0.01
        %v1079 = vmul.f32 %v959, 0.01
        %v1080 = vmul.f32 %v961, 0.01
        %v1081 = vmul.f32 %v965, 0.01
        %v1082 = vmul.f32 %v967, 0.01
        %v1083 = vmul.f32 %v969, 0.01
        %v1084 = vmul.f32 %v971, 0.01
        %v1085 = vmul.f32 %v975, 0.01
        %v1086 = vmul.f32 %v977, 0.01
        %v1087 = vmul.f32 %v979, 0.01
        %v1088 = vmul.f32 %v981, 0.01
        %v1089 = vmul.f32 %v985, 0.01
        %v1090 = vmul.f32 %v987, 0.01
        %v1091 = vmul.f32 %v989, 0.01
        %v1092 = vmul.f32 %v991, 0.01
        %v1093 = vmul.f32 %v995, 0.01
        %v1094 = vmul.f32 %v997, 0.01
        %v1095 = vmul.f32 %v999, 0.01
        %v1096 = vmul.f32 %v1001, 0.01
        %v1097 = vmul.f32 %v1005, 0.01
        %v1098 = vmul.f32 %v1007, 0.01
        %v1099 = vmul.f32 %v1009, 0.01
        %v1100 = vmul.f32 %v1011, 0.01
        %v1101 = vmul.f32 %v1015, 0.01
        %v1102 = vmul.f32 %v1017, 0.01
        %v1103 = vmul.f32 %v1019, 0.01
        %v1104 = vmul.f32 %v1021, 0.01
        %v1105 = vmul.f32 %v1025, 0.01
        %v1106 = vmul.f32 %v1027, 0.01
        %v1107 = vmul.f32 %v1029, 0.01
        %v1108 = vmul.f32 %v1031, 0.01
        %v1109 = vmul.f32 %v1035, 0.01
        %v1110 = vmul.f32 %v1037, 0.01
        %v1111 = vmul.f32 %v1039, 0.01
        %v1112 = vmul.f32 %v1041, 0.01
        %v1113 = vmul.f32 %v1045, 0.01
        %v1114 = vmul.f32 %v1047, 0.01
        %v1115 = vmul.f32 %v1049, 0.01
        %v1116 = vmul.f32 %v1051, 0.01
        %v1117 = vmax.f32 %v895, %v1053
        %v1118 = vmax.f32 %v897, %v1054
        %v1119 = vmax.f32 %v899, %v1055
        %v1120 = vmax.f32 %v901, %v1056
        %v1121 = vmax.f32 %v905, %v1057
        %v1122 = vmax.f32 %v907, %v1058
        %v1123 = vmax.f32 %v909, %v1059
        %v1124 = vmax.f32 %v911, %v1060
        %v1125 = vmax.f32 %v915, %v1061
        %v1126 = vmax.f32 %v917, %v1062
        %v1127 = vmax.f32 %v919, %v1063
        %v1128 = vmax.f32 %v921, %v1064
        %v1129 = vmax.f32 %v925, %v1065
        %v1130 = vmax.f32 %v927, %v1066
        %v1131 = vmax.f32 %v929, %v1067
        %v1132 = vmax.f32 %v931, %v1068
        %v1133 = vmax.f32 %v935, %v1069
        %v1134 = vmax.f32 %v937, %v1070
        %v1135 = vmax.f32 %v939, %v1071
        %v1136 = vmax.f32 %v941, %v1072
        %v1137 = vmax.f32 %v945, %v1073
        %v1138 = vmax.f32 %v947, %v1074
        %v1139 = vmax.f32 %v949, %v1075
        %v1140 = vmax.f32 %v951, %v1076
        %v1141 = vmax.f32 %v955, %v1077
        %v1142 = vmax.f32 %v957, %v1078
        %v1143 = vmax.f32 %v959, %v1079
        %v1144 = vmax.f32 %v961, %v1080
        %v1145 = vmax.f32 %v965, %v1081
        %v1146 = vmax.f32 %v967, %v1082
        %v1147 = vmax.f32 %v969, %v1083
        %v1148 = vmax.f32 %v971, %v1084
        %v1149 = vmax.f32 %v975, %v1085
        %v1150 = vmax.f32 %v977, %v1086
        %v1151 = vmax.f32 %v979, %v1087
        %v1152 = vmax.f32 %v981, %v1088
        %v1153 = vmax.f32 %v985, %v1089
        %v1154 = vmax.f32 %v987, %v1090
        %v1155 = vmax.f32 %v989, %v1091
        %v1156 = vmax.f32 %v991, %v1092
        %v1157 = vmax.f32 %v995, %v1093
        %v1158 = vmax.f32 %v997, %v1094
        %v1159 = vmax.f32 %v999, %v1095
        %v1160 = vmax.f32 %v1001, %v1096
        %v1161 = vmax.f32 %v1005, %v1097
        %v1162 = vmax.f32 %v1007, %v1098
        %v1163 = vmax.f32 %v1009, %v1099
        %v1164 = vmax.f32 %v1011, %v1100
        %v1165 = vmax.f32 %v1015, %v1101
        %v1166 = vmax.f32 %v1017, %v1102
        %v1167 = vmax.f32 %v1019, %v1103
        %v1168 = vmax.f32 %v1021, %v1104
        %v1169 = vmax.f32 %v1025, %v1105
        %v1170 = vmax.f32 %v1027, %v1106
        %v1171 = vmax.f32 %v1029, %v1107
        %v1172 = vmax.f32 %v1031, %v1108
        %v1173 = vmax.f32 %v1035, %v1109
        %v1174 = vmax.f32 %v1037, %v1110
        %v1175 = vmax.f32 %v1039, %v1111
        %v1176 = vmax.f32 %v1041, %v1112
        %v1177 = vmax.f32 %v1045, %v1113
        %v1178 = vmax.f32 %v1047, %v1114
        %v1179 = vmax.f32 %v1049, %v1115
        %v1180 = vmax.f32 %v1051, %v1116
        %v1181 = vld [vmem:[#allocation9] sm:$0xff]
        %v1182 = vld [vmem:[#allocation9 + $0x8] sm:$0xff]
        %v1183 = vld [vmem:[#allocation9 + $0x10] sm:$0xff]
        %v1184 = vld [vmem:[#allocation9 + $0x18] sm:$0xff]
        %v1185 = vld [vmem:[#allocation9 + $0x20] sm:$0xff]
        %v1186 = vld [vmem:[#allocation9 + $0x28] sm:$0xff]
        %v1187 = vld [vmem:[#allocation9 + $0x30] sm:$0xff]
        %v1188 = vld [vmem:[#allocation9 + $0x38] sm:$0xff]
        %v1189 = vld [vmem:[#allocation9 + $0x40] sm:$0xff]
        %v1190 = vld [vmem:[#allocation9 + $0x48] sm:$0xff]
        %v1191 = vld [vmem:[#allocation9 + $0x50] sm:$0xff]
        %v1192 = vld [vmem:[#allocation9 + $0x58] sm:$0xff]
        %v1193 = vld [vmem:[#allocation9 + $0x60] sm:$0xff]
        %v1194 = vld [vmem:[#allocation9 + $0x68] sm:$0xff]
        %v1195 = vld [vmem:[#allocation9 + $0x70] sm:$0xff]
        %v1196 = vld [vmem:[#allocation9 + $0x78] sm:$0xff]
        %v1197 = vld [vmem:[#allocation9 + $0x80] sm:$0xff]
        %v1198 = vld [vmem:[#allocation9 + $0x88] sm:$0xff]
        %v1199 = vld [vmem:[#allocation9 + $0x90] sm:$0xff]
        %v1200 = vld [vmem:[#allocation9 + $0x98] sm:$0xff]
        %v1201 = vld [vmem:[#allocation9 + $0xa0] sm:$0xff]
        %v1202 = vld [vmem:[#allocation9 + $0xa8] sm:$0xff]
        %v1203 = vld [vmem:[#allocation9 + $0xb0] sm:$0xff]
        %v1204 = vld [vmem:[#allocation9 + $0xb8] sm:$0xff]
        %v1205 = vld [vmem:[#allocation9 + $0xc0] sm:$0xff]
        %v1206 = vld [vmem:[#allocation9 + $0xc8] sm:$0xff]
        %v1207 = vld [vmem:[#allocation9 + $0xd0] sm:$0xff]
        %v1208 = vld [vmem:[#allocation9 + $0xd8] sm:$0xff]
        %v1209 = vld [vmem:[#allocation9 + $0xe0] sm:$0xff]
        %v1210 = vld [vmem:[#allocation9 + $0xe8] sm:$0xff]
        %v1211 = vld [vmem:[#allocation9 + $0xf0] sm:$0xff]
        %v1212 = vld [vmem:[#allocation9 + $0xf8] sm:$0xff]
        %v1213 = vpack.c.bf16 %v1119, %v1117
        %v1214 = vpack.c.bf16 %v1120, %v1118
        %v1215 = vpack.c.bf16 %v1123, %v1121
        %v1216 = vpack.c.bf16 %v1124, %v1122
        %v1217 = vpack.c.bf16 %v1127, %v1125
        %v1218 = vpack.c.bf16 %v1128, %v1126
        %v1219 = vpack.c.bf16 %v1131, %v1129
        %v1220 = vpack.c.bf16 %v1132, %v1130
        %v1221 = vpack.c.bf16 %v1135, %v1133
        %v1222 = vpack.c.bf16 %v1136, %v1134
        %v1223 = vpack.c.bf16 %v1139, %v1137
        %v1224 = vpack.c.bf16 %v1140, %v1138
        %v1225 = vpack.c.bf16 %v1143, %v1141
        %v1226 = vpack.c.bf16 %v1144, %v1142
        %v1227 = vpack.c.bf16 %v1147, %v1145
        %v1228 = vpack.c.bf16 %v1148, %v1146
        %v1229 = vpack.c.bf16 %v1151, %v1149
        %v1230 = vpack.c.bf16 %v1152, %v1150
        %v1231 = vpack.c.bf16 %v1155, %v1153
        %v1232 = vpack.c.bf16 %v1156, %v1154
        %v1233 = vpack.c.bf16 %v1159, %v1157
        %v1234 = vpack.c.bf16 %v1160, %v1158
        %v1235 = vpack.c.bf16 %v1163, %v1161
        %v1236 = vpack.c.bf16 %v1164, %v1162
        %v1237 = vpack.c.bf16 %v1167, %v1165
        %v1238 = vpack.c.bf16 %v1168, %v1166
        %v1239 = vpack.c.bf16 %v1171, %v1169
        %v1240 = vpack.c.bf16 %v1172, %v1170
        %v1241 = vpack.c.bf16 %v1175, %v1173
        %v1242 = vpack.c.bf16 %v1176, %v1174
        %v1243 = vpack.c.bf16 %v1179, %v1177
        %v1244 = vpack.c.bf16 %v1180, %v1178
        %v1245 = vld [vmem:[#allocation11] sm:$0xff]
        %v1246 = vld [vmem:[#allocation11 + $0x8] sm:$0xff]
        %v1247 = vld [vmem:[#allocation11 + $0x10] sm:$0xff]
        %v1248 = vld [vmem:[#allocation11 + $0x18] sm:$0xff]
        %v1249 = vld [vmem:[#allocation11 + $0x20] sm:$0xff]
        %v1250 = vld [vmem:[#allocation11 + $0x28] sm:$0xff]
        %v1251 = vld [vmem:[#allocation11 + $0x30] sm:$0xff]
        %v1252 = vld [vmem:[#allocation11 + $0x38] sm:$0xff]
        %v1253 = vld [vmem:[#allocation11 + $0x40] sm:$0xff]
        %v1254 = vld [vmem:[#allocation11 + $0x48] sm:$0xff]
        %v1255 = vld [vmem:[#allocation11 + $0x50] sm:$0xff]
        %v1256 = vld [vmem:[#allocation11 + $0x58] sm:$0xff]
        %v1257 = vld [vmem:[#allocation11 + $0x60] sm:$0xff]
        %v1258 = vld [vmem:[#allocation11 + $0x68] sm:$0xff]
        %v1259 = vld [vmem:[#allocation11 + $0x70] sm:$0xff]
        %v1260 = vld [vmem:[#allocation11 + $0x78] sm:$0xff]
        %v1261 = vld [vmem:[#allocation11 + $0x80] sm:$0xff]
        %v1262 = vld [vmem:[#allocation11 + $0x88] sm:$0xff]
        %v1263 = vld [vmem:[#allocation11 + $0x90] sm:$0xff]
        %v1264 = vld [vmem:[#allocation11 + $0x98] sm:$0xff]
        %v1265 = vld [vmem:[#allocation11 + $0xa0] sm:$0xff]
        %v1266 = vld [vmem:[#allocation11 + $0xa8] sm:$0xff]
        %v1267 = vld [vmem:[#allocation11 + $0xb0] sm:$0xff]
        %v1268 = vld [vmem:[#allocation11 + $0xb8] sm:$0xff]
        %v1269 = vld [vmem:[#allocation11 + $0xc0] sm:$0xff]
        %v1270 = vld [vmem:[#allocation11 + $0xc8] sm:$0xff]
        %v1271 = vld [vmem:[#allocation11 + $0xd0] sm:$0xff]
        %v1272 = vld [vmem:[#allocation11 + $0xd8] sm:$0xff]
        %v1273 = vld [vmem:[#allocation11 + $0xe0] sm:$0xff]
        %v1274 = vld [vmem:[#allocation11 + $0xe8] sm:$0xff]
        %v1275 = vld [vmem:[#allocation11 + $0xf0] sm:$0xff]
        %v1276 = vld [vmem:[#allocation11 + $0xf8] sm:$0xff]
        %1278 = vset.pattern.permute.xlu0 0
        %1279 = vperm.xlu0 %1278, %v1245
        %v1280 = vpop.permute.xlu0 %1279
        %1283 = vset.pattern.permute.xlu0 0
        %1284 = vperm.xlu0 %1283, %v1246
        %v1285 = vpop.permute.xlu0 %1284
        %1288 = vset.pattern.permute.xlu0 0
        %1289 = vperm.xlu0 %1288, %v1247
        %v1290 = vpop.permute.xlu0 %1289
        %1293 = vset.pattern.permute.xlu0 0
        %1294 = vperm.xlu0 %1293, %v1248
        %v1295 = vpop.permute.xlu0 %1294
        %1298 = vset.pattern.permute.xlu0 0
        %1299 = vperm.xlu0 %1298, %v1249
        %v1300 = vpop.permute.xlu0 %1299
        %1303 = vset.pattern.permute.xlu0 0
        %1304 = vperm.xlu0 %1303, %v1250
        %v1305 = vpop.permute.xlu0 %1304
        %1308 = vset.pattern.permute.xlu0 0
        %1309 = vperm.xlu0 %1308, %v1251
        %v1310 = vpop.permute.xlu0 %1309
        %1313 = vset.pattern.permute.xlu0 0
        %1314 = vperm.xlu0 %1313, %v1252
        %v1315 = vpop.permute.xlu0 %1314
        %1318 = vset.pattern.permute.xlu0 0
        %1319 = vperm.xlu0 %1318, %v1253
        %v1320 = vpop.permute.xlu0 %1319
        %1323 = vset.pattern.permute.xlu0 0
        %1324 = vperm.xlu0 %1323, %v1254
        %v1325 = vpop.permute.xlu0 %1324
        %1328 = vset.pattern.permute.xlu0 0
        %1329 = vperm.xlu0 %1328, %v1255
        %v1330 = vpop.permute.xlu0 %1329
        %1333 = vset.pattern.permute.xlu0 0
        %1334 = vperm.xlu0 %1333, %v1256
        %v1335 = vpop.permute.xlu0 %1334
        %1338 = vset.pattern.permute.xlu0 0
        %1339 = vperm.xlu0 %1338, %v1257
        %v1340 = vpop.permute.xlu0 %1339
        %1343 = vset.pattern.permute.xlu0 0
        %1344 = vperm.xlu0 %1343, %v1258
        %v1345 = vpop.permute.xlu0 %1344
        %1348 = vset.pattern.permute.xlu0 0
        %1349 = vperm.xlu0 %1348, %v1259
        %v1350 = vpop.permute.xlu0 %1349
        %1353 = vset.pattern.permute.xlu0 0
        %1354 = vperm.xlu0 %1353, %v1260
        %v1355 = vpop.permute.xlu0 %1354
        %1358 = vset.pattern.permute.xlu0 0
        %1359 = vperm.xlu0 %1358, %v1261
        %v1360 = vpop.permute.xlu0 %1359
        %1363 = vset.pattern.permute.xlu0 0
        %1364 = vperm.xlu0 %1363, %v1262
        %v1365 = vpop.permute.xlu0 %1364
        %1368 = vset.pattern.permute.xlu0 0
        %1369 = vperm.xlu0 %1368, %v1263
        %v1370 = vpop.permute.xlu0 %1369
        %1373 = vset.pattern.permute.xlu0 0
        %1374 = vperm.xlu0 %1373, %v1264
        %v1375 = vpop.permute.xlu0 %1374
        %1378 = vset.pattern.permute.xlu0 0
        %1379 = vperm.xlu0 %1378, %v1265
        %v1380 = vpop.permute.xlu0 %1379
        %1383 = vset.pattern.permute.xlu0 0
        %1384 = vperm.xlu0 %1383, %v1266
        %v1385 = vpop.permute.xlu0 %1384
        %1388 = vset.pattern.permute.xlu0 0
        %1389 = vperm.xlu0 %1388, %v1267
        %v1390 = vpop.permute.xlu0 %1389
        %1393 = vset.pattern.permute.xlu0 0
        %1394 = vperm.xlu0 %1393, %v1268
        %v1395 = vpop.permute.xlu0 %1394
        %1398 = vset.pattern.permute.xlu0 0
        %1399 = vperm.xlu0 %1398, %v1269
        %v1400 = vpop.permute.xlu0 %1399
        %1403 = vset.pattern.permute.xlu0 0
        %1404 = vperm.xlu0 %1403, %v1270
        %v1405 = vpop.permute.xlu0 %1404
        %1408 = vset.pattern.permute.xlu0 0
        %1409 = vperm.xlu0 %1408, %v1271
        %v1410 = vpop.permute.xlu0 %1409
        %1413 = vset.pattern.permute.xlu0 0
        %1414 = vperm.xlu0 %1413, %v1272
        %v1415 = vpop.permute.xlu0 %1414
        %1418 = vset.pattern.permute.xlu0 0
        %1419 = vperm.xlu0 %1418, %v1273
        %v1420 = vpop.permute.xlu0 %1419
        %1423 = vset.pattern.permute.xlu0 0
        %1424 = vperm.xlu0 %1423, %v1274
        %v1425 = vpop.permute.xlu0 %1424
        %1428 = vset.pattern.permute.xlu0 0
        %1429 = vperm.xlu0 %1428, %v1275
        %v1430 = vpop.permute.xlu0 %1429
        %1433 = vset.pattern.permute.xlu0 0
        %1434 = vperm.xlu0 %1433, %v1276
        %v1435 = vpop.permute.xlu0 %1434
        %v1437 = vlaneseq
        %v1438 = vshrl.u32 %v1437, 7
        %v1439 = vsub.s32 0, %v1438
        %v1440 = vrot.slane %v503, %v1439
        %v1441 = vlaneseq
        %v1442 = vshrl.u32 %v1441, 7
        %v1443 = vsub.s32 0, %v1442
        %v1444 = vrot.slane %v504, %v1443
        %v1445 = vmul.f32 %v1280, %v1440
        %v1446 = vmul.f32 %v1280, %v1444
        %v1447 = vmul.f32 %v1285, %v1440
        %v1448 = vmul.f32 %v1285, %v1444
        %v1449 = vmul.f32 %v1290, %v1440
        %v1450 = vmul.f32 %v1290, %v1444
        %v1451 = vmul.f32 %v1295, %v1440
        %v1452 = vmul.f32 %v1295, %v1444
        %v1453 = vmul.f32 %v1300, %v1440
        %v1454 = vmul.f32 %v1300, %v1444
        %v1455 = vmul.f32 %v1305, %v1440
        %v1456 = vmul.f32 %v1305, %v1444
        %v1457 = vmul.f32 %v1310, %v1440
        %v1458 = vmul.f32 %v1310, %v1444
        %v1459 = vmul.f32 %v1315, %v1440
        %v1460 = vmul.f32 %v1315, %v1444
        %v1461 = vmul.f32 %v1320, %v1440
        %v1462 = vmul.f32 %v1320, %v1444
        %v1463 = vmul.f32 %v1325, %v1440
        %v1464 = vmul.f32 %v1325, %v1444
        %v1465 = vmul.f32 %v1330, %v1440
        %v1466 = vmul.f32 %v1330, %v1444
        %v1467 = vmul.f32 %v1335, %v1440
        %v1468 = vmul.f32 %v1335, %v1444
        %v1469 = vmul.f32 %v1340, %v1440
        %v1470 = vmul.f32 %v1340, %v1444
        %v1471 = vmul.f32 %v1345, %v1440
        %v1472 = vmul.f32 %v1345, %v1444
        %v1473 = vmul.f32 %v1350, %v1440
        %v1474 = vmul.f32 %v1350, %v1444
        %v1475 = vmul.f32 %v1355, %v1440
        %v1476 = vmul.f32 %v1355, %v1444
        %v1477 = vmul.f32 %v1360, %v1440
        %v1478 = vmul.f32 %v1360, %v1444
        %v1479 = vmul.f32 %v1365, %v1440
        %v1480 = vmul.f32 %v1365, %v1444
        %v1481 = vmul.f32 %v1370, %v1440
        %v1482 = vmul.f32 %v1370, %v1444
        %v1483 = vmul.f32 %v1375, %v1440
        %v1484 = vmul.f32 %v1375, %v1444
        %v1485 = vmul.f32 %v1380, %v1440
        %v1486 = vmul.f32 %v1380, %v1444
        %v1487 = vmul.f32 %v1385, %v1440
        %v1488 = vmul.f32 %v1385, %v1444
        %v1489 = vmul.f32 %v1390, %v1440
        %v1490 = vmul.f32 %v1390, %v1444
        %v1491 = vmul.f32 %v1395, %v1440
        %v1492 = vmul.f32 %v1395, %v1444
        %v1493 = vmul.f32 %v1400, %v1440
        %v1494 = vmul.f32 %v1400, %v1444
        %v1495 = vmul.f32 %v1405, %v1440
        %v1496 = vmul.f32 %v1405, %v1444
        %v1497 = vmul.f32 %v1410, %v1440
        %v1498 = vmul.f32 %v1410, %v1444
        %v1499 = vmul.f32 %v1415, %v1440
        %v1500 = vmul.f32 %v1415, %v1444
        %v1501 = vmul.f32 %v1420, %v1440
        %v1502 = vmul.f32 %v1420, %v1444
        %v1503 = vmul.f32 %v1425, %v1440
        %v1504 = vmul.f32 %v1425, %v1444
        %v1505 = vmul.f32 %v1430, %v1440
        %v1506 = vmul.f32 %v1430, %v1444
        %v1507 = vmul.f32 %v1435, %v1440
        %v1508 = vmul.f32 %v1435, %v1444
        %v1541 = vunpack.c.l.b16 %v1181
        %v1542 = vunpack.c.h.b16 %v1181
        %v1543 = vunpack.c.l.b16 %v1182
        %v1544 = vunpack.c.h.b16 %v1182
        %v1545 = vunpack.c.l.b16 %v1183
        %v1546 = vunpack.c.h.b16 %v1183
        %v1547 = vunpack.c.l.b16 %v1184
        %v1548 = vunpack.c.h.b16 %v1184
        %v1549 = vunpack.c.l.b16 %v1185
        %v1550 = vunpack.c.h.b16 %v1185
        %v1551 = vunpack.c.l.b16 %v1186
        %v1552 = vunpack.c.h.b16 %v1186
        %v1553 = vunpack.c.l.b16 %v1187
        %v1554 = vunpack.c.h.b16 %v1187
        %v1555 = vunpack.c.l.b16 %v1188
        %v1556 = vunpack.c.h.b16 %v1188
        %v1557 = vunpack.c.l.b16 %v1189
        %v1558 = vunpack.c.h.b16 %v1189
        %v1559 = vunpack.c.l.b16 %v1190
        %v1560 = vunpack.c.h.b16 %v1190
        %v1561 = vunpack.c.l.b16 %v1191
        %v1562 = vunpack.c.h.b16 %v1191
        %v1563 = vunpack.c.l.b16 %v1192
        %v1564 = vunpack.c.h.b16 %v1192
        %v1565 = vunpack.c.l.b16 %v1193
        %v1566 = vunpack.c.h.b16 %v1193
        %v1567 = vunpack.c.l.b16 %v1194
        %v1568 = vunpack.c.h.b16 %v1194
        %v1569 = vunpack.c.l.b16 %v1195
        %v1570 = vunpack.c.h.b16 %v1195
        %v1571 = vunpack.c.l.b16 %v1196
        %v1572 = vunpack.c.h.b16 %v1196
        %v1573 = vunpack.c.l.b16 %v1197
        %v1574 = vunpack.c.h.b16 %v1197
        %v1575 = vunpack.c.l.b16 %v1198
        %v1576 = vunpack.c.h.b16 %v1198
        %v1577 = vunpack.c.l.b16 %v1199
        %v1578 = vunpack.c.h.b16 %v1199
        %v1579 = vunpack.c.l.b16 %v1200
        %v1580 = vunpack.c.h.b16 %v1200
        %v1581 = vunpack.c.l.b16 %v1201
        %v1582 = vunpack.c.h.b16 %v1201
        %v1583 = vunpack.c.l.b16 %v1202
        %v1584 = vunpack.c.h.b16 %v1202
        %v1585 = vunpack.c.l.b16 %v1203
        %v1586 = vunpack.c.h.b16 %v1203
        %v1587 = vunpack.c.l.b16 %v1204
        %v1588 = vunpack.c.h.b16 %v1204
        %v1589 = vunpack.c.l.b16 %v1205
        %v1590 = vunpack.c.h.b16 %v1205
        %v1591 = vunpack.c.l.b16 %v1206
        %v1592 = vunpack.c.h.b16 %v1206
        %v1593 = vunpack.c.l.b16 %v1207
        %v1594 = vunpack.c.h.b16 %v1207
        %v1595 = vunpack.c.l.b16 %v1208
        %v1596 = vunpack.c.h.b16 %v1208
        %v1597 = vunpack.c.l.b16 %v1209
        %v1598 = vunpack.c.h.b16 %v1209
        %v1599 = vunpack.c.l.b16 %v1210
        %v1600 = vunpack.c.h.b16 %v1210
        %v1601 = vunpack.c.l.b16 %v1211
        %v1602 = vunpack.c.h.b16 %v1211
        %v1603 = vunpack.c.l.b16 %v1212
        %v1604 = vunpack.c.h.b16 %v1212
        %v1605 = vpack.c.b16 %v1543, %v1541
        %v1606 = vpack.c.b16 %v1544, %v1542
        %v1607 = vpack.c.b16 %v1547, %v1545
        %v1608 = vpack.c.b16 %v1548, %v1546
        %v1609 = vpack.c.b16 %v1551, %v1549
        %v1610 = vpack.c.b16 %v1552, %v1550
        %v1611 = vpack.c.b16 %v1555, %v1553
        %v1612 = vpack.c.b16 %v1556, %v1554
        %v1613 = vpack.c.b16 %v1559, %v1557
        %v1614 = vpack.c.b16 %v1560, %v1558
        %v1615 = vpack.c.b16 %v1563, %v1561
        %v1616 = vpack.c.b16 %v1564, %v1562
        %v1617 = vpack.c.b16 %v1567, %v1565
        %v1618 = vpack.c.b16 %v1568, %v1566
        %v1619 = vpack.c.b16 %v1571, %v1569
        %v1620 = vpack.c.b16 %v1572, %v1570
        %v1621 = vpack.c.b16 %v1575, %v1573
        %v1622 = vpack.c.b16 %v1576, %v1574
        %v1623 = vpack.c.b16 %v1579, %v1577
        %v1624 = vpack.c.b16 %v1580, %v1578
        %v1625 = vpack.c.b16 %v1583, %v1581
        %v1626 = vpack.c.b16 %v1584, %v1582
        %v1627 = vpack.c.b16 %v1587, %v1585
        %v1628 = vpack.c.b16 %v1588, %v1586
        %v1629 = vpack.c.b16 %v1591, %v1589
        %v1630 = vpack.c.b16 %v1592, %v1590
        %v1631 = vpack.c.b16 %v1595, %v1593
        %v1632 = vpack.c.b16 %v1596, %v1594
        %v1633 = vpack.c.b16 %v1599, %v1597
        %v1634 = vpack.c.b16 %v1600, %v1598
        %v1635 = vpack.c.b16 %v1603, %v1601
        %v1636 = vpack.c.b16 %v1604, %v1602
        %1669 = vmatprep.subr.bf16.mxu0 %v1214
        %1670 = vmatpush1.bf16.msra.mxu0 %v1213
        %1671 = vmatprep.subr.bf16.mxu0 %v1216
        %1672 = vmatpush1.bf16.msra.mxu0 %v1215
        %1673 = vmatprep.subr.bf16.mxu0 %v1218
        %1674 = vmatpush1.bf16.msra.mxu0 %v1217
        %1675 = vmatprep.subr.bf16.mxu0 %v1220
        %1676 = vmatpush1.bf16.msra.mxu0 %v1219
        %1677 = vmatprep.subr.bf16.mxu0 %v1222
        %1678 = vmatpush1.bf16.msra.mxu0 %v1221
        %1679 = vmatprep.subr.bf16.mxu0 %v1224
        %1680 = vmatpush1.bf16.msra.mxu0 %v1223
        %1681 = vmatprep.subr.bf16.mxu0 %v1226
        %1682 = vmatpush1.bf16.msra.mxu0 %v1225
        %1683 = vmatprep.subr.bf16.mxu0 %v1228
        %1684 = vmatpush1.bf16.msra.mxu0 %v1227
        %1685 = vmatprep.subr.bf16.mxu0 %v1230
        %1686 = vmatpush1.bf16.msra.mxu0 %v1229
        %1687 = vmatprep.subr.bf16.mxu0 %v1232
        %1688 = vmatpush1.bf16.msra.mxu0 %v1231
        %1689 = vmatprep.subr.bf16.mxu0 %v1234
        %1690 = vmatpush1.bf16.msra.mxu0 %v1233
        %1691 = vmatprep.subr.bf16.mxu0 %v1236
        %1692 = vmatpush1.bf16.msra.mxu0 %v1235
        %1693 = vmatprep.subr.bf16.mxu0 %v1238
        %1694 = vmatpush1.bf16.msra.mxu0 %v1237
        %1695 = vmatprep.subr.bf16.mxu0 %v1240
        %1696 = vmatpush1.bf16.msra.mxu0 %v1239
        %1697 = vmatprep.subr.bf16.mxu0 %v1242
        %1698 = vmatpush1.bf16.msra.mxu0 %v1241
        %1699 = vmatprep.subr.bf16.mxu0 %v1244
        %1700 = vmatpush1.bf16.msra.mxu0 %v1243
        %1701 = vmatprep.mubr.bf16.mxu0 %v1606
        %1702 = vmatmul.mubr.bf16.gmra.mrb[0].mxu0 %v1605
        %v1703 = vpop.f32.mrb[0].mxu0
        %v1704 = vadd.f32 %v1445, %v1703
        %v1705 = vpop.f32.mrb[0].mxu0
        %v1706 = vadd.f32 %v1446, %v1705
        %v1707 = vpop.f32.mrb[0].mxu0
        %v1708 = vadd.f32 %v1447, %v1707
        %v1709 = vpop.f32.mrb[0].mxu0
        %v1710 = vadd.f32 %v1448, %v1709
        %1711 = vmatprep.mubr.bf16.mxu0 %v1608
        %1712 = vmatmul.mubr.bf16.gmra.mrb[0].mxu0 %v1607
        %v1713 = vpop.f32.mrb[0].mxu0
        %v1714 = vadd.f32 %v1449, %v1713
        %v1715 = vpop.f32.mrb[0].mxu0
        %v1716 = vadd.f32 %v1450, %v1715
        %v1717 = vpop.f32.mrb[0].mxu0
        %v1718 = vadd.f32 %v1451, %v1717
        %v1719 = vpop.f32.mrb[0].mxu0
        %v1720 = vadd.f32 %v1452, %v1719
        %1721 = vmatprep.mubr.bf16.mxu0 %v1610
        %1722 = vmatmul.mubr.bf16.gmra.mrb[0].mxu0 %v1609
        %v1723 = vpop.f32.mrb[0].mxu0
        %v1724 = vadd.f32 %v1453, %v1723
        %v1725 = vpop.f32.mrb[0].mxu0
        %v1726 = vadd.f32 %v1454, %v1725
        %v1727 = vpop.f32.mrb[0].mxu0
        %v1728 = vadd.f32 %v1455, %v1727
        %v1729 = vpop.f32.mrb[0].mxu0
        %v1730 = vadd.f32 %v1456, %v1729
        %1731 = vmatprep.mubr.bf16.mxu0 %v1612
        %1732 = vmatmul.mubr.bf16.gmra.mrb[0].mxu0 %v1611
        %v1733 = vpop.f32.mrb[0].mxu0
        %v1734 = vadd.f32 %v1457, %v1733
        %v1735 = vpop.f32.mrb[0].mxu0
        %v1736 = vadd.f32 %v1458, %v1735
        %v1737 = vpop.f32.mrb[0].mxu0
        %v1738 = vadd.f32 %v1459, %v1737
        %v1739 = vpop.f32.mrb[0].mxu0
        %v1740 = vadd.f32 %v1460, %v1739
        %1741 = vmatprep.mubr.bf16.mxu0 %v1614
        %1742 = vmatmul.mubr.bf16.gmra.mrb[0].mxu0 %v1613
        %v1743 = vpop.f32.mrb[0].mxu0
        %v1744 = vadd.f32 %v1461, %v1743
        %v1745 = vpop.f32.mrb[0].mxu0
        %v1746 = vadd.f32 %v1462, %v1745
        %v1747 = vpop.f32.mrb[0].mxu0
        %v1748 = vadd.f32 %v1463, %v1747
        %v1749 = vpop.f32.mrb[0].mxu0
        %v1750 = vadd.f32 %v1464, %v1749
        %1751 = vmatprep.mubr.bf16.mxu0 %v1616
        %1752 = vmatmul.mubr.bf16.gmra.mrb[0].mxu0 %v1615
        %v1753 = vpop.f32.mrb[0].mxu0
        %v1754 = vadd.f32 %v1465, %v1753
        %v1755 = vpop.f32.mrb[0].mxu0
        %v1756 = vadd.f32 %v1466, %v1755
        %v1757 = vpop.f32.mrb[0].mxu0
        %v1758 = vadd.f32 %v1467, %v1757
        %v1759 = vpop.f32.mrb[0].mxu0
        %v1760 = vadd.f32 %v1468, %v1759
        %1761 = vmatprep.mubr.bf16.mxu0 %v1618
        %1762 = vmatmul.mubr.bf16.gmra.mrb[0].mxu0 %v1617
        %v1763 = vpop.f32.mrb[0].mxu0
        %v1764 = vadd.f32 %v1469, %v1763
        %v1765 = vpop.f32.mrb[0].mxu0
        %v1766 = vadd.f32 %v1470, %v1765
        %v1767 = vpop.f32.mrb[0].mxu0
        %v1768 = vadd.f32 %v1471, %v1767
        %v1769 = vpop.f32.mrb[0].mxu0
        %v1770 = vadd.f32 %v1472, %v1769
        %1771 = vmatprep.mubr.bf16.mxu0 %v1620
        %1772 = vmatmul.mubr.bf16.gmra.mrb[0].mxu0 %v1619
        %v1773 = vpop.f32.mrb[0].mxu0
        %v1774 = vadd.f32 %v1473, %v1773
        %v1775 = vpop.f32.mrb[0].mxu0
        %v1776 = vadd.f32 %v1474, %v1775
        %v1777 = vpop.f32.mrb[0].mxu0
        %v1778 = vadd.f32 %v1475, %v1777
        %v1779 = vpop.f32.mrb[0].mxu0
        %v1780 = vadd.f32 %v1476, %v1779
        %1781 = vmatprep.mubr.bf16.mxu0 %v1622
        %1782 = vmatmul.mubr.bf16.gmra.mrb[0].mxu0 %v1621
        %v1783 = vpop.f32.mrb[0].mxu0
        %v1784 = vadd.f32 %v1477, %v1783
        %v1785 = vpop.f32.mrb[0].mxu0
        %v1786 = vadd.f32 %v1478, %v1785
        %v1787 = vpop.f32.mrb[0].mxu0
        %v1788 = vadd.f32 %v1479, %v1787
        %v1789 = vpop.f32.mrb[0].mxu0
        %v1790 = vadd.f32 %v1480, %v1789
        %1791 = vmatprep.mubr.bf16.mxu0 %v1624
        %1792 = vmatmul.mubr.bf16.gmra.mrb[0].mxu0 %v1623
        %v1793 = vpop.f32.mrb[0].mxu0
        %v1794 = vadd.f32 %v1481, %v1793
        %v1795 = vpop.f32.mrb[0].mxu0
        %v1796 = vadd.f32 %v1482, %v1795
        %v1797 = vpop.f32.mrb[0].mxu0
        %v1798 = vadd.f32 %v1483, %v1797
        %v1799 = vpop.f32.mrb[0].mxu0
        %v1800 = vadd.f32 %v1484, %v1799
        %1801 = vmatprep.mubr.bf16.mxu0 %v1626
        %1802 = vmatmul.mubr.bf16.gmra.mrb[0].mxu0 %v1625
        %v1803 = vpop.f32.mrb[0].mxu0
        %v1804 = vadd.f32 %v1485, %v1803
        %v1805 = vpop.f32.mrb[0].mxu0
        %v1806 = vadd.f32 %v1486, %v1805
        %v1807 = vpop.f32.mrb[0].mxu0
        %v1808 = vadd.f32 %v1487, %v1807
        %v1809 = vpop.f32.mrb[0].mxu0
        %v1810 = vadd.f32 %v1488, %v1809
        %1811 = vmatprep.mubr.bf16.mxu0 %v1628
        %1812 = vmatmul.mubr.bf16.gmra.mrb[0].mxu0 %v1627
        %v1813 = vpop.f32.mrb[0].mxu0
        %v1814 = vadd.f32 %v1489, %v1813
        %v1815 = vpop.f32.mrb[0].mxu0
        %v1816 = vadd.f32 %v1490, %v1815
        %v1817 = vpop.f32.mrb[0].mxu0
        %v1818 = vadd.f32 %v1491, %v1817
        %v1819 = vpop.f32.mrb[0].mxu0
        %v1820 = vadd.f32 %v1492, %v1819
        %1821 = vmatprep.mubr.bf16.mxu0 %v1630
        %1822 = vmatmul.mubr.bf16.gmra.mrb[0].mxu0 %v1629
        %v1823 = vpop.f32.mrb[0].mxu0
        %v1824 = vadd.f32 %v1493, %v1823
        %v1825 = vpop.f32.mrb[0].mxu0
        %v1826 = vadd.f32 %v1494, %v1825
        %v1827 = vpop.f32.mrb[0].mxu0
        %v1828 = vadd.f32 %v1495, %v1827
        %v1829 = vpop.f32.mrb[0].mxu0
        %v1830 = vadd.f32 %v1496, %v1829
        %1831 = vmatprep.mubr.bf16.mxu0 %v1632
        %1832 = vmatmul.mubr.bf16.gmra.mrb[0].mxu0 %v1631
        %v1833 = vpop.f32.mrb[0].mxu0
        %v1834 = vadd.f32 %v1497, %v1833
        %v1835 = vpop.f32.mrb[0].mxu0
        %v1836 = vadd.f32 %v1498, %v1835
        %v1837 = vpop.f32.mrb[0].mxu0
        %v1838 = vadd.f32 %v1499, %v1837
        %v1839 = vpop.f32.mrb[0].mxu0
        %v1840 = vadd.f32 %v1500, %v1839
        %1841 = vmatprep.mubr.bf16.mxu0 %v1634
        %1842 = vmatmul.mubr.bf16.gmra.mrb[0].mxu0 %v1633
        %v1843 = vpop.f32.mrb[0].mxu0
        %v1844 = vadd.f32 %v1501, %v1843
        %v1845 = vpop.f32.mrb[0].mxu0
        %v1846 = vadd.f32 %v1502, %v1845
        %v1847 = vpop.f32.mrb[0].mxu0
        %v1848 = vadd.f32 %v1503, %v1847
        %v1849 = vpop.f32.mrb[0].mxu0
        %v1850 = vadd.f32 %v1504, %v1849
        %1851 = vmatprep.mubr.bf16.mxu0 %v1636
        %1852 = vmatmul.mubr.bf16.gmra.mrb[0].mxu0 %v1635
        %v1853 = vpop.f32.mrb[0].mxu0
        %v1854 = vadd.f32 %v1505, %v1853
        %v1855 = vpop.f32.mrb[0].mxu0
        %v1856 = vadd.f32 %v1506, %v1855
        %v1857 = vpop.f32.mrb[0].mxu0
        %v1858 = vadd.f32 %v1507, %v1857
        %v1859 = vpop.f32.mrb[0].mxu0
        %v1860 = vadd.f32 %v1508, %v1859
        %1861 = vdwg.mxu0
        %1862 = vset.pattern.permute.xlu0 1
        %1863 = vperm.xlu0 %1862, %v1245
        %v1864 = vpop.permute.xlu0 %1863
        %1866 = vset.pattern.permute.xlu0 1
        %1867 = vperm.xlu0 %1866, %v1246
        %v1868 = vpop.permute.xlu0 %1867
        %1870 = vset.pattern.permute.xlu0 1
        %1871 = vperm.xlu0 %1870, %v1247
        %v1872 = vpop.permute.xlu0 %1871
        %1874 = vset.pattern.permute.xlu0 1
        %1875 = vperm.xlu0 %1874, %v1248
        %v1876 = vpop.permute.xlu0 %1875
        %1878 = vset.pattern.permute.xlu0 1
        %1879 = vperm.xlu0 %1878, %v1249
        %v1880 = vpop.permute.xlu0 %1879
        %1882 = vset.pattern.permute.xlu0 1
        %1883 = vperm.xlu0 %1882, %v1250
        %v1884 = vpop.permute.xlu0 %1883
        %1886 = vset.pattern.permute.xlu0 1
        %1887 = vperm.xlu0 %1886, %v1251
        %v1888 = vpop.permute.xlu0 %1887
        %1890 = vset.pattern.permute.xlu0 1
        %1891 = vperm.xlu0 %1890, %v1252
        %v1892 = vpop.permute.xlu0 %1891
        %1894 = vset.pattern.permute.xlu0 1
        %1895 = vperm.xlu0 %1894, %v1253
        %v1896 = vpop.permute.xlu0 %1895
        %1898 = vset.pattern.permute.xlu0 1
        %1899 = vperm.xlu0 %1898, %v1254
        %v1900 = vpop.permute.xlu0 %1899
        %1902 = vset.pattern.permute.xlu0 1
        %1903 = vperm.xlu0 %1902, %v1255
        %v1904 = vpop.permute.xlu0 %1903
        %1906 = vset.pattern.permute.xlu0 1
        %1907 = vperm.xlu0 %1906, %v1256
        %v1908 = vpop.permute.xlu0 %1907
        %1910 = vset.pattern.permute.xlu0 1
        %1911 = vperm.xlu0 %1910, %v1257
        %v1912 = vpop.permute.xlu0 %1911
        %1914 = vset.pattern.permute.xlu0 1
        %1915 = vperm.xlu0 %1914, %v1258
        %v1916 = vpop.permute.xlu0 %1915
        %1918 = vset.pattern.permute.xlu0 1
        %1919 = vperm.xlu0 %1918, %v1259
        %v1920 = vpop.permute.xlu0 %1919
        %1922 = vset.pattern.permute.xlu0 1
        %1923 = vperm.xlu0 %1922, %v1260
        %v1924 = vpop.permute.xlu0 %1923
        %1926 = vset.pattern.permute.xlu0 1
        %1927 = vperm.xlu0 %1926, %v1261
        %v1928 = vpop.permute.xlu0 %1927
        %1930 = vset.pattern.permute.xlu0 1
        %1931 = vperm.xlu0 %1930, %v1262
        %v1932 = vpop.permute.xlu0 %1931
        %1934 = vset.pattern.permute.xlu0 1
        %1935 = vperm.xlu0 %1934, %v1263
        %v1936 = vpop.permute.xlu0 %1935
        %1938 = vset.pattern.permute.xlu0 1
        %1939 = vperm.xlu0 %1938, %v1264
        %v1940 = vpop.permute.xlu0 %1939
        %1942 = vset.pattern.permute.xlu0 1
        %1943 = vperm.xlu0 %1942, %v1265
        %v1944 = vpop.permute.xlu0 %1943
        %1946 = vset.pattern.permute.xlu0 1
        %1947 = vperm.xlu0 %1946, %v1266
        %v1948 = vpop.permute.xlu0 %1947
        %1950 = vset.pattern.permute.xlu0 1
        %1951 = vperm.xlu0 %1950, %v1267
        %v1952 = vpop.permute.xlu0 %1951
        %1954 = vset.pattern.permute.xlu0 1
        %1955 = vperm.xlu0 %1954, %v1268
        %v1956 = vpop.permute.xlu0 %1955
        %1958 = vset.pattern.permute.xlu0 1
        %1959 = vperm.xlu0 %1958, %v1269
        %v1960 = vpop.permute.xlu0 %1959
        %1962 = vset.pattern.permute.xlu0 1
        %1963 = vperm.xlu0 %1962, %v1270
        %v1964 = vpop.permute.xlu0 %1963
        %1966 = vset.pattern.permute.xlu0 1
        %1967 = vperm.xlu0 %1966, %v1271
        %v1968 = vpop.permute.xlu0 %1967
        %1970 = vset.pattern.permute.xlu0 1
        %1971 = vperm.xlu0 %1970, %v1272
        %v1972 = vpop.permute.xlu0 %1971
        %1974 = vset.pattern.permute.xlu0 1
        %1975 = vperm.xlu0 %1974, %v1273
        %v1976 = vpop.permute.xlu0 %1975
        %1978 = vset.pattern.permute.xlu0 1
        %1979 = vperm.xlu0 %1978, %v1274
        %v1980 = vpop.permute.xlu0 %1979
        %1982 = vset.pattern.permute.xlu0 1
        %1983 = vperm.xlu0 %1982, %v1275
        %v1984 = vpop.permute.xlu0 %1983
        %1986 = vset.pattern.permute.xlu0 1
        %1987 = vperm.xlu0 %1986, %v1276
        %v1988 = vpop.permute.xlu0 %1987
        %v1990 = vlaneseq
        %v1991 = vshrl.u32 %v1990, 7
        %v1992 = vsub.s32 1, %v1991
        %v1993 = vrot.slane %v503, %v1992
        %v1994 = vlaneseq
        %v1995 = vshrl.u32 %v1994, 7
        %v1996 = vsub.s32 1, %v1995
        %v1997 = vrot.slane %v504, %v1996
        %v1998 = vmul.f32 %v1864, %v1993
        %v1999 = vmul.f32 %v1864, %v1997
        %v2000 = vmul.f32 %v1868, %v1993
        %v2001 = vmul.f32 %v1868, %v1997
        %v2002 = vmul.f32 %v1872, %v1993
        %v2003 = vmul.f32 %v1872, %v1997
        %v2004 = vmul.f32 %v1876, %v1993
        %v2005 = vmul.f32 %v1876, %v1997
        %v2006 = vmul.f32 %v1880, %v1993
        %v2007 = vmul.f32 %v1880, %v1997
        %v2008 = vmul.f32 %v1884, %v1993
        %v2009 = vmul.f32 %v1884, %v1997
        %v2010 = vmul.f32 %v1888, %v1993
        %v2011 = vmul.f32 %v1888, %v1997
        %v2012 = vmul.f32 %v1892, %v1993
        %v2013 = vmul.f32 %v1892, %v1997
        %v2014 = vmul.f32 %v1896, %v1993
        %v2015 = vmul.f32 %v1896, %v1997
        %v2016 = vmul.f32 %v1900, %v1993
        %v2017 = vmul.f32 %v1900, %v1997
        %v2018 = vmul.f32 %v1904, %v1993
        %v2019 = vmul.f32 %v1904, %v1997
        %v2020 = vmul.f32 %v1908, %v1993
        %v2021 = vmul.f32 %v1908, %v1997
        %v2022 = vmul.f32 %v1912, %v1993
        %v2023 = vmul.f32 %v1912, %v1997
        %v2024 = vmul.f32 %v1916, %v1993
        %v2025 = vmul.f32 %v1916, %v1997
        %v2026 = vmul.f32 %v1920, %v1993
        %v2027 = vmul.f32 %v1920, %v1997
        %v2028 = vmul.f32 %v1924, %v1993
        %v2029 = vmul.f32 %v1924, %v1997
        %v2030 = vmul.f32 %v1928, %v1993
        %v2031 = vmul.f32 %v1928, %v1997
        %v2032 = vmul.f32 %v1932, %v1993
        %v2033 = vmul.f32 %v1932, %v1997
        %v2034 = vmul.f32 %v1936, %v1993
        %v2035 = vmul.f32 %v1936, %v1997
        %v2036 = vmul.f32 %v1940, %v1993
        %v2037 = vmul.f32 %v1940, %v1997
        %v2038 = vmul.f32 %v1944, %v1993
        %v2039 = vmul.f32 %v1944, %v1997
        %v2040 = vmul.f32 %v1948, %v1993
        %v2041 = vmul.f32 %v1948, %v1997
        %v2042 = vmul.f32 %v1952, %v1993
        %v2043 = vmul.f32 %v1952, %v1997
        %v2044 = vmul.f32 %v1956, %v1993
        %v2045 = vmul.f32 %v1956, %v1997
        %v2046 = vmul.f32 %v1960, %v1993
        %v2047 = vmul.f32 %v1960, %v1997
        %v2048 = vmul.f32 %v1964, %v1993
        %v2049 = vmul.f32 %v1964, %v1997
        %v2050 = vmul.f32 %v1968, %v1993
        %v2051 = vmul.f32 %v1968, %v1997
        %v2052 = vmul.f32 %v1972, %v1993
        %v2053 = vmul.f32 %v1972, %v1997
        %v2054 = vmul.f32 %v1976, %v1993
        %v2055 = vmul.f32 %v1976, %v1997
        %v2056 = vmul.f32 %v1980, %v1993
        %v2057 = vmul.f32 %v1980, %v1997
        %v2058 = vmul.f32 %v1984, %v1993
        %v2059 = vmul.f32 %v1984, %v1997
        %v2060 = vmul.f32 %v1988, %v1993
        %v2061 = vmul.f32 %v1988, %v1997
        %v2062 = vadd.f32 %v1704, %v1998
        %v2063 = vadd.f32 %v1706, %v1999
        %v2064 = vadd.f32 %v1708, %v2000
        %v2065 = vadd.f32 %v1710, %v2001
        %v2066 = vadd.f32 %v1714, %v2002
        %v2067 = vadd.f32 %v1716, %v2003
        %v2068 = vadd.f32 %v1718, %v2004
        %v2069 = vadd.f32 %v1720, %v2005
        %v2070 = vadd.f32 %v1724, %v2006
        %v2071 = vadd.f32 %v1726, %v2007
        %v2072 = vadd.f32 %v1728, %v2008
        %v2073 = vadd.f32 %v1730, %v2009
        %v2074 = vadd.f32 %v1734, %v2010
        %v2075 = vadd.f32 %v1736, %v2011
        %v2076 = vadd.f32 %v1738, %v2012
        %v2077 = vadd.f32 %v1740, %v2013
        %v2078 = vadd.f32 %v1744, %v2014
        %v2079 = vadd.f32 %v1746, %v2015
        %v2080 = vadd.f32 %v1748, %v2016
        %v2081 = vadd.f32 %v1750, %v2017
        %v2082 = vadd.f32 %v1754, %v2018
        %v2083 = vadd.f32 %v1756, %v2019
        %v2084 = vadd.f32 %v1758, %v2020
        %v2085 = vadd.f32 %v1760, %v2021
        %v2086 = vadd.f32 %v1764, %v2022
        %v2087 = vadd.f32 %v1766, %v2023
        %v2088 = vadd.f32 %v1768, %v2024
        %v2089 = vadd.f32 %v1770, %v2025
        %v2090 = vadd.f32 %v1774, %v2026
        %v2091 = vadd.f32 %v1776, %v2027
        %v2092 = vadd.f32 %v1778, %v2028
        %v2093 = vadd.f32 %v1780, %v2029
        %v2094 = vadd.f32 %v1784, %v2030
        %v2095 = vadd.f32 %v1786, %v2031
        %v2096 = vadd.f32 %v1788, %v2032
        %v2097 = vadd.f32 %v1790, %v2033
        %v2098 = vadd.f32 %v1794, %v2034
        %v2099 = vadd.f32 %v1796, %v2035
        %v2100 = vadd.f32 %v1798, %v2036
        %v2101 = vadd.f32 %v1800, %v2037
        %v2102 = vadd.f32 %v1804, %v2038
        %v2103 = vadd.f32 %v1806, %v2039
        %v2104 = vadd.f32 %v1808, %v2040
        %v2105 = vadd.f32 %v1810, %v2041
        %v2106 = vadd.f32 %v1814, %v2042
        %v2107 = vadd.f32 %v1816, %v2043
        %v2108 = vadd.f32 %v1818, %v2044
        %v2109 = vadd.f32 %v1820, %v2045
        %v2110 = vadd.f32 %v1824, %v2046
        %v2111 = vadd.f32 %v1826, %v2047
        %v2112 = vadd.f32 %v1828, %v2048
        %v2113 = vadd.f32 %v1830, %v2049
        %v2114 = vadd.f32 %v1834, %v2050
        %v2115 = vadd.f32 %v1836, %v2051
        %v2116 = vadd.f32 %v1838, %v2052
        %v2117 = vadd.f32 %v1840, %v2053
        %v2118 = vadd.f32 %v1844, %v2054
        %v2119 = vadd.f32 %v1846, %v2055
        %v2120 = vadd.f32 %v1848, %v2056
        %v2121 = vadd.f32 %v1850, %v2057
        %v2122 = vadd.f32 %v1854, %v2058
        %v2123 = vadd.f32 %v1856, %v2059
        %v2124 = vadd.f32 %v1858, %v2060
        %v2125 = vadd.f32 %v1860, %v2061
        %2126 = vset.pattern.permute.xlu0 2
        %2127 = vperm.xlu0 %2126, %v1245
        %v2128 = vpop.permute.xlu0 %2127
        %2130 = vset.pattern.permute.xlu0 2
        %2131 = vperm.xlu0 %2130, %v1246
        %v2132 = vpop.permute.xlu0 %2131
        %2134 = vset.pattern.permute.xlu0 2
        %2135 = vperm.xlu0 %2134, %v1247
        %v2136 = vpop.permute.xlu0 %2135
        %2138 = vset.pattern.permute.xlu0 2
        %2139 = vperm.xlu0 %2138, %v1248
        %v2140 = vpop.permute.xlu0 %2139
        %2142 = vset.pattern.permute.xlu0 2
        %2143 = vperm.xlu0 %2142, %v1249
        %v2144 = vpop.permute.xlu0 %2143
        %2146 = vset.pattern.permute.xlu0 2
        %2147 = vperm.xlu0 %2146, %v1250
        %v2148 = vpop.permute.xlu0 %2147
        %2150 = vset.pattern.permute.xlu0 2
        %2151 = vperm.xlu0 %2150, %v1251
        %v2152 = vpop.permute.xlu0 %2151
        %2154 = vset.pattern.permute.xlu0 2
        %2155 = vperm.xlu0 %2154, %v1252
        %v2156 = vpop.permute.xlu0 %2155
        %2158 = vset.pattern.permute.xlu0 2
        %2159 = vperm.xlu0 %2158, %v1253
        %v2160 = vpop.permute.xlu0 %2159
        %2162 = vset.pattern.permute.xlu0 2
        %2163 = vperm.xlu0 %2162, %v1254
        %v2164 = vpop.permute.xlu0 %2163
        %2166 = vset.pattern.permute.xlu0 2
        %2167 = vperm.xlu0 %2166, %v1255
        %v2168 = vpop.permute.xlu0 %2167
        %2170 = vset.pattern.permute.xlu0 2
        %2171 = vperm.xlu0 %2170, %v1256
        %v2172 = vpop.permute.xlu0 %2171
        %2174 = vset.pattern.permute.xlu0 2
        %2175 = vperm.xlu0 %2174, %v1257
        %v2176 = vpop.permute.xlu0 %2175
        %2178 = vset.pattern.permute.xlu0 2
        %2179 = vperm.xlu0 %2178, %v1258
        %v2180 = vpop.permute.xlu0 %2179
        %2182 = vset.pattern.permute.xlu0 2
        %2183 = vperm.xlu0 %2182, %v1259
        %v2184 = vpop.permute.xlu0 %2183
        %2186 = vset.pattern.permute.xlu0 2
        %2187 = vperm.xlu0 %2186, %v1260
        %v2188 = vpop.permute.xlu0 %2187
        %2190 = vset.pattern.permute.xlu0 2
        %2191 = vperm.xlu0 %2190, %v1261
        %v2192 = vpop.permute.xlu0 %2191
        %2194 = vset.pattern.permute.xlu0 2
        %2195 = vperm.xlu0 %2194, %v1262
        %v2196 = vpop.permute.xlu0 %2195
        %2198 = vset.pattern.permute.xlu0 2
        %2199 = vperm.xlu0 %2198, %v1263
        %v2200 = vpop.permute.xlu0 %2199
        %2202 = vset.pattern.permute.xlu0 2
        %2203 = vperm.xlu0 %2202, %v1264
        %v2204 = vpop.permute.xlu0 %2203
        %2206 = vset.pattern.permute.xlu0 2
        %2207 = vperm.xlu0 %2206, %v1265
        %v2208 = vpop.permute.xlu0 %2207
        %2210 = vset.pattern.permute.xlu0 2
        %2211 = vperm.xlu0 %2210, %v1266
        %v2212 = vpop.permute.xlu0 %2211
        %2214 = vset.pattern.permute.xlu0 2
        %2215 = vperm.xlu0 %2214, %v1267
        %v2216 = vpop.permute.xlu0 %2215
        %2218 = vset.pattern.permute.xlu0 2
        %2219 = vperm.xlu0 %2218, %v1268
        %v2220 = vpop.permute.xlu0 %2219
        %2222 = vset.pattern.permute.xlu0 2
        %2223 = vperm.xlu0 %2222, %v1269
        %v2224 = vpop.permute.xlu0 %2223
        %2226 = vset.pattern.permute.xlu0 2
        %2227 = vperm.xlu0 %2226, %v1270
        %v2228 = vpop.permute.xlu0 %2227
        %2230 = vset.pattern.permute.xlu0 2
        %2231 = vperm.xlu0 %2230, %v1271
        %v2232 = vpop.permute.xlu0 %2231
        %2234 = vset.pattern.permute.xlu0 2
        %2235 = vperm.xlu0 %2234, %v1272
        %v2236 = vpop.permute.xlu0 %2235
        %2238 = vset.pattern.permute.xlu0 2
        %2239 = vperm.xlu0 %2238, %v1273
        %v2240 = vpop.permute.xlu0 %2239
        %2242 = vset.pattern.permute.xlu0 2
        %2243 = vperm.xlu0 %2242, %v1274
        %v2244 = vpop.permute.xlu0 %2243
        %2246 = vset.pattern.permute.xlu0 2
        %2247 = vperm.xlu0 %2246, %v1275
        %v2248 = vpop.permute.xlu0 %2247
        %2250 = vset.pattern.permute.xlu0 2
        %2251 = vperm.xlu0 %2250, %v1276
        %v2252 = vpop.permute.xlu0 %2251
        %v2254 = vlaneseq
        %v2255 = vshrl.u32 %v2254, 7
        %v2256 = vsub.s32 2, %v2255
        %v2257 = vrot.slane %v503, %v2256
        %v2258 = vlaneseq
        %v2259 = vshrl.u32 %v2258, 7
        %v2260 = vsub.s32 2, %v2259
        %v2261 = vrot.slane %v504, %v2260
        %v2262 = vmul.f32 %v2128, %v2257
        %v2263 = vmul.f32 %v2128, %v2261
        %v2264 = vmul.f32 %v2132, %v2257
        %v2265 = vmul.f32 %v2132, %v2261
        %v2266 = vmul.f32 %v2136, %v2257
        %v2267 = vmul.f32 %v2136, %v2261
        %v2268 = vmul.f32 %v2140, %v2257
        %v2269 = vmul.f32 %v2140, %v2261
        %v2270 = vmul.f32 %v2144, %v2257
        %v2271 = vmul.f32 %v2144, %v2261
        %v2272 = vmul.f32 %v2148, %v2257
        %v2273 = vmul.f32 %v2148, %v2261
        %v2274 = vmul.f32 %v2152, %v2257
        %v2275 = vmul.f32 %v2152, %v2261
        %v2276 = vmul.f32 %v2156, %v2257
        %v2277 = vmul.f32 %v2156, %v2261
        %v2278 = vmul.f32 %v2160, %v2257
        %v2279 = vmul.f32 %v2160, %v2261
        %v2280 = vmul.f32 %v2164, %v2257
        %v2281 = vmul.f32 %v2164, %v2261
        %v2282 = vmul.f32 %v2168, %v2257
        %v2283 = vmul.f32 %v2168, %v2261
        %v2284 = vmul.f32 %v2172, %v2257
        %v2285 = vmul.f32 %v2172, %v2261
        %v2286 = vmul.f32 %v2176, %v2257
        %v2287 = vmul.f32 %v2176, %v2261
        %v2288 = vmul.f32 %v2180, %v2257
        %v2289 = vmul.f32 %v2180, %v2261
        %v2290 = vmul.f32 %v2184, %v2257
        %v2291 = vmul.f32 %v2184, %v2261
        %v2292 = vmul.f32 %v2188, %v2257
        %v2293 = vmul.f32 %v2188, %v2261
        %v2294 = vmul.f32 %v2192, %v2257
        %v2295 = vmul.f32 %v2192, %v2261
        %v2296 = vmul.f32 %v2196, %v2257
        %v2297 = vmul.f32 %v2196, %v2261
        %v2298 = vmul.f32 %v2200, %v2257
        %v2299 = vmul.f32 %v2200, %v2261
        %v2300 = vmul.f32 %v2204, %v2257
        %v2301 = vmul.f32 %v2204, %v2261
        %v2302 = vmul.f32 %v2208, %v2257
        %v2303 = vmul.f32 %v2208, %v2261
        %v2304 = vmul.f32 %v2212, %v2257
        %v2305 = vmul.f32 %v2212, %v2261
        %v2306 = vmul.f32 %v2216, %v2257
        %v2307 = vmul.f32 %v2216, %v2261
        %v2308 = vmul.f32 %v2220, %v2257
        %v2309 = vmul.f32 %v2220, %v2261
        %v2310 = vmul.f32 %v2224, %v2257
        %v2311 = vmul.f32 %v2224, %v2261
        %v2312 = vmul.f32 %v2228, %v2257
        %v2313 = vmul.f32 %v2228, %v2261
        %v2314 = vmul.f32 %v2232, %v2257
        %v2315 = vmul.f32 %v2232, %v2261
        %v2316 = vmul.f32 %v2236, %v2257
        %v2317 = vmul.f32 %v2236, %v2261
        %v2318 = vmul.f32 %v2240, %v2257
        %v2319 = vmul.f32 %v2240, %v2261
        %v2320 = vmul.f32 %v2244, %v2257
        %v2321 = vmul.f32 %v2244, %v2261
        %v2322 = vmul.f32 %v2248, %v2257
        %v2323 = vmul.f32 %v2248, %v2261
        %v2324 = vmul.f32 %v2252, %v2257
        %v2325 = vmul.f32 %v2252, %v2261
        %v2326 = vadd.f32 %v2062, %v2262
        %v2327 = vadd.f32 %v2063, %v2263
        %v2328 = vadd.f32 %v2064, %v2264
        %v2329 = vadd.f32 %v2065, %v2265
        %v2330 = vadd.f32 %v2066, %v2266
        %v2331 = vadd.f32 %v2067, %v2267
        %v2332 = vadd.f32 %v2068, %v2268
        %v2333 = vadd.f32 %v2069, %v2269
        %v2334 = vadd.f32 %v2070, %v2270
        %v2335 = vadd.f32 %v2071, %v2271
        %v2336 = vadd.f32 %v2072, %v2272
        %v2337 = vadd.f32 %v2073, %v2273
        %v2338 = vadd.f32 %v2074, %v2274
        %v2339 = vadd.f32 %v2075, %v2275
        %v2340 = vadd.f32 %v2076, %v2276
        %v2341 = vadd.f32 %v2077, %v2277
        %v2342 = vadd.f32 %v2078, %v2278
        %v2343 = vadd.f32 %v2079, %v2279
        %v2344 = vadd.f32 %v2080, %v2280
        %v2345 = vadd.f32 %v2081, %v2281
        %v2346 = vadd.f32 %v2082, %v2282
        %v2347 = vadd.f32 %v2083, %v2283
        %v2348 = vadd.f32 %v2084, %v2284
        %v2349 = vadd.f32 %v2085, %v2285
        %v2350 = vadd.f32 %v2086, %v2286
        %v2351 = vadd.f32 %v2087, %v2287
        %v2352 = vadd.f32 %v2088, %v2288
        %v2353 = vadd.f32 %v2089, %v2289
        %v2354 = vadd.f32 %v2090, %v2290
        %v2355 = vadd.f32 %v2091, %v2291
        %v2356 = vadd.f32 %v2092, %v2292
        %v2357 = vadd.f32 %v2093, %v2293
        %v2358 = vadd.f32 %v2094, %v2294
        %v2359 = vadd.f32 %v2095, %v2295
        %v2360 = vadd.f32 %v2096, %v2296
        %v2361 = vadd.f32 %v2097, %v2297
        %v2362 = vadd.f32 %v2098, %v2298
        %v2363 = vadd.f32 %v2099, %v2299
        %v2364 = vadd.f32 %v2100, %v2300
        %v2365 = vadd.f32 %v2101, %v2301
        %v2366 = vadd.f32 %v2102, %v2302
        %v2367 = vadd.f32 %v2103, %v2303
        %v2368 = vadd.f32 %v2104, %v2304
        %v2369 = vadd.f32 %v2105, %v2305
        %v2370 = vadd.f32 %v2106, %v2306
        %v2371 = vadd.f32 %v2107, %v2307
        %v2372 = vadd.f32 %v2108, %v2308
        %v2373 = vadd.f32 %v2109, %v2309
        %v2374 = vadd.f32 %v2110, %v2310
        %v2375 = vadd.f32 %v2111, %v2311
        %v2376 = vadd.f32 %v2112, %v2312
        %v2377 = vadd.f32 %v2113, %v2313
        %v2378 = vadd.f32 %v2114, %v2314
        %v2379 = vadd.f32 %v2115, %v2315
        %v2380 = vadd.f32 %v2116, %v2316
        %v2381 = vadd.f32 %v2117, %v2317
        %v2382 = vadd.f32 %v2118, %v2318
        %v2383 = vadd.f32 %v2119, %v2319
        %v2384 = vadd.f32 %v2120, %v2320
        %v2385 = vadd.f32 %v2121, %v2321
        %v2386 = vadd.f32 %v2122, %v2322
        %v2387 = vadd.f32 %v2123, %v2323
        %v2388 = vadd.f32 %v2124, %v2324
        %v2389 = vadd.f32 %v2125, %v2325
        %2390 = vset.pattern.permute.xlu0 3
        %2391 = vperm.xlu0 %2390, %v1245
        %v2392 = vpop.permute.xlu0 %2391
        %2394 = vset.pattern.permute.xlu0 3
        %2395 = vperm.xlu0 %2394, %v1246
        %v2396 = vpop.permute.xlu0 %2395
        %2398 = vset.pattern.permute.xlu0 3
        %2399 = vperm.xlu0 %2398, %v1247
        %v2400 = vpop.permute.xlu0 %2399
        %2402 = vset.pattern.permute.xlu0 3
        %2403 = vperm.xlu0 %2402, %v1248
        %v2404 = vpop.permute.xlu0 %2403
        %2406 = vset.pattern.permute.xlu0 3
        %2407 = vperm.xlu0 %2406, %v1249
        %v2408 = vpop.permute.xlu0 %2407
        %2410 = vset.pattern.permute.xlu0 3
        %2411 = vperm.xlu0 %2410, %v1250
        %v2412 = vpop.permute.xlu0 %2411
        %2414 = vset.pattern.permute.xlu0 3
        %2415 = vperm.xlu0 %2414, %v1251
        %v2416 = vpop.permute.xlu0 %2415
        %2418 = vset.pattern.permute.xlu0 3
        %2419 = vperm.xlu0 %2418, %v1252
        %v2420 = vpop.permute.xlu0 %2419
        %2422 = vset.pattern.permute.xlu0 3
        %2423 = vperm.xlu0 %2422, %v1253
        %v2424 = vpop.permute.xlu0 %2423
        %2426 = vset.pattern.permute.xlu0 3
        %2427 = vperm.xlu0 %2426, %v1254
        %v2428 = vpop.permute.xlu0 %2427
        %2430 = vset.pattern.permute.xlu0 3
        %2431 = vperm.xlu0 %2430, %v1255
        %v2432 = vpop.permute.xlu0 %2431
        %2434 = vset.pattern.permute.xlu0 3
        %2435 = vperm.xlu0 %2434, %v1256
        %v2436 = vpop.permute.xlu0 %2435
        %2438 = vset.pattern.permute.xlu0 3
        %2439 = vperm.xlu0 %2438, %v1257
        %v2440 = vpop.permute.xlu0 %2439
        %2442 = vset.pattern.permute.xlu0 3
        %2443 = vperm.xlu0 %2442, %v1258
        %v2444 = vpop.permute.xlu0 %2443
        %2446 = vset.pattern.permute.xlu0 3
        %2447 = vperm.xlu0 %2446, %v1259
        %v2448 = vpop.permute.xlu0 %2447
        %2450 = vset.pattern.permute.xlu0 3
        %2451 = vperm.xlu0 %2450, %v1260
        %v2452 = vpop.permute.xlu0 %2451
        %2454 = vset.pattern.permute.xlu0 3
        %2455 = vperm.xlu0 %2454, %v1261
        %v2456 = vpop.permute.xlu0 %2455
        %2458 = vset.pattern.permute.xlu0 3
        %2459 = vperm.xlu0 %2458, %v1262
        %v2460 = vpop.permute.xlu0 %2459
        %2462 = vset.pattern.permute.xlu0 3
        %2463 = vperm.xlu0 %2462, %v1263
        %v2464 = vpop.permute.xlu0 %2463
        %2466 = vset.pattern.permute.xlu0 3
        %2467 = vperm.xlu0 %2466, %v1264
        %v2468 = vpop.permute.xlu0 %2467
        %2470 = vset.pattern.permute.xlu0 3
        %2471 = vperm.xlu0 %2470, %v1265
        %v2472 = vpop.permute.xlu0 %2471
        %2474 = vset.pattern.permute.xlu0 3
        %2475 = vperm.xlu0 %2474, %v1266
        %v2476 = vpop.permute.xlu0 %2475
        %2478 = vset.pattern.permute.xlu0 3
        %2479 = vperm.xlu0 %2478, %v1267
        %v2480 = vpop.permute.xlu0 %2479
        %2482 = vset.pattern.permute.xlu0 3
        %2483 = vperm.xlu0 %2482, %v1268
        %v2484 = vpop.permute.xlu0 %2483
        %2486 = vset.pattern.permute.xlu0 3
        %2487 = vperm.xlu0 %2486, %v1269
        %v2488 = vpop.permute.xlu0 %2487
        %2490 = vset.pattern.permute.xlu0 3
        %2491 = vperm.xlu0 %2490, %v1270
        %v2492 = vpop.permute.xlu0 %2491
        %2494 = vset.pattern.permute.xlu0 3
        %2495 = vperm.xlu0 %2494, %v1271
        %v2496 = vpop.permute.xlu0 %2495
        %2498 = vset.pattern.permute.xlu0 3
        %2499 = vperm.xlu0 %2498, %v1272
        %v2500 = vpop.permute.xlu0 %2499
        %2502 = vset.pattern.permute.xlu0 3
        %2503 = vperm.xlu0 %2502, %v1273
        %v2504 = vpop.permute.xlu0 %2503
        %2506 = vset.pattern.permute.xlu0 3
        %2507 = vperm.xlu0 %2506, %v1274
        %v2508 = vpop.permute.xlu0 %2507
        %2510 = vset.pattern.permute.xlu0 3
        %2511 = vperm.xlu0 %2510, %v1275
        %v2512 = vpop.permute.xlu0 %2511
        %2514 = vset.pattern.permute.xlu0 3
        %2515 = vperm.xlu0 %2514, %v1276
        %v2516 = vpop.permute.xlu0 %2515
        %v2518 = vlaneseq
        %v2519 = vshrl.u32 %v2518, 7
        %v2520 = vsub.s32 3, %v2519
        %v2521 = vrot.slane %v503, %v2520
        %v2522 = vlaneseq
        %v2523 = vshrl.u32 %v2522, 7
        %v2524 = vsub.s32 3, %v2523
        %v2525 = vrot.slane %v504, %v2524
        %v2526 = vmul.f32 %v2392, %v2521
        %v2527 = vmul.f32 %v2392, %v2525
        %v2528 = vmul.f32 %v2396, %v2521
        %v2529 = vmul.f32 %v2396, %v2525
        %v2530 = vmul.f32 %v2400, %v2521
        %v2531 = vmul.f32 %v2400, %v2525
        %v2532 = vmul.f32 %v2404, %v2521
        %v2533 = vmul.f32 %v2404, %v2525
        %v2534 = vmul.f32 %v2408, %v2521
        %v2535 = vmul.f32 %v2408, %v2525
        %v2536 = vmul.f32 %v2412, %v2521
        %v2537 = vmul.f32 %v2412, %v2525
        %v2538 = vmul.f32 %v2416, %v2521
        %v2539 = vmul.f32 %v2416, %v2525
        %v2540 = vmul.f32 %v2420, %v2521
        %v2541 = vmul.f32 %v2420, %v2525
        %v2542 = vmul.f32 %v2424, %v2521
        %v2543 = vmul.f32 %v2424, %v2525
        %v2544 = vmul.f32 %v2428, %v2521
        %v2545 = vmul.f32 %v2428, %v2525
        %v2546 = vmul.f32 %v2432, %v2521
        %v2547 = vmul.f32 %v2432, %v2525
        %v2548 = vmul.f32 %v2436, %v2521
        %v2549 = vmul.f32 %v2436, %v2525
        %v2550 = vmul.f32 %v2440, %v2521
        %v2551 = vmul.f32 %v2440, %v2525
        %v2552 = vmul.f32 %v2444, %v2521
        %v2553 = vmul.f32 %v2444, %v2525
        %v2554 = vmul.f32 %v2448, %v2521
        %v2555 = vmul.f32 %v2448, %v2525
        %v2556 = vmul.f32 %v2452, %v2521
        %v2557 = vmul.f32 %v2452, %v2525
        %v2558 = vmul.f32 %v2456, %v2521
        %v2559 = vmul.f32 %v2456, %v2525
        %v2560 = vmul.f32 %v2460, %v2521
        %v2561 = vmul.f32 %v2460, %v2525
        %v2562 = vmul.f32 %v2464, %v2521
        %v2563 = vmul.f32 %v2464, %v2525
        %v2564 = vmul.f32 %v2468, %v2521
        %v2565 = vmul.f32 %v2468, %v2525
        %v2566 = vmul.f32 %v2472, %v2521
        %v2567 = vmul.f32 %v2472, %v2525
        %v2568 = vmul.f32 %v2476, %v2521
        %v2569 = vmul.f32 %v2476, %v2525
        %v2570 = vmul.f32 %v2480, %v2521
        %v2571 = vmul.f32 %v2480, %v2525
        %v2572 = vmul.f32 %v2484, %v2521
        %v2573 = vmul.f32 %v2484, %v2525
        %v2574 = vmul.f32 %v2488, %v2521
        %v2575 = vmul.f32 %v2488, %v2525
        %v2576 = vmul.f32 %v2492, %v2521
        %v2577 = vmul.f32 %v2492, %v2525
        %v2578 = vmul.f32 %v2496, %v2521
        %v2579 = vmul.f32 %v2496, %v2525
        %v2580 = vmul.f32 %v2500, %v2521
        %v2581 = vmul.f32 %v2500, %v2525
        %v2582 = vmul.f32 %v2504, %v2521
        %v2583 = vmul.f32 %v2504, %v2525
        %v2584 = vmul.f32 %v2508, %v2521
        %v2585 = vmul.f32 %v2508, %v2525
        %v2586 = vmul.f32 %v2512, %v2521
        %v2587 = vmul.f32 %v2512, %v2525
        %v2588 = vmul.f32 %v2516, %v2521
        %v2589 = vmul.f32 %v2516, %v2525
        %v2590 = vadd.f32 %v2326, %v2526
        %v2591 = vadd.f32 %v2327, %v2527
        %v2592 = vadd.f32 %v2328, %v2528
        %v2593 = vadd.f32 %v2329, %v2529
        %v2594 = vadd.f32 %v2330, %v2530
        %v2595 = vadd.f32 %v2331, %v2531
        %v2596 = vadd.f32 %v2332, %v2532
        %v2597 = vadd.f32 %v2333, %v2533
        %v2598 = vadd.f32 %v2334, %v2534
        %v2599 = vadd.f32 %v2335, %v2535
        %v2600 = vadd.f32 %v2336, %v2536
        %v2601 = vadd.f32 %v2337, %v2537
        %v2602 = vadd.f32 %v2338, %v2538
        %v2603 = vadd.f32 %v2339, %v2539
        %v2604 = vadd.f32 %v2340, %v2540
        %v2605 = vadd.f32 %v2341, %v2541
        %v2606 = vadd.f32 %v2342, %v2542
        %v2607 = vadd.f32 %v2343, %v2543
        %v2608 = vadd.f32 %v2344, %v2544
        %v2609 = vadd.f32 %v2345, %v2545
        %v2610 = vadd.f32 %v2346, %v2546
        %v2611 = vadd.f32 %v2347, %v2547
        %v2612 = vadd.f32 %v2348, %v2548
        %v2613 = vadd.f32 %v2349, %v2549
        %v2614 = vadd.f32 %v2350, %v2550
        %v2615 = vadd.f32 %v2351, %v2551
        %v2616 = vadd.f32 %v2352, %v2552
        %v2617 = vadd.f32 %v2353, %v2553
        %v2618 = vadd.f32 %v2354, %v2554
        %v2619 = vadd.f32 %v2355, %v2555
        %v2620 = vadd.f32 %v2356, %v2556
        %v2621 = vadd.f32 %v2357, %v2557
        %v2622 = vadd.f32 %v2358, %v2558
        %v2623 = vadd.f32 %v2359, %v2559
        %v2624 = vadd.f32 %v2360, %v2560
        %v2625 = vadd.f32 %v2361, %v2561
        %v2626 = vadd.f32 %v2362, %v2562
        %v2627 = vadd.f32 %v2363, %v2563
        %v2628 = vadd.f32 %v2364, %v2564
        %v2629 = vadd.f32 %v2365, %v2565
        %v2630 = vadd.f32 %v2366, %v2566
        %v2631 = vadd.f32 %v2367, %v2567
        %v2632 = vadd.f32 %v2368, %v2568
        %v2633 = vadd.f32 %v2369, %v2569
        %v2634 = vadd.f32 %v2370, %v2570
        %v2635 = vadd.f32 %v2371, %v2571
        %v2636 = vadd.f32 %v2372, %v2572
        %v2637 = vadd.f32 %v2373, %v2573
        %v2638 = vadd.f32 %v2374, %v2574
        %v2639 = vadd.f32 %v2375, %v2575
        %v2640 = vadd.f32 %v2376, %v2576
        %v2641 = vadd.f32 %v2377, %v2577
        %v2642 = vadd.f32 %v2378, %v2578
        %v2643 = vadd.f32 %v2379, %v2579
        %v2644 = vadd.f32 %v2380, %v2580
        %v2645 = vadd.f32 %v2381, %v2581
        %v2646 = vadd.f32 %v2382, %v2582
        %v2647 = vadd.f32 %v2383, %v2583
        %v2648 = vadd.f32 %v2384, %v2584
        %v2649 = vadd.f32 %v2385, %v2585
        %v2650 = vadd.f32 %v2386, %v2586
        %v2651 = vadd.f32 %v2387, %v2587
        %v2652 = vadd.f32 %v2388, %v2588
        %v2653 = vadd.f32 %v2389, %v2589
        %v2654 = vld [vmem:[#allocation12] sm:$0xff]
        %v2655 = vld [vmem:[#allocation12 + $0x8] sm:$0xff]
        %v2656 = vld [vmem:[#allocation12 + $0x10] sm:$0xff]
        %v2657 = vld [vmem:[#allocation12 + $0x18] sm:$0xff]
        %v2658 = vld [vmem:[#allocation12 + $0x20] sm:$0xff]
        %v2659 = vld [vmem:[#allocation12 + $0x28] sm:$0xff]
        %v2660 = vld [vmem:[#allocation12 + $0x30] sm:$0xff]
        %v2661 = vld [vmem:[#allocation12 + $0x38] sm:$0xff]
        %v2662 = vld [vmem:[#allocation12 + $0x40] sm:$0xff]
        %v2663 = vld [vmem:[#allocation12 + $0x48] sm:$0xff]
        %v2664 = vld [vmem:[#allocation12 + $0x50] sm:$0xff]
        %v2665 = vld [vmem:[#allocation12 + $0x58] sm:$0xff]
        %v2666 = vld [vmem:[#allocation12 + $0x60] sm:$0xff]
        %v2667 = vld [vmem:[#allocation12 + $0x68] sm:$0xff]
        %v2668 = vld [vmem:[#allocation12 + $0x70] sm:$0xff]
        %v2669 = vld [vmem:[#allocation12 + $0x78] sm:$0xff]
        %v2670 = vld [vmem:[#allocation12 + $0x80] sm:$0xff]
        %v2671 = vld [vmem:[#allocation12 + $0x88] sm:$0xff]
        %v2672 = vld [vmem:[#allocation12 + $0x90] sm:$0xff]
        %v2673 = vld [vmem:[#allocation12 + $0x98] sm:$0xff]
        %v2674 = vld [vmem:[#allocation12 + $0xa0] sm:$0xff]
        %v2675 = vld [vmem:[#allocation12 + $0xa8] sm:$0xff]
        %v2676 = vld [vmem:[#allocation12 + $0xb0] sm:$0xff]
        %v2677 = vld [vmem:[#allocation12 + $0xb8] sm:$0xff]
        %v2678 = vld [vmem:[#allocation12 + $0xc0] sm:$0xff]
        %v2679 = vld [vmem:[#allocation12 + $0xc8] sm:$0xff]
        %v2680 = vld [vmem:[#allocation12 + $0xd0] sm:$0xff]
        %v2681 = vld [vmem:[#allocation12 + $0xd8] sm:$0xff]
        %v2682 = vld [vmem:[#allocation12 + $0xe0] sm:$0xff]
        %v2683 = vld [vmem:[#allocation12 + $0xe8] sm:$0xff]
        %v2684 = vld [vmem:[#allocation12 + $0xf0] sm:$0xff]
        %v2685 = vld [vmem:[#allocation12 + $0xf8] sm:$0xff]
        %2687 = vset.pattern.permute.xlu0 0
        %2688 = vperm.xlu0 %2687, %v2654
        %v2689 = vpop.permute.xlu0 %2688
        %2692 = vset.pattern.permute.xlu0 0
        %2693 = vperm.xlu0 %2692, %v2655
        %v2694 = vpop.permute.xlu0 %2693
        %2697 = vset.pattern.permute.xlu0 0
        %2698 = vperm.xlu0 %2697, %v2656
        %v2699 = vpop.permute.xlu0 %2698
        %2702 = vset.pattern.permute.xlu0 0
        %2703 = vperm.xlu0 %2702, %v2657
        %v2704 = vpop.permute.xlu0 %2703
        %2707 = vset.pattern.permute.xlu0 0
        %2708 = vperm.xlu0 %2707, %v2658
        %v2709 = vpop.permute.xlu0 %2708
        %2712 = vset.pattern.permute.xlu0 0
        %2713 = vperm.xlu0 %2712, %v2659
        %v2714 = vpop.permute.xlu0 %2713
        %2717 = vset.pattern.permute.xlu0 0
        %2718 = vperm.xlu0 %2717, %v2660
        %v2719 = vpop.permute.xlu0 %2718
        %2722 = vset.pattern.permute.xlu0 0
        %2723 = vperm.xlu0 %2722, %v2661
        %v2724 = vpop.permute.xlu0 %2723
        %2727 = vset.pattern.permute.xlu0 0
        %2728 = vperm.xlu0 %2727, %v2662
        %v2729 = vpop.permute.xlu0 %2728
        %2732 = vset.pattern.permute.xlu0 0
        %2733 = vperm.xlu0 %2732, %v2663
        %v2734 = vpop.permute.xlu0 %2733
        %2737 = vset.pattern.permute.xlu0 0
        %2738 = vperm.xlu0 %2737, %v2664
        %v2739 = vpop.permute.xlu0 %2738
        %2742 = vset.pattern.permute.xlu0 0
        %2743 = vperm.xlu0 %2742, %v2665
        %v2744 = vpop.permute.xlu0 %2743
        %2747 = vset.pattern.permute.xlu0 0
        %2748 = vperm.xlu0 %2747, %v2666
        %v2749 = vpop.permute.xlu0 %2748
        %2752 = vset.pattern.permute.xlu0 0
        %2753 = vperm.xlu0 %2752, %v2667
        %v2754 = vpop.permute.xlu0 %2753
        %2757 = vset.pattern.permute.xlu0 0
        %2758 = vperm.xlu0 %2757, %v2668
        %v2759 = vpop.permute.xlu0 %2758
        %2762 = vset.pattern.permute.xlu0 0
        %2763 = vperm.xlu0 %2762, %v2669
        %v2764 = vpop.permute.xlu0 %2763
        %2767 = vset.pattern.permute.xlu0 0
        %2768 = vperm.xlu0 %2767, %v2670
        %v2769 = vpop.permute.xlu0 %2768
        %2772 = vset.pattern.permute.xlu0 0
        %2773 = vperm.xlu0 %2772, %v2671
        %v2774 = vpop.permute.xlu0 %2773
        %2777 = vset.pattern.permute.xlu0 0
        %2778 = vperm.xlu0 %2777, %v2672
        %v2779 = vpop.permute.xlu0 %2778
        %2782 = vset.pattern.permute.xlu0 0
        %2783 = vperm.xlu0 %2782, %v2673
        %v2784 = vpop.permute.xlu0 %2783
        %2787 = vset.pattern.permute.xlu0 0
        %2788 = vperm.xlu0 %2787, %v2674
        %v2789 = vpop.permute.xlu0 %2788
        %2792 = vset.pattern.permute.xlu0 0
        %2793 = vperm.xlu0 %2792, %v2675
        %v2794 = vpop.permute.xlu0 %2793
        %2797 = vset.pattern.permute.xlu0 0
        %2798 = vperm.xlu0 %2797, %v2676
        %v2799 = vpop.permute.xlu0 %2798
        %2802 = vset.pattern.permute.xlu0 0
        %2803 = vperm.xlu0 %2802, %v2677
        %v2804 = vpop.permute.xlu0 %2803
        %2807 = vset.pattern.permute.xlu0 0
        %2808 = vperm.xlu0 %2807, %v2678
        %v2809 = vpop.permute.xlu0 %2808
        %2812 = vset.pattern.permute.xlu0 0
        %2813 = vperm.xlu0 %2812, %v2679
        %v2814 = vpop.permute.xlu0 %2813
        %2817 = vset.pattern.permute.xlu0 0
        %2818 = vperm.xlu0 %2817, %v2680
        %v2819 = vpop.permute.xlu0 %2818
        %2822 = vset.pattern.permute.xlu0 0
        %2823 = vperm.xlu0 %2822, %v2681
        %v2824 = vpop.permute.xlu0 %2823
        %2827 = vset.pattern.permute.xlu0 0
        %2828 = vperm.xlu0 %2827, %v2682
        %v2829 = vpop.permute.xlu0 %2828
        %2832 = vset.pattern.permute.xlu0 0
        %2833 = vperm.xlu0 %2832, %v2683
        %v2834 = vpop.permute.xlu0 %2833
        %2837 = vset.pattern.permute.xlu0 0
        %2838 = vperm.xlu0 %2837, %v2684
        %v2839 = vpop.permute.xlu0 %2838
        %2842 = vset.pattern.permute.xlu0 0
        %2843 = vperm.xlu0 %2842, %v2685
        %v2844 = vpop.permute.xlu0 %2843
        %v2846 = vadd.f32 %v2590, %v2689
        %v2847 = vadd.f32 %v2591, %v2689
        %v2848 = vadd.f32 %v2592, %v2694
        %v2849 = vadd.f32 %v2593, %v2694
        %v2850 = vadd.f32 %v2594, %v2699
        %v2851 = vadd.f32 %v2595, %v2699
        %v2852 = vadd.f32 %v2596, %v2704
        %v2853 = vadd.f32 %v2597, %v2704
        %v2854 = vadd.f32 %v2598, %v2709
        %v2855 = vadd.f32 %v2599, %v2709
        %v2856 = vadd.f32 %v2600, %v2714
        %v2857 = vadd.f32 %v2601, %v2714
        %v2858 = vadd.f32 %v2602, %v2719
        %v2859 = vadd.f32 %v2603, %v2719
        %v2860 = vadd.f32 %v2604, %v2724
        %v2861 = vadd.f32 %v2605, %v2724
        %v2862 = vadd.f32 %v2606, %v2729
        %v2863 = vadd.f32 %v2607, %v2729
        %v2864 = vadd.f32 %v2608, %v2734
        %v2865 = vadd.f32 %v2609, %v2734
        %v2866 = vadd.f32 %v2610, %v2739
        %v2867 = vadd.f32 %v2611, %v2739
        %v2868 = vadd.f32 %v2612, %v2744
        %v2869 = vadd.f32 %v2613, %v2744
        %v2870 = vadd.f32 %v2614, %v2749
        %v2871 = vadd.f32 %v2615, %v2749
        %v2872 = vadd.f32 %v2616, %v2754
        %v2873 = vadd.f32 %v2617, %v2754
        %v2874 = vadd.f32 %v2618, %v2759
        %v2875 = vadd.f32 %v2619, %v2759
        %v2876 = vadd.f32 %v2620, %v2764
        %v2877 = vadd.f32 %v2621, %v2764
        %v2878 = vadd.f32 %v2622, %v2769
        %v2879 = vadd.f32 %v2623, %v2769
        %v2880 = vadd.f32 %v2624, %v2774
        %v2881 = vadd.f32 %v2625, %v2774
        %v2882 = vadd.f32 %v2626, %v2779
        %v2883 = vadd.f32 %v2627, %v2779
        %v2884 = vadd.f32 %v2628, %v2784
        %v2885 = vadd.f32 %v2629, %v2784
        %v2886 = vadd.f32 %v2630, %v2789
        %v2887 = vadd.f32 %v2631, %v2789
        %v2888 = vadd.f32 %v2632, %v2794
        %v2889 = vadd.f32 %v2633, %v2794
        %v2890 = vadd.f32 %v2634, %v2799
        %v2891 = vadd.f32 %v2635, %v2799
        %v2892 = vadd.f32 %v2636, %v2804
        %v2893 = vadd.f32 %v2637, %v2804
        %v2894 = vadd.f32 %v2638, %v2809
        %v2895 = vadd.f32 %v2639, %v2809
        %v2896 = vadd.f32 %v2640, %v2814
        %v2897 = vadd.f32 %v2641, %v2814
        %v2898 = vadd.f32 %v2642, %v2819
        %v2899 = vadd.f32 %v2643, %v2819
        %v2900 = vadd.f32 %v2644, %v2824
        %v2901 = vadd.f32 %v2645, %v2824
        %v2902 = vadd.f32 %v2646, %v2829
        %v2903 = vadd.f32 %v2647, %v2829
        %v2904 = vadd.f32 %v2648, %v2834
        %v2905 = vadd.f32 %v2649, %v2834
        %v2906 = vadd.f32 %v2650, %v2839
        %v2907 = vadd.f32 %v2651, %v2839
        %v2908 = vadd.f32 %v2652, %v2844
        %v2909 = vadd.f32 %v2653, %v2844
        %v2910 = vmul.f32 %v2846, 0.01
        %v2911 = vmul.f32 %v2847, 0.01
        %v2912 = vmul.f32 %v2848, 0.01
        %v2913 = vmul.f32 %v2849, 0.01
        %v2914 = vmul.f32 %v2850, 0.01
        %v2915 = vmul.f32 %v2851, 0.01
        %v2916 = vmul.f32 %v2852, 0.01
        %v2917 = vmul.f32 %v2853, 0.01
        %v2918 = vmul.f32 %v2854, 0.01
        %v2919 = vmul.f32 %v2855, 0.01
        %v2920 = vmul.f32 %v2856, 0.01
        %v2921 = vmul.f32 %v2857, 0.01
        %v2922 = vmul.f32 %v2858, 0.01
        %v2923 = vmul.f32 %v2859, 0.01
        %v2924 = vmul.f32 %v2860, 0.01
        %v2925 = vmul.f32 %v2861, 0.01
        %v2926 = vmul.f32 %v2862, 0.01
        %v2927 = vmul.f32 %v2863, 0.01
        %v2928 = vmul.f32 %v2864, 0.01
        %v2929 = vmul.f32 %v2865, 0.01
        %v2930 = vmul.f32 %v2866, 0.01
        %v2931 = vmul.f32 %v2867, 0.01
        %v2932 = vmul.f32 %v2868, 0.01
        %v2933 = vmul.f32 %v2869, 0.01
        %v2934 = vmul.f32 %v2870, 0.01
        %v2935 = vmul.f32 %v2871, 0.01
        %v2936 = vmul.f32 %v2872, 0.01
        %v2937 = vmul.f32 %v2873, 0.01
        %v2938 = vmul.f32 %v2874, 0.01
        %v2939 = vmul.f32 %v2875, 0.01
        %v2940 = vmul.f32 %v2876, 0.01
        %v2941 = vmul.f32 %v2877, 0.01
        %v2942 = vmul.f32 %v2878, 0.01
        %v2943 = vmul.f32 %v2879, 0.01
        %v2944 = vmul.f32 %v2880, 0.01
        %v2945 = vmul.f32 %v2881, 0.01
        %v2946 = vmul.f32 %v2882, 0.01
        %v2947 = vmul.f32 %v2883, 0.01
        %v2948 = vmul.f32 %v2884, 0.01
        %v2949 = vmul.f32 %v2885, 0.01
        %v2950 = vmul.f32 %v2886, 0.01
        %v2951 = vmul.f32 %v2887, 0.01
        %v2952 = vmul.f32 %v2888, 0.01
        %v2953 = vmul.f32 %v2889, 0.01
        %v2954 = vmul.f32 %v2890, 0.01
        %v2955 = vmul.f32 %v2891, 0.01
        %v2956 = vmul.f32 %v2892, 0.01
        %v2957 = vmul.f32 %v2893, 0.01
        %v2958 = vmul.f32 %v2894, 0.01
        %v2959 = vmul.f32 %v2895, 0.01
        %v2960 = vmul.f32 %v2896, 0.01
        %v2961 = vmul.f32 %v2897, 0.01
        %v2962 = vmul.f32 %v2898, 0.01
        %v2963 = vmul.f32 %v2899, 0.01
        %v2964 = vmul.f32 %v2900, 0.01
        %v2965 = vmul.f32 %v2901, 0.01
        %v2966 = vmul.f32 %v2902, 0.01
        %v2967 = vmul.f32 %v2903, 0.01
        %v2968 = vmul.f32 %v2904, 0.01
        %v2969 = vmul.f32 %v2905, 0.01
        %v2970 = vmul.f32 %v2906, 0.01
        %v2971 = vmul.f32 %v2907, 0.01
        %v2972 = vmul.f32 %v2908, 0.01
        %v2973 = vmul.f32 %v2909, 0.01
        %v2974 = vmax.f32 %v2846, %v2910
        %v2975 = vmax.f32 %v2847, %v2911
        %v2976 = vmax.f32 %v2848, %v2912
        %v2977 = vmax.f32 %v2849, %v2913
        %v2978 = vmax.f32 %v2850, %v2914
        %v2979 = vmax.f32 %v2851, %v2915
        %v2980 = vmax.f32 %v2852, %v2916
        %v2981 = vmax.f32 %v2853, %v2917
        %v2982 = vmax.f32 %v2854, %v2918
        %v2983 = vmax.f32 %v2855, %v2919
        %v2984 = vmax.f32 %v2856, %v2920
        %v2985 = vmax.f32 %v2857, %v2921
        %v2986 = vmax.f32 %v2858, %v2922
        %v2987 = vmax.f32 %v2859, %v2923
        %v2988 = vmax.f32 %v2860, %v2924
        %v2989 = vmax.f32 %v2861, %v2925
        %v2990 = vmax.f32 %v2862, %v2926
        %v2991 = vmax.f32 %v2863, %v2927
        %v2992 = vmax.f32 %v2864, %v2928
        %v2993 = vmax.f32 %v2865, %v2929
        %v2994 = vmax.f32 %v2866, %v2930
        %v2995 = vmax.f32 %v2867, %v2931
        %v2996 = vmax.f32 %v2868, %v2932
        %v2997 = vmax.f32 %v2869, %v2933
        %v2998 = vmax.f32 %v2870, %v2934
        %v2999 = vmax.f32 %v2871, %v2935
        %v3000 = vmax.f32 %v2872, %v2936
        %v3001 = vmax.f32 %v2873, %v2937
        %v3002 = vmax.f32 %v2874, %v2938
        %v3003 = vmax.f32 %v2875, %v2939
        %v3004 = vmax.f32 %v2876, %v2940
        %v3005 = vmax.f32 %v2877, %v2941
        %v3006 = vmax.f32 %v2878, %v2942
        %v3007 = vmax.f32 %v2879, %v2943
        %v3008 = vmax.f32 %v2880, %v2944
        %v3009 = vmax.f32 %v2881, %v2945
        %v3010 = vmax.f32 %v2882, %v2946
        %v3011 = vmax.f32 %v2883, %v2947
        %v3012 = vmax.f32 %v2884, %v2948
        %v3013 = vmax.f32 %v2885, %v2949
        %v3014 = vmax.f32 %v2886, %v2950
        %v3015 = vmax.f32 %v2887, %v2951
        %v3016 = vmax.f32 %v2888, %v2952
        %v3017 = vmax.f32 %v2889, %v2953
        %v3018 = vmax.f32 %v2890, %v2954
        %v3019 = vmax.f32 %v2891, %v2955
        %v3020 = vmax.f32 %v2892, %v2956
        %v3021 = vmax.f32 %v2893, %v2957
        %v3022 = vmax.f32 %v2894, %v2958
        %v3023 = vmax.f32 %v2895, %v2959
        %v3024 = vmax.f32 %v2896, %v2960
        %v3025 = vmax.f32 %v2897, %v2961
        %v3026 = vmax.f32 %v2898, %v2962
        %v3027 = vmax.f32 %v2899, %v2963
        %v3028 = vmax.f32 %v2900, %v2964
        %v3029 = vmax.f32 %v2901, %v2965
        %v3030 = vmax.f32 %v2902, %v2966
        %v3031 = vmax.f32 %v2903, %v2967
        %v3032 = vmax.f32 %v2904, %v2968
        %v3033 = vmax.f32 %v2905, %v2969
        %v3034 = vmax.f32 %v2906, %v2970
        %v3035 = vmax.f32 %v2907, %v2971
        %v3036 = vmax.f32 %v2908, %v2972
        %v3037 = vmax.f32 %v2909, %v2973
        %v3038 = vld [vmem:[#allocation14] sm:$0xff]
        %v3039 = vld [vmem:[#allocation14 + $0x8] sm:$0xff]
        %v3040 = vld [vmem:[#allocation14 + $0x10] sm:$0xff]
        %v3041 = vld [vmem:[#allocation14 + $0x18] sm:$0xff]
        %v3042 = vld [vmem:[#allocation14 + $0x20] sm:$0xff]
        %v3043 = vld [vmem:[#allocation14 + $0x28] sm:$0xff]
        %v3044 = vld [vmem:[#allocation14 + $0x30] sm:$0xff]
        %v3045 = vld [vmem:[#allocation14 + $0x38] sm:$0xff]
        %v3046 = vld [vmem:[#allocation14 + $0x40] sm:$0xff]
        %v3047 = vld [vmem:[#allocation14 + $0x48] sm:$0xff]
        %v3048 = vld [vmem:[#allocation14 + $0x50] sm:$0xff]
        %v3049 = vld [vmem:[#allocation14 + $0x58] sm:$0xff]
        %v3050 = vld [vmem:[#allocation14 + $0x60] sm:$0xff]
        %v3051 = vld [vmem:[#allocation14 + $0x68] sm:$0xff]
        %v3052 = vld [vmem:[#allocation14 + $0x70] sm:$0xff]
        %v3053 = vld [vmem:[#allocation14 + $0x78] sm:$0xff]
        %v3054 = vpack.c.bf16 %v2976, %v2974
        %v3055 = vpack.c.bf16 %v2977, %v2975
        %v3056 = vpack.c.bf16 %v2980, %v2978
        %v3057 = vpack.c.bf16 %v2981, %v2979
        %v3058 = vpack.c.bf16 %v2984, %v2982
        %v3059 = vpack.c.bf16 %v2985, %v2983
        %v3060 = vpack.c.bf16 %v2988, %v2986
        %v3061 = vpack.c.bf16 %v2989, %v2987
        %v3062 = vpack.c.bf16 %v2992, %v2990
        %v3063 = vpack.c.bf16 %v2993, %v2991
        %v3064 = vpack.c.bf16 %v2996, %v2994
        %v3065 = vpack.c.bf16 %v2997, %v2995
        %v3066 = vpack.c.bf16 %v3000, %v2998
        %v3067 = vpack.c.bf16 %v3001, %v2999
        %v3068 = vpack.c.bf16 %v3004, %v3002
        %v3069 = vpack.c.bf16 %v3005, %v3003
        %v3070 = vpack.c.bf16 %v3008, %v3006
        %v3071 = vpack.c.bf16 %v3009, %v3007
        %v3072 = vpack.c.bf16 %v3012, %v3010
        %v3073 = vpack.c.bf16 %v3013, %v3011
        %v3074 = vpack.c.bf16 %v3016, %v3014
        %v3075 = vpack.c.bf16 %v3017, %v3015
        %v3076 = vpack.c.bf16 %v3020, %v3018
        %v3077 = vpack.c.bf16 %v3021, %v3019
        %v3078 = vpack.c.bf16 %v3024, %v3022
        %v3079 = vpack.c.bf16 %v3025, %v3023
        %v3080 = vpack.c.bf16 %v3028, %v3026
        %v3081 = vpack.c.bf16 %v3029, %v3027
        %v3082 = vpack.c.bf16 %v3032, %v3030
        %v3083 = vpack.c.bf16 %v3033, %v3031
        %v3084 = vpack.c.bf16 %v3036, %v3034
        %v3085 = vpack.c.bf16 %v3037, %v3035
        %v3086 = vld [vmem:[#allocation15] sm:$0xff]
        %v3087 = vld [vmem:[#allocation15 + $0x8] sm:$0xff]
        %v3088 = vld [vmem:[#allocation15 + $0x10] sm:$0xff]
        %v3089 = vld [vmem:[#allocation15 + $0x18] sm:$0xff]
        %v3090 = vld [vmem:[#allocation15 + $0x20] sm:$0xff]
        %v3091 = vld [vmem:[#allocation15 + $0x28] sm:$0xff]
        %v3092 = vld [vmem:[#allocation15 + $0x30] sm:$0xff]
        %v3093 = vld [vmem:[#allocation15 + $0x38] sm:$0xff]
        %v3094 = vld [vmem:[#allocation15 + $0x40] sm:$0xff]
        %v3095 = vld [vmem:[#allocation15 + $0x48] sm:$0xff]
        %v3096 = vld [vmem:[#allocation15 + $0x50] sm:$0xff]
        %v3097 = vld [vmem:[#allocation15 + $0x58] sm:$0xff]
        %v3098 = vld [vmem:[#allocation15 + $0x60] sm:$0xff]
        %v3099 = vld [vmem:[#allocation15 + $0x68] sm:$0xff]
        %v3100 = vld [vmem:[#allocation15 + $0x70] sm:$0xff]
        %v3101 = vld [vmem:[#allocation15 + $0x78] sm:$0xff]
        %3103 = vset.pattern.permute.xlu0 0
        %3104 = vperm.xlu0 %3103, %v3086
        %v3105 = vpop.permute.xlu0 %3104
        %3108 = vset.pattern.permute.xlu0 0
        %3109 = vperm.xlu0 %3108, %v3087
        %v3110 = vpop.permute.xlu0 %3109
        %3113 = vset.pattern.permute.xlu0 0
        %3114 = vperm.xlu0 %3113, %v3088
        %v3115 = vpop.permute.xlu0 %3114
        %3118 = vset.pattern.permute.xlu0 0
        %3119 = vperm.xlu0 %3118, %v3089
        %v3120 = vpop.permute.xlu0 %3119
        %3123 = vset.pattern.permute.xlu0 0
        %3124 = vperm.xlu0 %3123, %v3090
        %v3125 = vpop.permute.xlu0 %3124
        %3128 = vset.pattern.permute.xlu0 0
        %3129 = vperm.xlu0 %3128, %v3091
        %v3130 = vpop.permute.xlu0 %3129
        %3133 = vset.pattern.permute.xlu0 0
        %3134 = vperm.xlu0 %3133, %v3092
        %v3135 = vpop.permute.xlu0 %3134
        %3138 = vset.pattern.permute.xlu0 0
        %3139 = vperm.xlu0 %3138, %v3093
        %v3140 = vpop.permute.xlu0 %3139
        %3143 = vset.pattern.permute.xlu0 0
        %3144 = vperm.xlu0 %3143, %v3094
        %v3145 = vpop.permute.xlu0 %3144
        %3148 = vset.pattern.permute.xlu0 0
        %3149 = vperm.xlu0 %3148, %v3095
        %v3150 = vpop.permute.xlu0 %3149
        %3153 = vset.pattern.permute.xlu0 0
        %3154 = vperm.xlu0 %3153, %v3096
        %v3155 = vpop.permute.xlu0 %3154
        %3158 = vset.pattern.permute.xlu0 0
        %3159 = vperm.xlu0 %3158, %v3097
        %v3160 = vpop.permute.xlu0 %3159
        %3163 = vset.pattern.permute.xlu0 0
        %3164 = vperm.xlu0 %3163, %v3098
        %v3165 = vpop.permute.xlu0 %3164
        %3168 = vset.pattern.permute.xlu0 0
        %3169 = vperm.xlu0 %3168, %v3099
        %v3170 = vpop.permute.xlu0 %3169
        %3173 = vset.pattern.permute.xlu0 0
        %3174 = vperm.xlu0 %3173, %v3100
        %v3175 = vpop.permute.xlu0 %3174
        %3178 = vset.pattern.permute.xlu0 0
        %3179 = vperm.xlu0 %3178, %v3101
        %v3180 = vpop.permute.xlu0 %3179
        %v3198 = vunpack.c.l.b16 %v3038
        %v3199 = vunpack.c.h.b16 %v3038
        %v3200 = vunpack.c.l.b16 %v3039
        %v3201 = vunpack.c.h.b16 %v3039
        %v3202 = vunpack.c.l.b16 %v3040
        %v3203 = vunpack.c.h.b16 %v3040
        %v3204 = vunpack.c.l.b16 %v3041
        %v3205 = vunpack.c.h.b16 %v3041
        %v3206 = vunpack.c.l.b16 %v3042
        %v3207 = vunpack.c.h.b16 %v3042
        %v3208 = vunpack.c.l.b16 %v3043
        %v3209 = vunpack.c.h.b16 %v3043
        %v3210 = vunpack.c.l.b16 %v3044
        %v3211 = vunpack.c.h.b16 %v3044
        %v3212 = vunpack.c.l.b16 %v3045
        %v3213 = vunpack.c.h.b16 %v3045
        %v3214 = vunpack.c.l.b16 %v3046
        %v3215 = vunpack.c.h.b16 %v3046
        %v3216 = vunpack.c.l.b16 %v3047
        %v3217 = vunpack.c.h.b16 %v3047
        %v3218 = vunpack.c.l.b16 %v3048
        %v3219 = vunpack.c.h.b16 %v3048
        %v3220 = vunpack.c.l.b16 %v3049
        %v3221 = vunpack.c.h.b16 %v3049
        %v3222 = vunpack.c.l.b16 %v3050
        %v3223 = vunpack.c.h.b16 %v3050
        %v3224 = vunpack.c.l.b16 %v3051
        %v3225 = vunpack.c.h.b16 %v3051
        %v3226 = vunpack.c.l.b16 %v3052
        %v3227 = vunpack.c.h.b16 %v3052
        %v3228 = vunpack.c.l.b16 %v3053
        %v3229 = vunpack.c.h.b16 %v3053
        %v3230 = vpack.c.b16 %v3200, %v3198
        %v3231 = vpack.c.b16 %v3201, %v3199
        %v3232 = vpack.c.b16 %v3204, %v3202
        %v3233 = vpack.c.b16 %v3205, %v3203
        %v3234 = vpack.c.b16 %v3208, %v3206
        %v3235 = vpack.c.b16 %v3209, %v3207
        %v3236 = vpack.c.b16 %v3212, %v3210
        %v3237 = vpack.c.b16 %v3213, %v3211
        %v3238 = vpack.c.b16 %v3216, %v3214
        %v3239 = vpack.c.b16 %v3217, %v3215
        %v3240 = vpack.c.b16 %v3220, %v3218
        %v3241 = vpack.c.b16 %v3221, %v3219
        %v3242 = vpack.c.b16 %v3224, %v3222
        %v3243 = vpack.c.b16 %v3225, %v3223
        %v3244 = vpack.c.b16 %v3228, %v3226
        %v3245 = vpack.c.b16 %v3229, %v3227
        %3262 = vmatprep.subr.bf16.mxu0 %v3055
        %3263 = vmatpush1.bf16.msra.mxu0 %v3054
        %3264 = vmatprep.subr.bf16.mxu0 %v3057
        %3265 = vmatpush1.bf16.msra.mxu0 %v3056
        %3266 = vmatprep.subr.bf16.mxu0 %v3059
        %3267 = vmatpush1.bf16.msra.mxu0 %v3058
        %3268 = vmatprep.subr.bf16.mxu0 %v3061
        %3269 = vmatpush1.bf16.msra.mxu0 %v3060
        %3270 = vmatprep.subr.bf16.mxu0 %v3063
        %3271 = vmatpush1.bf16.msra.mxu0 %v3062
        %3272 = vmatprep.subr.bf16.mxu0 %v3065
        %3273 = vmatpush1.bf16.msra.mxu0 %v3064
        %3274 = vmatprep.subr.bf16.mxu0 %v3067
        %3275 = vmatpush1.bf16.msra.mxu0 %v3066
        %3276 = vmatprep.subr.bf16.mxu0 %v3069
        %3277 = vmatpush1.bf16.msra.mxu0 %v3068
        %3278 = vmatprep.subr.bf16.mxu0 %v3071
        %3279 = vmatpush1.bf16.msra.mxu0 %v3070
        %3280 = vmatprep.subr.bf16.mxu0 %v3073
        %3281 = vmatpush1.bf16.msra.mxu0 %v3072
        %3282 = vmatprep.subr.bf16.mxu0 %v3075
        %3283 = vmatpush1.bf16.msra.mxu0 %v3074
        %3284 = vmatprep.subr.bf16.mxu0 %v3077
        %3285 = vmatpush1.bf16.msra.mxu0 %v3076
        %3286 = vmatprep.subr.bf16.mxu0 %v3079
        %3287 = vmatpush1.bf16.msra.mxu0 %v3078
        %3288 = vmatprep.subr.bf16.mxu0 %v3081
        %3289 = vmatpush1.bf16.msra.mxu0 %v3080
        %3290 = vmatprep.subr.bf16.mxu0 %v3083
        %3291 = vmatpush1.bf16.msra.mxu0 %v3082
        %3292 = vmatprep.subr.bf16.mxu0 %v3085
        %3293 = vmatpush1.bf16.msra.mxu0 %v3084
        %3294 = vmatprep.mubr.bf16.mxu0 %v3231
        %3295 = vmatmul.mubr.bf16.gmra.mrb[0].mxu0 %v3230
        %v3296 = vpop.f32.mrb[0].mxu0
        %v3297 = vadd.f32 %v3105, %v3296
        %v3298 = vpop.f32.mrb[0].mxu0
        %v3299 = vadd.f32 %v3105, %v3298
        %v3300 = vpop.f32.mrb[0].mxu0
        %v3301 = vadd.f32 %v3110, %v3300
        %v3302 = vpop.f32.mrb[0].mxu0
        %v3303 = vadd.f32 %v3110, %v3302
        %3304 = vmatprep.mubr.bf16.mxu0 %v3233
        %3305 = vmatmul.mubr.bf16.gmra.mrb[0].mxu0 %v3232
        %v3306 = vpop.f32.mrb[0].mxu0
        %v3307 = vadd.f32 %v3115, %v3306
        %v3308 = vpop.f32.mrb[0].mxu0
        %v3309 = vadd.f32 %v3115, %v3308
        %v3310 = vpop.f32.mrb[0].mxu0
        %v3311 = vadd.f32 %v3120, %v3310
        %v3312 = vpop.f32.mrb[0].mxu0
        %v3313 = vadd.f32 %v3120, %v3312
        %3314 = vmatprep.mubr.bf16.mxu0 %v3235
        %3315 = vmatmul.mubr.bf16.gmra.mrb[0].mxu0 %v3234
        %v3316 = vpop.f32.mrb[0].mxu0
        %v3317 = vadd.f32 %v3125, %v3316
        %v3318 = vpop.f32.mrb[0].mxu0
        %v3319 = vadd.f32 %v3125, %v3318
        %v3320 = vpop.f32.mrb[0].mxu0
        %v3321 = vadd.f32 %v3130, %v3320
        %v3322 = vpop.f32.mrb[0].mxu0
        %v3323 = vadd.f32 %v3130, %v3322
        %3324 = vmatprep.mubr.bf16.mxu0 %v3237
        %3325 = vmatmul.mubr.bf16.gmra.mrb[0].mxu0 %v3236
        %v3326 = vpop.f32.mrb[0].mxu0
        %v3327 = vadd.f32 %v3135, %v3326
        %v3328 = vpop.f32.mrb[0].mxu0
        %v3329 = vadd.f32 %v3135, %v3328
        %v3330 = vpop.f32.mrb[0].mxu0
        %v3331 = vadd.f32 %v3140, %v3330
        %v3332 = vpop.f32.mrb[0].mxu0
        %v3333 = vadd.f32 %v3140, %v3332
        %3334 = vmatprep.mubr.bf16.mxu0 %v3239
        %3335 = vmatmul.mubr.bf16.gmra.mrb[0].mxu0 %v3238
        %v3336 = vpop.f32.mrb[0].mxu0
        %v3337 = vadd.f32 %v3145, %v3336
        %v3338 = vpop.f32.mrb[0].mxu0
        %v3339 = vadd.f32 %v3145, %v3338
        %v3340 = vpop.f32.mrb[0].mxu0
        %v3341 = vadd.f32 %v3150, %v3340
        %v3342 = vpop.f32.mrb[0].mxu0
        %v3343 = vadd.f32 %v3150, %v3342
        %3344 = vmatprep.mubr.bf16.mxu0 %v3241
        %3345 = vmatmul.mubr.bf16.gmra.mrb[0].mxu0 %v3240
        %v3346 = vpop.f32.mrb[0].mxu0
        %v3347 = vadd.f32 %v3155, %v3346
        %v3348 = vpop.f32.mrb[0].mxu0
        %v3349 = vadd.f32 %v3155, %v3348
        %v3350 = vpop.f32.mrb[0].mxu0
        %v3351 = vadd.f32 %v3160, %v3350
        %v3352 = vpop.f32.mrb[0].mxu0
        %v3353 = vadd.f32 %v3160, %v3352
        %3354 = vmatprep.mubr.bf16.mxu0 %v3243
        %3355 = vmatmul.mubr.bf16.gmra.mrb[0].mxu0 %v3242
        %v3356 = vpop.f32.mrb[0].mxu0
        %v3357 = vadd.f32 %v3165, %v3356
        %v3358 = vpop.f32.mrb[0].mxu0
        %v3359 = vadd.f32 %v3165, %v3358
        %v3360 = vpop.f32.mrb[0].mxu0
        %v3361 = vadd.f32 %v3170, %v3360
        %v3362 = vpop.f32.mrb[0].mxu0
        %v3363 = vadd.f32 %v3170, %v3362
        %3364 = vmatprep.mubr.bf16.mxu0 %v3245
        %3365 = vmatmul.mubr.bf16.gmra.mrb[0].mxu0 %v3244
        %v3366 = vpop.f32.mrb[0].mxu0
        %v3367 = vadd.f32 %v3175, %v3366
        %v3368 = vpop.f32.mrb[0].mxu0
        %v3369 = vadd.f32 %v3175, %v3368
        %v3370 = vpop.f32.mrb[0].mxu0
        %v3371 = vadd.f32 %v3180, %v3370
        %v3372 = vpop.f32.mrb[0].mxu0
        %v3373 = vadd.f32 %v3180, %v3372
        %3374 = vdwg.mxu0
        %v3375 = vmul.f32 %v3297, 0.01
        %v3376 = vmul.f32 %v3299, 0.01
        %v3377 = vmul.f32 %v3301, 0.01
        %v3378 = vmul.f32 %v3303, 0.01
        %v3379 = vmul.f32 %v3307, 0.01
        %v3380 = vmul.f32 %v3309, 0.01
        %v3381 = vmul.f32 %v3311, 0.01
        %v3382 = vmul.f32 %v3313, 0.01
        %v3383 = vmul.f32 %v3317, 0.01
        %v3384 = vmul.f32 %v3319, 0.01
        %v3385 = vmul.f32 %v3321, 0.01
        %v3386 = vmul.f32 %v3323, 0.01
        %v3387 = vmul.f32 %v3327, 0.01
        %v3388 = vmul.f32 %v3329, 0.01
        %v3389 = vmul.f32 %v3331, 0.01
        %v3390 = vmul.f32 %v3333, 0.01
        %v3391 = vmul.f32 %v3337, 0.01
        %v3392 = vmul.f32 %v3339, 0.01
        %v3393 = vmul.f32 %v3341, 0.01
        %v3394 = vmul.f32 %v3343, 0.01
        %v3395 = vmul.f32 %v3347, 0.01
        %v3396 = vmul.f32 %v3349, 0.01
        %v3397 = vmul.f32 %v3351, 0.01
        %v3398 = vmul.f32 %v3353, 0.01
        %v3399 = vmul.f32 %v3357, 0.01
        %v3400 = vmul.f32 %v3359, 0.01
        %v3401 = vmul.f32 %v3361, 0.01
        %v3402 = vmul.f32 %v3363, 0.01
        %v3403 = vmul.f32 %v3367, 0.01
        %v3404 = vmul.f32 %v3369, 0.01
        %v3405 = vmul.f32 %v3371, 0.01
        %v3406 = vmul.f32 %v3373, 0.01
        %v3407 = vmax.f32 %v3297, %v3375
        %v3408 = vmax.f32 %v3299, %v3376
        %v3409 = vmax.f32 %v3301, %v3377
        %v3410 = vmax.f32 %v3303, %v3378
        %v3411 = vmax.f32 %v3307, %v3379
        %v3412 = vmax.f32 %v3309, %v3380
        %v3413 = vmax.f32 %v3311, %v3381
        %v3414 = vmax.f32 %v3313, %v3382
        %v3415 = vmax.f32 %v3317, %v3383
        %v3416 = vmax.f32 %v3319, %v3384
        %v3417 = vmax.f32 %v3321, %v3385
        %v3418 = vmax.f32 %v3323, %v3386
        %v3419 = vmax.f32 %v3327, %v3387
        %v3420 = vmax.f32 %v3329, %v3388
        %v3421 = vmax.f32 %v3331, %v3389
        %v3422 = vmax.f32 %v3333, %v3390
        %v3423 = vmax.f32 %v3337, %v3391
        %v3424 = vmax.f32 %v3339, %v3392
        %v3425 = vmax.f32 %v3341, %v3393
        %v3426 = vmax.f32 %v3343, %v3394
        %v3427 = vmax.f32 %v3347, %v3395
        %v3428 = vmax.f32 %v3349, %v3396
        %v3429 = vmax.f32 %v3351, %v3397
        %v3430 = vmax.f32 %v3353, %v3398
        %v3431 = vmax.f32 %v3357, %v3399
        %v3432 = vmax.f32 %v3359, %v3400
        %v3433 = vmax.f32 %v3361, %v3401
        %v3434 = vmax.f32 %v3363, %v3402
        %v3435 = vmax.f32 %v3367, %v3403
        %v3436 = vmax.f32 %v3369, %v3404
        %v3437 = vmax.f32 %v3371, %v3405
        %v3438 = vmax.f32 %v3373, %v3406
        %v3439 = vld [vmem:[#allocation17] sm:$0xff]
        %v3440 = vld [vmem:[#allocation17 + $0x8] sm:$0xff]
        %v3441 = vld [vmem:[#allocation17 + $0x10] sm:$0xff]
        %v3442 = vld [vmem:[#allocation17 + $0x18] sm:$0xff]
        %v3443 = vld [vmem:[#allocation17 + $0x20] sm:$0xff]
        %v3444 = vld [vmem:[#allocation17 + $0x28] sm:$0xff]
        %v3445 = vld [vmem:[#allocation17 + $0x30] sm:$0xff]
        %v3446 = vld [vmem:[#allocation17 + $0x38] sm:$0xff]
        %v3447 = vld [vmem:[#allocation17 + $0x40] sm:$0xff]
        %v3448 = vld [vmem:[#allocation17 + $0x48] sm:$0xff]
        %v3449 = vld [vmem:[#allocation17 + $0x50] sm:$0xff]
        %v3450 = vld [vmem:[#allocation17 + $0x58] sm:$0xff]
        %v3451 = vld [vmem:[#allocation17 + $0x60] sm:$0xff]
        %v3452 = vld [vmem:[#allocation17 + $0x68] sm:$0xff]
        %v3453 = vld [vmem:[#allocation17 + $0x70] sm:$0xff]
        %v3454 = vld [vmem:[#allocation17 + $0x78] sm:$0xff]
        %3456 = vset.pattern.permute.xlu0 0
        %3457 = vperm.xlu0 %3456, %v3439
        %v3458 = vpop.permute.xlu0 %3457
        %3461 = vset.pattern.permute.xlu0 0
        %3462 = vperm.xlu0 %3461, %v3440
        %v3463 = vpop.permute.xlu0 %3462
        %3466 = vset.pattern.permute.xlu0 0
        %3467 = vperm.xlu0 %3466, %v3441
        %v3468 = vpop.permute.xlu0 %3467
        %3471 = vset.pattern.permute.xlu0 0
        %3472 = vperm.xlu0 %3471, %v3442
        %v3473 = vpop.permute.xlu0 %3472
        %3476 = vset.pattern.permute.xlu0 0
        %3477 = vperm.xlu0 %3476, %v3443
        %v3478 = vpop.permute.xlu0 %3477
        %3481 = vset.pattern.permute.xlu0 0
        %3482 = vperm.xlu0 %3481, %v3444
        %v3483 = vpop.permute.xlu0 %3482
        %3486 = vset.pattern.permute.xlu0 0
        %3487 = vperm.xlu0 %3486, %v3445
        %v3488 = vpop.permute.xlu0 %3487
        %3491 = vset.pattern.permute.xlu0 0
        %3492 = vperm.xlu0 %3491, %v3446
        %v3493 = vpop.permute.xlu0 %3492
        %3496 = vset.pattern.permute.xlu0 0
        %3497 = vperm.xlu0 %3496, %v3447
        %v3498 = vpop.permute.xlu0 %3497
        %3501 = vset.pattern.permute.xlu0 0
        %3502 = vperm.xlu0 %3501, %v3448
        %v3503 = vpop.permute.xlu0 %3502
        %3506 = vset.pattern.permute.xlu0 0
        %3507 = vperm.xlu0 %3506, %v3449
        %v3508 = vpop.permute.xlu0 %3507
        %3511 = vset.pattern.permute.xlu0 0
        %3512 = vperm.xlu0 %3511, %v3450
        %v3513 = vpop.permute.xlu0 %3512
        %3516 = vset.pattern.permute.xlu0 0
        %3517 = vperm.xlu0 %3516, %v3451
        %v3518 = vpop.permute.xlu0 %3517
        %3521 = vset.pattern.permute.xlu0 0
        %3522 = vperm.xlu0 %3521, %v3452
        %v3523 = vpop.permute.xlu0 %3522
        %3526 = vset.pattern.permute.xlu0 0
        %3527 = vperm.xlu0 %3526, %v3453
        %v3528 = vpop.permute.xlu0 %3527
        %3531 = vset.pattern.permute.xlu0 0
        %3532 = vperm.xlu0 %3531, %v3454
        %v3533 = vpop.permute.xlu0 %3532
        %v3535 = vmul.f32 %v3407, %v3458
        %v3536 = vmul.f32 %v3408, %v3458
        %v3537 = vmul.f32 %v3409, %v3463
        %v3538 = vmul.f32 %v3410, %v3463
        %v3539 = vmul.f32 %v3411, %v3468
        %v3540 = vmul.f32 %v3412, %v3468
        %v3541 = vmul.f32 %v3413, %v3473
        %v3542 = vmul.f32 %v3414, %v3473
        %v3543 = vmul.f32 %v3415, %v3478
        %v3544 = vmul.f32 %v3416, %v3478
        %v3545 = vmul.f32 %v3417, %v3483
        %v3546 = vmul.f32 %v3418, %v3483
        %v3547 = vmul.f32 %v3419, %v3488
        %v3548 = vmul.f32 %v3420, %v3488
        %v3549 = vmul.f32 %v3421, %v3493
        %v3550 = vmul.f32 %v3422, %v3493
        %v3551 = vmul.f32 %v3423, %v3498
        %v3552 = vmul.f32 %v3424, %v3498
        %v3553 = vmul.f32 %v3425, %v3503
        %v3554 = vmul.f32 %v3426, %v3503
        %v3555 = vmul.f32 %v3427, %v3508
        %v3556 = vmul.f32 %v3428, %v3508
        %v3557 = vmul.f32 %v3429, %v3513
        %v3558 = vmul.f32 %v3430, %v3513
        %v3559 = vmul.f32 %v3431, %v3518
        %v3560 = vmul.f32 %v3432, %v3518
        %v3561 = vmul.f32 %v3433, %v3523
        %v3562 = vmul.f32 %v3434, %v3523
        %v3563 = vmul.f32 %v3435, %v3528
        %v3564 = vmul.f32 %v3436, %v3528
        %v3565 = vmul.f32 %v3437, %v3533
        %v3566 = vmul.f32 %v3438, %v3533
        %v3567 = vadd.f32 %v3535, %v3537
        %v3568 = vadd.f32 %v3567, %v3539
        %v3569 = vadd.f32 %v3568, %v3541
        %v3570 = vadd.f32 %v3569, %v3543
        %v3571 = vadd.f32 %v3570, %v3545
        %v3572 = vadd.f32 %v3571, %v3547
        %v3573 = vadd.f32 %v3572, %v3549
        %v3574 = vadd.f32 %v3573, %v3551
        %v3575 = vadd.f32 %v3574, %v3553
        %v3576 = vadd.f32 %v3575, %v3555
        %v3577 = vadd.f32 %v3576, %v3557
        %v3578 = vadd.f32 %v3577, %v3559
        %v3579 = vadd.f32 %v3578, %v3561
        %v3580 = vadd.f32 %v3579, %v3563
        %v3581 = vadd.f32 %v3580, %v3565
        %v3582 = vrot.slane %v3581, 4
        %v3583 = vadd.f32 %v3581, %v3582
        %v3584 = vrot.slane %v3583, 2
        %v3585 = vadd.f32 %v3583, %v3584
        %v3586 = vrot.slane %v3585, 1
        %v3587 = vadd.f32 %v3585, %v3586
        %v3588 = vadd.f32 %v3536, %v3538
        %v3589 = vadd.f32 %v3588, %v3540
        %v3590 = vadd.f32 %v3589, %v3542
        %v3591 = vadd.f32 %v3590, %v3544
        %v3592 = vadd.f32 %v3591, %v3546
        %v3593 = vadd.f32 %v3592, %v3548
        %v3594 = vadd.f32 %v3593, %v3550
        %v3595 = vadd.f32 %v3594, %v3552
        %v3596 = vadd.f32 %v3595, %v3554
        %v3597 = vadd.f32 %v3596, %v3556
        %v3598 = vadd.f32 %v3597, %v3558
        %v3599 = vadd.f32 %v3598, %v3560
        %v3600 = vadd.f32 %v3599, %v3562
        %v3601 = vadd.f32 %v3600, %v3564
        %v3602 = vadd.f32 %v3601, %v3566
        %v3603 = vrot.slane %v3602, 4
        %v3604 = vadd.f32 %v3602, %v3603
        %v3605 = vrot.slane %v3604, 2
        %v3606 = vadd.f32 %v3604, %v3605
        %v3607 = vrot.slane %v3606, 1
        %v3608 = vadd.f32 %v3606, %v3607
        %v3609 = vld [vmem:[#allocation2] sm:$0x1]
        %3611 = vset.pattern.permute.xlu0 0
        %3612 = vperm.xlu0 %3611, %v3609
        %v3613 = vpop.permute.xlu0 %3612
        %v3615 = vlaneseq
        %v3616 = vshrl.u32 %v3615, 7
        %v3617 = vsub.s32 0, %v3616
        %v3618 = vrot.slane %v3613, %v3617
        %v3619 = vadd.f32 %v3587, %v3618
        %v3620 = vadd.f32 %v3608, %v3618
        %v3623 = vcombine.low %v3619, %v3620
        %v3625 = vunpack.c.l.s4 1966171168
        %v3626 = vunpack.c.0.s8 %v3625
        %v3627 = vlaneseq
        %v3628 = vshrl.u32 %v3627, 7
        %v3629 = vsub.s32 %v3626, %v3628
        %v3630 = vrot.slane %v3623, %v3629
        %v3632 = vunpack.c.l.s4 1966171168
        %v3633 = vunpack.c.0.s8 %v3632
        %v3634 = vlaneseq
        %v3635 = vshrl.u32 %v3634, 7
        %v3636 = vsub.s32 %v3633, %v3635
        %v3637 = vrot.slane %v3630, %v3636
        %v3639 = vlaneseq
        %vm3640 = vcmp.ge.s32.totalorder %v3639, 0
        %vm3641 = vcmp.lt.s32.totalorder %v3639, 256
        %vm3642 = vmand %vm3640, %vm3641
        %3643 = vst.msk [vmem:[%s495] sm:$0x3] %vm3642, %v3637
        %s3644 = sand.u32 %s256, 1
        %s3645 = scalar_lea.sflag [#allocation5], %s3644
        %s3646 = sand.u32 %s256, 1
        %s3647 = smul.addr %s3646, 2
        %s3648 = scalar_lea.vmem [#allocation18], %s3647
        // Predicated region
        $region97: #{tpu_custom_call.1} parent=59 // pred_check
          %p3649 = pneg %p266
        $region98: #{tpu_custom_call.1} parent=59 // pred_check_branch
          %3651 = sbr.rel (%p3649) target = $region100
        $region99: #{tpu_custom_call.1} parent=59 // pred_region
          %s3652 = smul.u32 2, %s33
          %s3654 = ssub.s32 32, 32
          %3655 = vsyncadd %s3645, %s3654
          %s3656 = smul.addr %s3652, 16
          %s3657 = scalar_lea.hbm %s10, %s3656
          %s3659 = sshll.u32 %s3648, 4
          %s3660 = int_to_ptr.vmem [resolvable:$true] %s3659
          %3662 = dma.vmem_to_hbm [thread:$0]  %s3660, 32, %s3657, %s3645
        $region100: #{tpu_custom_call.1} parent=59 // pred_fallthru
          _
      $region60: #{tpu_custom_call.1} parent=5 // pred_fallthru
        _
      %p3663 = scmp.le.s32.totalorder 2, %s28
      // Predicated region
      $region101: #{tpu_custom_call.1} parent=5 // pred_check
        %p3664 = pneg %p3663
      $region102: #{tpu_custom_call.1} parent=5 // pred_check_branch
        %3666 = sbr.rel (%p3664) target = $region104
      $region103: #{tpu_custom_call.1} parent=5 // pred_region
        %s3667 = ssub.s32 %s28, 2
        // Predicated region
        $region105: #{tpu_custom_call.1} parent=103 // pred_check
          %p3668 = pneg %p272
        $region106: #{tpu_custom_call.1} parent=103 // pred_check_branch
          %3670 = sbr.rel (%p3668) target = $region108
        $region107: #{tpu_custom_call.1} parent=103 // pred_region
          %s3671 = sand.u32 %s257, 1
          %s3672 = scalar_lea.sflag [#allocation5], %s3671
          %s3673 = sand.u32 %s257, 1
          %s3674 = smul.addr %s3673, 2
          %s3675 = scalar_lea.vmem [#allocation18], %s3674
          %3676 = dma.done %s3672, 32
        $region108: #{tpu_custom_call.1} parent=103 // pred_fallthru
          _
      $region104: #{tpu_custom_call.1} parent=5 // pred_fallthru
        _
    $region6: #{tpu_custom_call.1} parent=1 // loop_footer
      %s32 = sadd.s32 1, %s28
    $region7: #{tpu_custom_call.1} parent=1 // loop_footer_branch
      %27 = sbr.rel target = $region3
    $region8: #{tpu_custom_call.1} parent=1 // loop_exit
      _
    %3677 = vsyncpa [#allocation4], 1
    %s3678 = scalar_lea.sflag [#allocation4], 1
    %3679 = vsyncpa %s3678, 1
    %3680 = vsyncpa [#allocation7], 1
    %3681 = vsyncpa [#allocation10], 1
    %3682 = vsyncpa [#allocation13], 1
    %3683 = vsyncpa [#allocation16], 1
    %3684 = vsyncpa [#allocation5], 1
    %s3685 = scalar_lea.sflag [#allocation5], 1
    %3686 = vsyncpa %s3685, 1

</llo_original>
